<compile_context>
chip_gen: v5e
topology: v5e:2x2
jax: 0.10.0
libtpu: 0.0.40
codegen_flags: <defaults>
</compile_context>

<pallas_src>
import functools

import jax
import jax.numpy as jnp
from jax.experimental import pallas as pl
from jax.experimental.pallas import tpu as pltpu

_EPS = 1e-20  # matches NConv2d.eps


# ---------------------------------------------------------------------------
# Pallas kernel: fused normalized convolution (matmul(s) + elementwise)
# ---------------------------------------------------------------------------
def _nconv_kernel(dcol_ref, ccol_ref, w_ref, b_ref, iws_ref,
                  nconv_ref, cout_ref, *, fuse_matmuls):
    tm = dcol_ref.shape[1]
    d = dcol_ref[...]                       # (K, TM)  data patches   (bf16)
    c = ccol_ref[...]                       # (K, TM)  conf patches   (bf16)
    w = w_ref[...]                          # (O, K)   conv weights   (bf16)
    dc = d * c
    if fuse_matmuls:
        # One MXU weight push / one matmul for both convolutions.
        rhs = jnp.concatenate([c, dc], axis=1)                        # (K, 2*TM)
        res = jnp.dot(w, rhs, preferred_element_type=jnp.float32)     # (O, 2*TM)
        denom = res[:, :tm]
        nomin = res[:, tm:]
    else:
        # Small / unaligned tile fallback: two matmuls.
        denom = jnp.dot(w, c, preferred_element_type=jnp.float32)     # (O, TM)
        nomin = jnp.dot(w, dc, preferred_element_type=jnp.float32)    # (O, TM)
    inv_denom = pl.reciprocal(denom + _EPS, approx=True)              # EUP slot
    nconv_ref[...] = nomin * inv_denom + b_ref[...]                   # bias bcast
    cout_ref[...] = denom * iws_ref[...]                              # conf renorm


def _pick_tile_m(m):
    """Largest lane-aligned tile of M that still gives >=2 pipeline steps."""
    for tm in (1024, 512, 256, 128):
        if m % tm == 0 and m // tm >= 2:
            return tm
    return m  # small layers: single full-extent tile


def _im2col_cm(x, kh, kw, pad):
    """x: (C, B, H, W) channel-major -> (C*kh*kw, B*H*W) patches (stride 1)."""
    # TODO(synk): im2col is still materialized in HBM by the wrapper; moving it
    # in-kernel (halo'd row blocks) would cut input read traffic by ~KH*KW x.
    C, B, H, W = x.shape
    if pad:
        x = jnp.pad(x, ((0, 0), (0, 0), (pad, pad), (pad, pad)))
    cols = [x[:, :, i:i + H, j:j + W] for i in range(kh) for j in range(kw)]
    patch = jnp.stack(cols, axis=1)                     # (C, kh*kw, B, H, W)
    return patch.reshape(C * kh * kw, B * H * W)


def nconv2d(data, conf, weight, bias, padding):
    """Normalized convolution.

    data/conf: (Cin, B, H, W) channel-major.  Returns (nconv, cout), each
    (Cout, B, H, W) channel-major.
    """
    Cin, B, H, W = data.shape
    O, _, KH, KW = weight.shape
    K = Cin * KH * KW
    M = B * H * W

    # Patches (K, M): M on the lane axis -> lane-dense outputs. bf16 matmul
    # inputs halve DMA bytes; normalization stays f32 inside the kernel.
    d_col = _im2col_cm(data, KH, KW, padding).astype(jnp.bfloat16)
    c_col = _im2col_cm(conf, KH, KW, padding).astype(jnp.bfloat16)
    wmat = weight.reshape(O, K)
    inv_ws = (1.0 / wmat.sum(axis=-1)).reshape(O, 1).astype(jnp.float32)
    wmat_bf16 = wmat.astype(jnp.bfloat16)
    b2 = bias.reshape(O, 1).astype(jnp.float32)

    tm = _pick_tile_m(M)
    grid = (M // tm,)
    fuse = (tm % 128 == 0)  # lane-aligned concat/split only

    kernel = functools.partial(_nconv_kernel, fuse_matmuls=fuse)

    nconv_flat, cout_flat = pl.pallas_call(
        kernel,
        out_shape=(jax.ShapeDtypeStruct((O, M), jnp.float32),
                   jax.ShapeDtypeStruct((O, M), jnp.float32)),
        grid=grid,
        in_specs=[
            pl.BlockSpec((K, tm), lambda i: (0, i)),   # data patches
            pl.BlockSpec((K, tm), lambda i: (0, i)),   # conf patches
            pl.BlockSpec((O, K), lambda i: (0, 0)),    # weights (resident)
            pl.BlockSpec((O, 1), lambda i: (0, 0)),    # bias
            pl.BlockSpec((O, 1), lambda i: (0, 0)),    # 1 / sum(weights)
        ],
        out_specs=(pl.BlockSpec((O, tm), lambda i: (0, i)),
                   pl.BlockSpec((O, tm), lambda i: (0, i))),
        compiler_params=pltpu.CompilerParams(
            dimension_semantics=("parallel",),
            vmem_limit_bytes=32 * 1024 * 1024),
    )(d_col, c_col, wmat_bf16, b2, inv_ws)

    nconv = nconv_flat.reshape(O, B, H, W)
    cout = cout_flat.reshape(O, B, H, W)
    return nconv, cout


# ---------------------------------------------------------------------------
# Plain-JAX glue ops (pooling / gather-at-argmax / nearest upsampling),
# operating on channel-major (C, B, H, W) tensors.
# ---------------------------------------------------------------------------
def _maxpool_with_data_gather(c, x, ds=2):
    """max_pool2d(c, ds) with indices, then gather x at the argmax of c."""
    C, B, H, W = c.shape
    Ho, Wo = H // ds, W // ds
    cw = c.reshape(C, B, Ho, ds, Wo, ds).transpose(0, 1, 2, 4, 3, 5)
    cw = cw.reshape(C, B, Ho, Wo, ds * ds)
    xw = x.reshape(C, B, Ho, ds, Wo, ds).transpose(0, 1, 2, 4, 3, 5)
    xw = xw.reshape(C, B, Ho, Wo, ds * ds)
    idx = jnp.argmax(cw, axis=-1)
    c_ds = jnp.max(cw, axis=-1)
    x_ds = jnp.take_along_axis(xw, idx[..., None], axis=-1)[..., 0]
    return x_ds, c_ds


def _upsample_nearest(x, size):
    """F.interpolate(mode='nearest') to an exact integer multiple size."""
    C, B, H, W = x.shape
    Ho, Wo = size
    return jnp.repeat(jnp.repeat(x, Ho // H, axis=2), Wo // W, axis=3)


# ---------------------------------------------------------------------------
# Parameters (deterministic, synthetic)
# ---------------------------------------------------------------------------
def _init_nconv_params(key, in_ch, out_ch, ksize):
    w_raw = 0.1 * jax.random.normal(key, (out_ch, in_ch, ksize, ksize), jnp.float32)
    # EnforcePos('softplus', beta=10): positive weights (eval-mode emulation)
    weight = jax.nn.softplus(10.0 * w_raw) / 10.0
    bias = jnp.full((out_ch,), 0.01, jnp.float32)   # init_parameters: zeros + 0.01
    return {"weight": weight, "bias": bias}


def init_params(key, n_channels):
    C = n_channels
    keys = jax.random.split(key, 7)
    return {
        "nconv1": _init_nconv_params(keys[0], 1, C, 5),
        "nconv2": _init_nconv_params(keys[1], C, C, 5),
        "nconv3": _init_nconv_params(keys[2], C, C, 5),
        "nconv4": _init_nconv_params(keys[3], 2 * C, C, 3),
        "nconv5": _init_nconv_params(keys[4], 2 * C, C, 3),
        "nconv6": _init_nconv_params(keys[5], 2 * C, C, 3),
        "nconv7": _init_nconv_params(keys[6], C, 1, 1),
    }


# ---------------------------------------------------------------------------
# NConvCNN forward (channel-major internally, NCHW at the boundaries)
# ---------------------------------------------------------------------------
def nconv_cnn_forward(d, params):
    def layer(name, data, conf, padding):
        p = params[name]
        return nconv2d(data, conf, p["weight"], p["bias"], padding)

    x0 = jnp.transpose(d, (1, 0, 2, 3))          # (1, B, H, W) channel-major
    c0 = (x0 > 0).astype(jnp.float32)

    x1, c1 = layer("nconv1", x0, c0, 2)
    x1, c1 = layer("nconv2", x1, c1, 2)
    x1, c1 = layer("nconv3", x1, c1, 2)

    x1_ds, c1_ds = _maxpool_with_data_gather(c1, x1, 2)
    c1_ds = c1_ds / 4

    x2_ds, c2_ds = layer("nconv2", x1_ds, c1_ds, 2)
    x2_ds, c2_ds = layer("nconv3", x2_ds, c2_ds, 2)

    x2_dss, c2_dss = _maxpool_with_data_gather(c2_ds, x2_ds, 2)
    c2_dss = c2_dss / 4

    x3_ds, c3_ds = layer("nconv2", x2_dss, c2_dss, 2)

    x3_dss, c3_dss = _maxpool_with_data_gather(c3_ds, x3_ds, 2)
    c3_dss = c3_dss / 4

    x4_ds, c4_ds = layer("nconv2", x3_dss, c3_dss, 2)

    x4 = _upsample_nearest(x4_ds, c3_ds.shape[2:])
    c4 = _upsample_nearest(c4_ds, c3_ds.shape[2:])
    x34_ds, c34_ds = layer("nconv4",
                           jnp.concatenate((x3_ds, x4), axis=0),
                           jnp.concatenate((c3_ds, c4), axis=0), 1)

    x34 = _upsample_nearest(x34_ds, c2_ds.shape[2:])
    c34 = _upsample_nearest(c34_ds, c2_ds.shape[2:])
    x23_ds, c23_ds = layer("nconv5",
                           jnp.concatenate((x2_ds, x34), axis=0),
                           jnp.concatenate((c2_ds, c34), axis=0), 1)

    x23 = _upsample_nearest(x23_ds, x0.shape[2:])
    c23 = _upsample_nearest(c23_ds, c0.shape[2:])
    xout, cout = layer("nconv6",
                       jnp.concatenate((x23, x1), axis=0),
                       jnp.concatenate((c23, c1), axis=0), 1)

    xout, cout = layer("nconv7", xout, cout, 0)
    # TODO(synk): training-mode EnforcePos mutates module.weight on every forward
    # pre-hook; eval-mode semantics are modeled with fixed positive weights.
    return {"d": jnp.transpose(xout, (1, 0, 2, 3)),
            "cd": jnp.transpose(cout, (1, 0, 2, 3))}


# ---------------------------------------------------------------------------
if __name__ == "__main__":
    key = jax.random.PRNGKey(0)
    k_param, k_data = jax.random.split(key)

    B, C, H, W = 2, 4, 16, 16                     # batch=2, n_channels=4, 16x16
    params = init_params(k_param, n_channels=C)

    # Sparse-depth style input: ~50% of pixels carry a positive value.
    u = jax.random.uniform(k_data, (B, 1, H, W), jnp.float32)
    d = jnp.where(u > 0.5, u, 0.0)

    forward = jax.jit(nconv_cnn_forward)
    out = forward(d, params)
    jax.block_until_ready(out["d"])
    jax.block_until_ready(out["cd"])

    assert out["d"].shape == (B, 1, H, W) and out["cd"].shape == (B, 1, H, W)
    assert bool(jnp.all(jnp.isfinite(out["d"]))) and bool(jnp.all(jnp.isfinite(out["cd"])))
    print("KERNEL_OK")
</pallas_src>

<mosaic_0001>
module attributes {stable_mosaic.version = 11 : i64} {
  func.func @_nconv_kernel(%arg0: i32, %arg1: memref<25x256xbf16, #tpu.memory_space<vmem>>, %arg2: memref<25x256xbf16, #tpu.memory_space<vmem>>, %arg3: memref<4x25xbf16, #tpu.memory_space<vmem>>, %arg4: memref<4x1xf32, #tpu.memory_space<vmem>>, %arg5: memref<4x1xf32, #tpu.memory_space<vmem>>, %arg6: memref<4x256xf32, #tpu.memory_space<vmem>>, %arg7: memref<4x256xf32, #tpu.memory_space<vmem>>) attributes {dimension_semantics = [#tpu.dimension_semantics<parallel>], iteration_bounds = array<i64: 2>, scalar_prefetch = 0 : i64, scratch_operands = 0 : i64, tpu.core_type = #tpu.core_type<tc>, window_params = [{transform_indices = @transform_0, window_bounds = array<i64: 25, 256>}, {transform_indices = @transform_1, window_bounds = array<i64: 25, 256>}, {pipeline_mode = #tpu.pipeline_mode<synchronous>, transform_indices = @transform_2, window_bounds = array<i64: 4, 25>}, {pipeline_mode = #tpu.pipeline_mode<synchronous>, transform_indices = @transform_3, window_bounds = array<i64: 4, 1>}, {pipeline_mode = #tpu.pipeline_mode<synchronous>, transform_indices = @transform_4, window_bounds = array<i64: 4, 1>}, {transform_indices = @transform_5, window_bounds = array<i64: 4, 256>}, {transform_indices = @transform_6, window_bounds = array<i64: 4, 256>}]} {
    %c0 = arith.constant 0 : index
    %c0_0 = arith.constant 0 : index
    %0 = vector.load %arg1[%c0, %c0_0] : memref<25x256xbf16, #tpu.memory_space<vmem>>, vector<25x256xbf16>
    %c0_1 = arith.constant 0 : index
    %c0_2 = arith.constant 0 : index
    %1 = vector.load %arg2[%c0_1, %c0_2] : memref<25x256xbf16, #tpu.memory_space<vmem>>, vector<25x256xbf16>
    %c0_3 = arith.constant 0 : index
    %c0_4 = arith.constant 0 : index
    %2 = vector.load %arg3[%c0_3, %c0_4] : memref<4x25xbf16, #tpu.memory_space<vmem>>, vector<4x25xbf16>
    %3 = arith.mulf %0, %1 : vector<25x256xbf16>
    %4 = tpu.concatenate %1, %3 in 1 : vector<25x256xbf16>, vector<25x256xbf16> -> vector<25x512xbf16>
    %cst = arith.constant dense<0.000000e+00> : vector<4x512xf32>
    %5 = tpu.matmul %2, %4, %cst {dimension_numbers = #tpu.dot_dimension_numbers<[1], [0], [0], [1], [0, 0, 1, 1], [], []>} : vector<4x25xbf16>, vector<25x512xbf16>, vector<4x512xf32> -> vector<4x512xf32>
    %6 = vector.extract_strided_slice %5 {offsets = [0, 0], sizes = [4, 256], strides = [1, 1]} : vector<4x512xf32> to vector<4x256xf32>
    %7 = vector.extract_strided_slice %5 {offsets = [0, 256], sizes = [4, 256], strides = [1, 1]} : vector<4x512xf32> to vector<4x256xf32>
    %cst_5 = arith.constant 9.99999968E-21 : f32
    %8 = vector.broadcast %cst_5 : f32 to vector<4x256xf32>
    %9 = arith.addf %6, %8 : vector<4x256xf32>
    %10 = tpu.reciprocal %9 {approx = true} : vector<4x256xf32> -> vector<4x256xf32>
    %11 = arith.mulf %7, %10 : vector<4x256xf32>
    %c0_6 = arith.constant 0 : index
    %c0_7 = arith.constant 0 : index
    %12 = vector.load %arg4[%c0_6, %c0_7] : memref<4x1xf32, #tpu.memory_space<vmem>>, vector<4x1xf32>
    %13 = vector.broadcast %12 : vector<4x1xf32> to vector<4x256xf32>
    %14 = arith.addf %11, %13 : vector<4x256xf32>
    %c0_8 = arith.constant 0 : index
    %c0_9 = arith.constant 0 : index
    %15 = vector.load %arg6[%c0_8, %c0_9] : memref<4x256xf32, #tpu.memory_space<vmem>>, vector<4x256xf32>
    tpu.vector_store %arg6[%c0_8, %c0_9], %14 {strides = array<i32>} : memref<4x256xf32, #tpu.memory_space<vmem>>, vector<4x256xf32>,
    %c0_10 = arith.constant 0 : index
    %c0_11 = arith.constant 0 : index
    %16 = vector.load %arg5[%c0_10, %c0_11] : memref<4x1xf32, #tpu.memory_space<vmem>>, vector<4x1xf32>
    %17 = vector.broadcast %16 : vector<4x1xf32> to vector<4x256xf32>
    %18 = arith.mulf %6, %17 : vector<4x256xf32>
    %c0_12 = arith.constant 0 : index
    %c0_13 = arith.constant 0 : index
    %19 = vector.load %arg7[%c0_12, %c0_13] : memref<4x256xf32, #tpu.memory_space<vmem>>, vector<4x256xf32>
    tpu.vector_store %arg7[%c0_12, %c0_13], %18 {strides = array<i32>} : memref<4x256xf32, #tpu.memory_space<vmem>>, vector<4x256xf32>,
    return
  }
  func.func @transform_0(%arg0: i32) -> (i32, i32) {
    %c0_i32 = arith.constant 0 : i32
    %c0_i32_0 = arith.constant 0 : i32
    return %c0_i32, %arg0 : i32, i32
  }
  func.func @transform_1(%arg0: i32) -> (i32, i32) {
    %c0_i32 = arith.constant 0 : i32
    %c0_i32_0 = arith.constant 0 : i32
    return %c0_i32, %arg0 : i32, i32
  }
  func.func @transform_2(%arg0: i32) -> (i32, i32) {
    %c0_i32 = arith.constant 0 : i32
    %c0_i32_0 = arith.constant 0 : i32
    %c0_i32_1 = arith.constant 0 : i32
    return %c0_i32, %c0_i32_0 : i32, i32
  }
  func.func @transform_3(%arg0: i32) -> (i32, i32) {
    %c0_i32 = arith.constant 0 : i32
    %c0_i32_0 = arith.constant 0 : i32
    %c0_i32_1 = arith.constant 0 : i32
    return %c0_i32, %c0_i32_0 : i32, i32
  }
  func.func @transform_4(%arg0: i32) -> (i32, i32) {
    %c0_i32 = arith.constant 0 : i32
    %c0_i32_0 = arith.constant 0 : i32
    %c0_i32_1 = arith.constant 0 : i32
    return %c0_i32, %c0_i32_0 : i32, i32
  }
  func.func @transform_5(%arg0: i32) -> (i32, i32) {
    %c0_i32 = arith.constant 0 : i32
    %c0_i32_0 = arith.constant 0 : i32
    return %c0_i32, %arg0 : i32, i32
  }
  func.func @transform_6(%arg0: i32) -> (i32, i32) {
    %c0_i32 = arith.constant 0 : i32
    %c0_i32_0 = arith.constant 0 : i32
    return %c0_i32, %arg0 : i32, i32
  }
}

module attributes {stable_mosaic.version = 11 : i64} {
  func.func @_nconv_kernel(%arg0: i32, %arg1: memref<100x256xbf16, #tpu.memory_space<vmem>>, %arg2: memref<100x256xbf16, #tpu.memory_space<vmem>>, %arg3: memref<4x100xbf16, #tpu.memory_space<vmem>>, %arg4: memref<4x1xf32, #tpu.memory_space<vmem>>, %arg5: memref<4x1xf32, #tpu.memory_space<vmem>>, %arg6: memref<4x256xf32, #tpu.memory_space<vmem>>, %arg7: memref<4x256xf32, #tpu.memory_space<vmem>>) attributes {dimension_semantics = [#tpu.dimension_semantics<parallel>], iteration_bounds = array<i64: 2>, scalar_prefetch = 0 : i64, scratch_operands = 0 : i64, tpu.core_type = #tpu.core_type<tc>, window_params = [{transform_indices = @transform_0, window_bounds = array<i64: 100, 256>}, {transform_indices = @transform_1, window_bounds = array<i64: 100, 256>}, {pipeline_mode = #tpu.pipeline_mode<synchronous>, transform_indices = @transform_2, window_bounds = array<i64: 4, 100>}, {pipeline_mode = #tpu.pipeline_mode<synchronous>, transform_indices = @transform_3, window_bounds = array<i64: 4, 1>}, {pipeline_mode = #tpu.pipeline_mode<synchronous>, transform_indices = @transform_4, window_bounds = array<i64: 4, 1>}, {transform_indices = @transform_5, window_bounds = array<i64: 4, 256>}, {transform_indices = @transform_6, window_bounds = array<i64: 4, 256>}]} {
    %c0 = arith.constant 0 : index
    %c0_0 = arith.constant 0 : index
    %0 = vector.load %arg1[%c0, %c0_0] : memref<100x256xbf16, #tpu.memory_space<vmem>>, vector<100x256xbf16>
    %c0_1 = arith.constant 0 : index
    %c0_2 = arith.constant 0 : index
    %1 = vector.load %arg2[%c0_1, %c0_2] : memref<100x256xbf16, #tpu.memory_space<vmem>>, vector<100x256xbf16>
    %c0_3 = arith.constant 0 : index
    %c0_4 = arith.constant 0 : index
    %2 = vector.load %arg3[%c0_3, %c0_4] : memref<4x100xbf16, #tpu.memory_space<vmem>>, vector<4x100xbf16>
    %3 = arith.mulf %0, %1 : vector<100x256xbf16>
    %4 = tpu.concatenate %1, %3 in 1 : vector<100x256xbf16>, vector<100x256xbf16> -> vector<100x512xbf16>
    %cst = arith.constant dense<0.000000e+00> : vector<4x512xf32>
    %5 = tpu.matmul %2, %4, %cst {dimension_numbers = #tpu.dot_dimension_numbers<[1], [0], [0], [1], [0, 0, 1, 1], [], []>} : vector<4x100xbf16>, vector<100x512xbf16>, vector<4x512xf32> -> vector<4x512xf32>
    %6 = vector.extract_strided_slice %5 {offsets = [0, 0], sizes = [4, 256], strides = [1, 1]} : vector<4x512xf32> to vector<4x256xf32>
    %7 = vector.extract_strided_slice %5 {offsets = [0, 256], sizes = [4, 256], strides = [1, 1]} : vector<4x512xf32> to vector<4x256xf32>
    %cst_5 = arith.constant 9.99999968E-21 : f32
    %8 = vector.broadcast %cst_5 : f32 to vector<4x256xf32>
    %9 = arith.addf %6, %8 : vector<4x256xf32>
    %10 = tpu.reciprocal %9 {approx = true} : vector<4x256xf32> -> vector<4x256xf32>
    %11 = arith.mulf %7, %10 : vector<4x256xf32>
    %c0_6 = arith.constant 0 : index
    %c0_7 = arith.constant 0 : index
    %12 = vector.load %arg4[%c0_6, %c0_7] : memref<4x1xf32, #tpu.memory_space<vmem>>, vector<4x1xf32>
    %13 = vector.broadcast %12 : vector<4x1xf32> to vector<4x256xf32>
    %14 = arith.addf %11, %13 : vector<4x256xf32>
    %c0_8 = arith.constant 0 : index
    %c0_9 = arith.constant 0 : index
    %15 = vector.load %arg6[%c0_8, %c0_9] : memref<4x256xf32, #tpu.memory_space<vmem>>, vector<4x256xf32>
    tpu.vector_store %arg6[%c0_8, %c0_9], %14 {strides = array<i32>} : memref<4x256xf32, #tpu.memory_space<vmem>>, vector<4x256xf32>,
    %c0_10 = arith.constant 0 : index
    %c0_11 = arith.constant 0 : index
    %16 = vector.load %arg5[%c0_10, %c0_11] : memref<4x1xf32, #tpu.memory_space<vmem>>, vector<4x1xf32>
    %17 = vector.broadcast %16 : vector<4x1xf32> to vector<4x256xf32>
    %18 = arith.mulf %6, %17 : vector<4x256xf32>
    %c0_12 = arith.constant 0 : index
    %c0_13 = arith.constant 0 : index
    %19 = vector.load %arg7[%c0_12, %c0_13] : memref<4x256xf32, #tpu.memory_space<vmem>>, vector<4x256xf32>
    tpu.vector_store %arg7[%c0_12, %c0_13], %18 {strides = array<i32>} : memref<4x256xf32, #tpu.memory_space<vmem>>, vector<4x256xf32>,
    return
  }
  func.func @transform_0(%arg0: i32) -> (i32, i32) {
    %c0_i32 = arith.constant 0 : i32
    %c0_i32_0 = arith.constant 0 : i32
    return %c0_i32, %arg0 : i32, i32
  }
  func.func @transform_1(%arg0: i32) -> (i32, i32) {
    %c0_i32 = arith.constant 0 : i32
    %c0_i32_0 = arith.constant 0 : i32
    return %c0_i32, %arg0 : i32, i32
  }
  func.func @transform_2(%arg0: i32) -> (i32, i32) {
    %c0_i32 = arith.constant 0 : i32
    %c0_i32_0 = arith.constant 0 : i32
    %c0_i32_1 = arith.constant 0 : i32
    return %c0_i32, %c0_i32_0 : i32, i32
  }
  func.func @transform_3(%arg0: i32) -> (i32, i32) {
    %c0_i32 = arith.constant 0 : i32
    %c0_i32_0 = arith.constant 0 : i32
    %c0_i32_1 = arith.constant 0 : i32
    return %c0_i32, %c0_i32_0 : i32, i32
  }
  func.func @transform_4(%arg0: i32) -> (i32, i32) {
    %c0_i32 = arith.constant 0 : i32
    %c0_i32_0 = arith.constant 0 : i32
    %c0_i32_1 = arith.constant 0 : i32
    return %c0_i32, %c0_i32_0 : i32, i32
  }
  func.func @transform_5(%arg0: i32) -> (i32, i32) {
    %c0_i32 = arith.constant 0 : i32
    %c0_i32_0 = arith.constant 0 : i32
    return %c0_i32, %arg0 : i32, i32
  }
  func.func @transform_6(%arg0: i32) -> (i32, i32) {
    %c0_i32 = arith.constant 0 : i32
    %c0_i32_0 = arith.constant 0 : i32
    return %c0_i32, %arg0 : i32, i32
  }
}

module attributes {stable_mosaic.version = 11 : i64} {
  func.func @_nconv_kernel(%arg0: i32, %arg1: memref<100x128xbf16, #tpu.memory_space<vmem>>, %arg2: memref<100x128xbf16, #tpu.memory_space<vmem>>, %arg3: memref<4x100xbf16, #tpu.memory_space<vmem>>, %arg4: memref<4x1xf32, #tpu.memory_space<vmem>>, %arg5: memref<4x1xf32, #tpu.memory_space<vmem>>, %arg6: memref<4x128xf32, #tpu.memory_space<vmem>>, %arg7: memref<4x128xf32, #tpu.memory_space<vmem>>) attributes {dimension_semantics = [#tpu.dimension_semantics<parallel>], iteration_bounds = array<i64: 1>, scalar_prefetch = 0 : i64, scratch_operands = 0 : i64, tpu.core_type = #tpu.core_type<tc>, window_params = [{transform_indices = @transform_0, window_bounds = array<i64: 100, 128>}, {transform_indices = @transform_1, window_bounds = array<i64: 100, 128>}, {pipeline_mode = #tpu.pipeline_mode<synchronous>, transform_indices = @transform_2, window_bounds = array<i64: 4, 100>}, {pipeline_mode = #tpu.pipeline_mode<synchronous>, transform_indices = @transform_3, window_bounds = array<i64: 4, 1>}, {pipeline_mode = #tpu.pipeline_mode<synchronous>, transform_indices = @transform_4, window_bounds = array<i64: 4, 1>}, {transform_indices = @transform_5, window_bounds = array<i64: 4, 128>}, {transform_indices = @transform_6, window_bounds = array<i64: 4, 128>}]} {
    %c0 = arith.constant 0 : index
    %c0_0 = arith.constant 0 : index
    %0 = vector.load %arg1[%c0, %c0_0] : memref<100x128xbf16, #tpu.memory_space<vmem>>, vector<100x128xbf16>
    %c0_1 = arith.constant 0 : index
    %c0_2 = arith.constant 0 : index
    %1 = vector.load %arg2[%c0_1, %c0_2] : memref<100x128xbf16, #tpu.memory_space<vmem>>, vector<100x128xbf16>
    %c0_3 = arith.constant 0 : index
    %c0_4 = arith.constant 0 : index
    %2 = vector.load %arg3[%c0_3, %c0_4] : memref<4x100xbf16, #tpu.memory_space<vmem>>, vector<4x100xbf16>
    %3 = arith.mulf %0, %1 : vector<100x128xbf16>
    %4 = tpu.concatenate %1, %3 in 1 : vector<100x128xbf16>, vector<100x128xbf16> -> vector<100x256xbf16>
    %cst = arith.constant dense<0.000000e+00> : vector<4x256xf32>
    %5 = tpu.matmul %2, %4, %cst {dimension_numbers = #tpu.dot_dimension_numbers<[1], [0], [0], [1], [0, 0, 1, 1], [], []>} : vector<4x100xbf16>, vector<100x256xbf16>, vector<4x256xf32> -> vector<4x256xf32>
    %6 = vector.extract_strided_slice %5 {offsets = [0, 0], sizes = [4, 128], strides = [1, 1]} : vector<4x256xf32> to vector<4x128xf32>
    %7 = vector.extract_strided_slice %5 {offsets = [0, 128], sizes = [4, 128], strides = [1, 1]} : vector<4x256xf32> to vector<4x128xf32>
    %cst_5 = arith.constant 9.99999968E-21 : f32
    %8 = vector.broadcast %cst_5 : f32 to vector<4x128xf32>
    %9 = arith.addf %6, %8 : vector<4x128xf32>
    %10 = tpu.reciprocal %9 {approx = true} : vector<4x128xf32> -> vector<4x128xf32>
    %11 = arith.mulf %7, %10 : vector<4x128xf32>
    %c0_6 = arith.constant 0 : index
    %c0_7 = arith.constant 0 : index
    %12 = vector.load %arg4[%c0_6, %c0_7] : memref<4x1xf32, #tpu.memory_space<vmem>>, vector<4x1xf32>
    %13 = vector.broadcast %12 : vector<4x1xf32> to vector<4x128xf32>
    %14 = arith.addf %11, %13 : vector<4x128xf32>
    %c0_8 = arith.constant 0 : index
    %c0_9 = arith.constant 0 : index
    %15 = vector.load %arg6[%c0_8, %c0_9] : memref<4x128xf32, #tpu.memory_space<vmem>>, vector<4x128xf32>
    tpu.vector_store %arg6[%c0_8, %c0_9], %14 {strides = array<i32>} : memref<4x128xf32, #tpu.memory_space<vmem>>, vector<4x128xf32>,
    %c0_10 = arith.constant 0 : index
    %c0_11 = arith.constant 0 : index
    %16 = vector.load %arg5[%c0_10, %c0_11] : memref<4x1xf32, #tpu.memory_space<vmem>>, vector<4x1xf32>
    %17 = vector.broadcast %16 : vector<4x1xf32> to vector<4x128xf32>
    %18 = arith.mulf %6, %17 : vector<4x128xf32>
    %c0_12 = arith.constant 0 : index
    %c0_13 = arith.constant 0 : index
    %19 = vector.load %arg7[%c0_12, %c0_13] : memref<4x128xf32, #tpu.memory_space<vmem>>, vector<4x128xf32>
    tpu.vector_store %arg7[%c0_12, %c0_13], %18 {strides = array<i32>} : memref<4x128xf32, #tpu.memory_space<vmem>>, vector<4x128xf32>,
    return
  }
  func.func @transform_0(%arg0: i32) -> (i32, i32) {
    %c0_i32 = arith.constant 0 : i32
    %c0_i32_0 = arith.constant 0 : i32
    return %c0_i32, %arg0 : i32, i32
  }
  func.func @transform_1(%arg0: i32) -> (i32, i32) {
    %c0_i32 = arith.constant 0 : i32
    %c0_i32_0 = arith.constant 0 : i32
    return %c0_i32, %arg0 : i32, i32
  }
  func.func @transform_2(%arg0: i32) -> (i32, i32) {
    %c0_i32 = arith.constant 0 : i32
    %c0_i32_0 = arith.constant 0 : i32
    %c0_i32_1 = arith.constant 0 : i32
    return %c0_i32, %c0_i32_0 : i32, i32
  }
  func.func @transform_3(%arg0: i32) -> (i32, i32) {
    %c0_i32 = arith.constant 0 : i32
    %c0_i32_0 = arith.constant 0 : i32
    %c0_i32_1 = arith.constant 0 : i32
    return %c0_i32, %c0_i32_0 : i32, i32
  }
  func.func @transform_4(%arg0: i32) -> (i32, i32) {
    %c0_i32 = arith.constant 0 : i32
    %c0_i32_0 = arith.constant 0 : i32
    %c0_i32_1 = arith.constant 0 : i32
    return %c0_i32, %c0_i32_0 : i32, i32
  }
  func.func @transform_5(%arg0: i32) -> (i32, i32) {
    %c0_i32 = arith.constant 0 : i32
    %c0_i32_0 = arith.constant 0 : i32
    return %c0_i32, %arg0 : i32, i32
  }
  func.func @transform_6(%arg0: i32) -> (i32, i32) {
    %c0_i32 = arith.constant 0 : i32
    %c0_i32_0 = arith.constant 0 : i32
    return %c0_i32, %arg0 : i32, i32
  }
}

module attributes {stable_mosaic.version = 11 : i64} {
  func.func @_nconv_kernel(%arg0: i32, %arg1: memref<100x32xbf16, #tpu.memory_space<vmem>>, %arg2: memref<100x32xbf16, #tpu.memory_space<vmem>>, %arg3: memref<4x100xbf16, #tpu.memory_space<vmem>>, %arg4: memref<4x1xf32, #tpu.memory_space<vmem>>, %arg5: memref<4x1xf32, #tpu.memory_space<vmem>>, %arg6: memref<4x32xf32, #tpu.memory_space<vmem>>, %arg7: memref<4x32xf32, #tpu.memory_space<vmem>>) attributes {dimension_semantics = [#tpu.dimension_semantics<parallel>], iteration_bounds = array<i64: 1>, scalar_prefetch = 0 : i64, scratch_operands = 0 : i64, tpu.core_type = #tpu.core_type<tc>, window_params = [{transform_indices = @transform_0, window_bounds = array<i64: 100, 32>}, {transform_indices = @transform_1, window_bounds = array<i64: 100, 32>}, {pipeline_mode = #tpu.pipeline_mode<synchronous>, transform_indices = @transform_2, window_bounds = array<i64: 4, 100>}, {pipeline_mode = #tpu.pipeline_mode<synchronous>, transform_indices = @transform_3, window_bounds = array<i64: 4, 1>}, {pipeline_mode = #tpu.pipeline_mode<synchronous>, transform_indices = @transform_4, window_bounds = array<i64: 4, 1>}, {transform_indices = @transform_5, window_bounds = array<i64: 4, 32>}, {transform_indices = @transform_6, window_bounds = array<i64: 4, 32>}]} {
    %c0 = arith.constant 0 : index
    %c0_0 = arith.constant 0 : index
    %0 = vector.load %arg1[%c0, %c0_0] : memref<100x32xbf16, #tpu.memory_space<vmem>>, vector<100x32xbf16>
    %c0_1 = arith.constant 0 : index
    %c0_2 = arith.constant 0 : index
    %1 = vector.load %arg2[%c0_1, %c0_2] : memref<100x32xbf16, #tpu.memory_space<vmem>>, vector<100x32xbf16>
    %c0_3 = arith.constant 0 : index
    %c0_4 = arith.constant 0 : index
    %2 = vector.load %arg3[%c0_3, %c0_4] : memref<4x100xbf16, #tpu.memory_space<vmem>>, vector<4x100xbf16>
    %3 = arith.mulf %0, %1 : vector<100x32xbf16>
    %cst = arith.constant dense<0.000000e+00> : vector<4x32xf32>
    %4 = tpu.matmul %2, %1, %cst {dimension_numbers = #tpu.dot_dimension_numbers<[1], [0], [0], [1], [0, 0, 1, 1], [], []>} : vector<4x100xbf16>, vector<100x32xbf16>, vector<4x32xf32> -> vector<4x32xf32>
    %cst_5 = arith.constant dense<0.000000e+00> : vector<4x32xf32>
    %5 = tpu.matmul %2, %3, %cst_5 {dimension_numbers = #tpu.dot_dimension_numbers<[1], [0], [0], [1], [0, 0, 1, 1], [], []>} : vector<4x100xbf16>, vector<100x32xbf16>, vector<4x32xf32> -> vector<4x32xf32>
    %cst_6 = arith.constant 9.99999968E-21 : f32
    %6 = vector.broadcast %cst_6 : f32 to vector<4x32xf32>
    %7 = arith.addf %4, %6 : vector<4x32xf32>
    %8 = tpu.reciprocal %7 {approx = true} : vector<4x32xf32> -> vector<4x32xf32>
    %9 = arith.mulf %5, %8 : vector<4x32xf32>
    %c0_7 = arith.constant 0 : index
    %c0_8 = arith.constant 0 : index
    %10 = vector.load %arg4[%c0_7, %c0_8] : memref<4x1xf32, #tpu.memory_space<vmem>>, vector<4x1xf32>
    %11 = vector.broadcast %10 : vector<4x1xf32> to vector<4x32xf32>
    %12 = arith.addf %9, %11 : vector<4x32xf32>
    %c0_9 = arith.constant 0 : index
    %c0_10 = arith.constant 0 : index
    %13 = vector.load %arg6[%c0_9, %c0_10] : memref<4x32xf32, #tpu.memory_space<vmem>>, vector<4x32xf32>
    tpu.vector_store %arg6[%c0_9, %c0_10], %12 {strides = array<i32>} : memref<4x32xf32, #tpu.memory_space<vmem>>, vector<4x32xf32>,
    %c0_11 = arith.constant 0 : index
    %c0_12 = arith.constant 0 : index
    %14 = vector.load %arg5[%c0_11, %c0_12] : memref<4x1xf32, #tpu.memory_space<vmem>>, vector<4x1xf32>
    %15 = vector.broadcast %14 : vector<4x1xf32> to vector<4x32xf32>
    %16 = arith.mulf %4, %15 : vector<4x32xf32>
    %c0_13 = arith.constant 0 : index
    %c0_14 = arith.constant 0 : index
    %17 = vector.load %arg7[%c0_13, %c0_14] : memref<4x32xf32, #tpu.memory_space<vmem>>, vector<4x32xf32>
    tpu.vector_store %arg7[%c0_13, %c0_14], %16 {strides = array<i32>} : memref<4x32xf32, #tpu.memory_space<vmem>>, vector<4x32xf32>,
    return
  }
  func.func @transform_0(%arg0: i32) -> (i32, i32) {
    %c0_i32 = arith.constant 0 : i32
    %c0_i32_0 = arith.constant 0 : i32
    return %c0_i32, %arg0 : i32, i32
  }
  func.func @transform_1(%arg0: i32) -> (i32, i32) {
    %c0_i32 = arith.constant 0 : i32
    %c0_i32_0 = arith.constant 0 : i32
    return %c0_i32, %arg0 : i32, i32
  }
  func.func @transform_2(%arg0: i32) -> (i32, i32) {
    %c0_i32 = arith.constant 0 : i32
    %c0_i32_0 = arith.constant 0 : i32
    %c0_i32_1 = arith.constant 0 : i32
    return %c0_i32, %c0_i32_0 : i32, i32
  }
  func.func @transform_3(%arg0: i32) -> (i32, i32) {
    %c0_i32 = arith.constant 0 : i32
    %c0_i32_0 = arith.constant 0 : i32
    %c0_i32_1 = arith.constant 0 : i32
    return %c0_i32, %c0_i32_0 : i32, i32
  }
  func.func @transform_4(%arg0: i32) -> (i32, i32) {
    %c0_i32 = arith.constant 0 : i32
    %c0_i32_0 = arith.constant 0 : i32
    %c0_i32_1 = arith.constant 0 : i32
    return %c0_i32, %c0_i32_0 : i32, i32
  }
  func.func @transform_5(%arg0: i32) -> (i32, i32) {
    %c0_i32 = arith.constant 0 : i32
    %c0_i32_0 = arith.constant 0 : i32
    return %c0_i32, %arg0 : i32, i32
  }
  func.func @transform_6(%arg0: i32) -> (i32, i32) {
    %c0_i32 = arith.constant 0 : i32
    %c0_i32_0 = arith.constant 0 : i32
    return %c0_i32, %arg0 : i32, i32
  }
}

module attributes {stable_mosaic.version = 11 : i64} {
  func.func @_nconv_kernel(%arg0: i32, %arg1: memref<100x8xbf16, #tpu.memory_space<vmem>>, %arg2: memref<100x8xbf16, #tpu.memory_space<vmem>>, %arg3: memref<4x100xbf16, #tpu.memory_space<vmem>>, %arg4: memref<4x1xf32, #tpu.memory_space<vmem>>, %arg5: memref<4x1xf32, #tpu.memory_space<vmem>>, %arg6: memref<4x8xf32, #tpu.memory_space<vmem>>, %arg7: memref<4x8xf32, #tpu.memory_space<vmem>>) attributes {dimension_semantics = [#tpu.dimension_semantics<parallel>], iteration_bounds = array<i64: 1>, scalar_prefetch = 0 : i64, scratch_operands = 0 : i64, tpu.core_type = #tpu.core_type<tc>, window_params = [{transform_indices = @transform_0, window_bounds = array<i64: 100, 8>}, {transform_indices = @transform_1, window_bounds = array<i64: 100, 8>}, {pipeline_mode = #tpu.pipeline_mode<synchronous>, transform_indices = @transform_2, window_bounds = array<i64: 4, 100>}, {pipeline_mode = #tpu.pipeline_mode<synchronous>, transform_indices = @transform_3, window_bounds = array<i64: 4, 1>}, {pipeline_mode = #tpu.pipeline_mode<synchronous>, transform_indices = @transform_4, window_bounds = array<i64: 4, 1>}, {transform_indices = @transform_5, window_bounds = array<i64: 4, 8>}, {transform_indices = @transform_6, window_bounds = array<i64: 4, 8>}]} {
    %c0 = arith.constant 0 : index
    %c0_0 = arith.constant 0 : index
    %0 = vector.load %arg1[%c0, %c0_0] : memref<100x8xbf16, #tpu.memory_space<vmem>>, vector<100x8xbf16>
    %c0_1 = arith.constant 0 : index
    %c0_2 = arith.constant 0 : index
    %1 = vector.load %arg2[%c0_1, %c0_2] : memref<100x8xbf16, #tpu.memory_space<vmem>>, vector<100x8xbf16>
    %c0_3 = arith.constant 0 : index
    %c0_4 = arith.constant 0 : index
    %2 = vector.load %arg3[%c0_3, %c0_4] : memref<4x100xbf16, #tpu.memory_space<vmem>>, vector<4x100xbf16>
    %3 = arith.mulf %0, %1 : vector<100x8xbf16>
    %cst = arith.constant dense<0.000000e+00> : vector<4x8xf32>
    %4 = tpu.matmul %2, %1, %cst {dimension_numbers = #tpu.dot_dimension_numbers<[1], [0], [0], [1], [0, 0, 1, 1], [], []>} : vector<4x100xbf16>, vector<100x8xbf16>, vector<4x8xf32> -> vector<4x8xf32>
    %cst_5 = arith.constant dense<0.000000e+00> : vector<4x8xf32>
    %5 = tpu.matmul %2, %3, %cst_5 {dimension_numbers = #tpu.dot_dimension_numbers<[1], [0], [0], [1], [0, 0, 1, 1], [], []>} : vector<4x100xbf16>, vector<100x8xbf16>, vector<4x8xf32> -> vector<4x8xf32>
    %cst_6 = arith.constant 9.99999968E-21 : f32
    %6 = vector.broadcast %cst_6 : f32 to vector<4x8xf32>
    %7 = arith.addf %4, %6 : vector<4x8xf32>
    %8 = tpu.reciprocal %7 {approx = true} : vector<4x8xf32> -> vector<4x8xf32>
    %9 = arith.mulf %5, %8 : vector<4x8xf32>
    %c0_7 = arith.constant 0 : index
    %c0_8 = arith.constant 0 : index
    %10 = vector.load %arg4[%c0_7, %c0_8] : memref<4x1xf32, #tpu.memory_space<vmem>>, vector<4x1xf32>
    %11 = vector.broadcast %10 : vector<4x1xf32> to vector<4x8xf32>
    %12 = arith.addf %9, %11 : vector<4x8xf32>
    %c0_9 = arith.constant 0 : index
    %c0_10 = arith.constant 0 : index
    %13 = vector.load %arg6[%c0_9, %c0_10] : memref<4x8xf32, #tpu.memory_space<vmem>>, vector<4x8xf32>
    tpu.vector_store %arg6[%c0_9, %c0_10], %12 {strides = array<i32>} : memref<4x8xf32, #tpu.memory_space<vmem>>, vector<4x8xf32>,
    %c0_11 = arith.constant 0 : index
    %c0_12 = arith.constant 0 : index
    %14 = vector.load %arg5[%c0_11, %c0_12] : memref<4x1xf32, #tpu.memory_space<vmem>>, vector<4x1xf32>
    %15 = vector.broadcast %14 : vector<4x1xf32> to vector<4x8xf32>
    %16 = arith.mulf %4, %15 : vector<4x8xf32>
    %c0_13 = arith.constant 0 : index
    %c0_14 = arith.constant 0 : index
    %17 = vector.load %arg7[%c0_13, %c0_14] : memref<4x8xf32, #tpu.memory_space<vmem>>, vector<4x8xf32>
    tpu.vector_store %arg7[%c0_13, %c0_14], %16 {strides = array<i32>} : memref<4x8xf32, #tpu.memory_space<vmem>>, vector<4x8xf32>,
    return
  }
  func.func @transform_0(%arg0: i32) -> (i32, i32) {
    %c0_i32 = arith.constant 0 : i32
    %c0_i32_0 = arith.constant 0 : i32
    return %c0_i32, %arg0 : i32, i32
  }
  func.func @transform_1(%arg0: i32) -> (i32, i32) {
    %c0_i32 = arith.constant 0 : i32
    %c0_i32_0 = arith.constant 0 : i32
    return %c0_i32, %arg0 : i32, i32
  }
  func.func @transform_2(%arg0: i32) -> (i32, i32) {
    %c0_i32 = arith.constant 0 : i32
    %c0_i32_0 = arith.constant 0 : i32
    %c0_i32_1 = arith.constant 0 : i32
    return %c0_i32, %c0_i32_0 : i32, i32
  }
  func.func @transform_3(%arg0: i32) -> (i32, i32) {
    %c0_i32 = arith.constant 0 : i32
    %c0_i32_0 = arith.constant 0 : i32
    %c0_i32_1 = arith.constant 0 : i32
    return %c0_i32, %c0_i32_0 : i32, i32
  }
  func.func @transform_4(%arg0: i32) -> (i32, i32) {
    %c0_i32 = arith.constant 0 : i32
    %c0_i32_0 = arith.constant 0 : i32
    %c0_i32_1 = arith.constant 0 : i32
    return %c0_i32, %c0_i32_0 : i32, i32
  }
  func.func @transform_5(%arg0: i32) -> (i32, i32) {
    %c0_i32 = arith.constant 0 : i32
    %c0_i32_0 = arith.constant 0 : i32
    return %c0_i32, %arg0 : i32, i32
  }
  func.func @transform_6(%arg0: i32) -> (i32, i32) {
    %c0_i32 = arith.constant 0 : i32
    %c0_i32_0 = arith.constant 0 : i32
    return %c0_i32, %arg0 : i32, i32
  }
}

module attributes {stable_mosaic.version = 11 : i64} {
  func.func @_nconv_kernel(%arg0: i32, %arg1: memref<72x32xbf16, #tpu.memory_space<vmem>>, %arg2: memref<72x32xbf16, #tpu.memory_space<vmem>>, %arg3: memref<4x72xbf16, #tpu.memory_space<vmem>>, %arg4: memref<4x1xf32, #tpu.memory_space<vmem>>, %arg5: memref<4x1xf32, #tpu.memory_space<vmem>>, %arg6: memref<4x32xf32, #tpu.memory_space<vmem>>, %arg7: memref<4x32xf32, #tpu.memory_space<vmem>>) attributes {dimension_semantics = [#tpu.dimension_semantics<parallel>], iteration_bounds = array<i64: 1>, scalar_prefetch = 0 : i64, scratch_operands = 0 : i64, tpu.core_type = #tpu.core_type<tc>, window_params = [{transform_indices = @transform_0, window_bounds = array<i64: 72, 32>}, {transform_indices = @transform_1, window_bounds = array<i64: 72, 32>}, {pipeline_mode = #tpu.pipeline_mode<synchronous>, transform_indices = @transform_2, window_bounds = array<i64: 4, 72>}, {pipeline_mode = #tpu.pipeline_mode<synchronous>, transform_indices = @transform_3, window_bounds = array<i64: 4, 1>}, {pipeline_mode = #tpu.pipeline_mode<synchronous>, transform_indices = @transform_4, window_bounds = array<i64: 4, 1>}, {transform_indices = @transform_5, window_bounds = array<i64: 4, 32>}, {transform_indices = @transform_6, window_bounds = array<i64: 4, 32>}]} {
    %c0 = arith.constant 0 : index
    %c0_0 = arith.constant 0 : index
    %0 = vector.load %arg1[%c0, %c0_0] : memref<72x32xbf16, #tpu.memory_space<vmem>>, vector<72x32xbf16>
    %c0_1 = arith.constant 0 : index
    %c0_2 = arith.constant 0 : index
    %1 = vector.load %arg2[%c0_1, %c0_2] : memref<72x32xbf16, #tpu.memory_space<vmem>>, vector<72x32xbf16>
    %c0_3 = arith.constant 0 : index
    %c0_4 = arith.constant 0 : index
    %2 = vector.load %arg3[%c0_3, %c0_4] : memref<4x72xbf16, #tpu.memory_space<vmem>>, vector<4x72xbf16>
    %3 = arith.mulf %0, %1 : vector<72x32xbf16>
    %cst = arith.constant dense<0.000000e+00> : vector<4x32xf32>
    %4 = tpu.matmul %2, %1, %cst {dimension_numbers = #tpu.dot_dimension_numbers<[1], [0], [0], [1], [0, 0, 1, 1], [], []>} : vector<4x72xbf16>, vector<72x32xbf16>, vector<4x32xf32> -> vector<4x32xf32>
    %cst_5 = arith.constant dense<0.000000e+00> : vector<4x32xf32>
    %5 = tpu.matmul %2, %3, %cst_5 {dimension_numbers = #tpu.dot_dimension_numbers<[1], [0], [0], [1], [0, 0, 1, 1], [], []>} : vector<4x72xbf16>, vector<72x32xbf16>, vector<4x32xf32> -> vector<4x32xf32>
    %cst_6 = arith.constant 9.99999968E-21 : f32
    %6 = vector.broadcast %cst_6 : f32 to vector<4x32xf32>
    %7 = arith.addf %4, %6 : vector<4x32xf32>
    %8 = tpu.reciprocal %7 {approx = true} : vector<4x32xf32> -> vector<4x32xf32>
    %9 = arith.mulf %5, %8 : vector<4x32xf32>
    %c0_7 = arith.constant 0 : index
    %c0_8 = arith.constant 0 : index
    %10 = vector.load %arg4[%c0_7, %c0_8] : memref<4x1xf32, #tpu.memory_space<vmem>>, vector<4x1xf32>
    %11 = vector.broadcast %10 : vector<4x1xf32> to vector<4x32xf32>
    %12 = arith.addf %9, %11 : vector<4x32xf32>
    %c0_9 = arith.constant 0 : index
    %c0_10 = arith.constant 0 : index
    %13 = vector.load %arg6[%c0_9, %c0_10] : memref<4x32xf32, #tpu.memory_space<vmem>>, vector<4x32xf32>
    tpu.vector_store %arg6[%c0_9, %c0_10], %12 {strides = array<i32>} : memref<4x32xf32, #tpu.memory_space<vmem>>, vector<4x32xf32>,
    %c0_11 = arith.constant 0 : index
    %c0_12 = arith.constant 0 : index
    %14 = vector.load %arg5[%c0_11, %c0_12] : memref<4x1xf32, #tpu.memory_space<vmem>>, vector<4x1xf32>
    %15 = vector.broadcast %14 : vector<4x1xf32> to vector<4x32xf32>
    %16 = arith.mulf %4, %15 : vector<4x32xf32>
    %c0_13 = arith.constant 0 : index
    %c0_14 = arith.constant 0 : index
    %17 = vector.load %arg7[%c0_13, %c0_14] : memref<4x32xf32, #tpu.memory_space<vmem>>, vector<4x32xf32>
    tpu.vector_store %arg7[%c0_13, %c0_14], %16 {strides = array<i32>} : memref<4x32xf32, #tpu.memory_space<vmem>>, vector<4x32xf32>,
    return
  }
  func.func @transform_0(%arg0: i32) -> (i32, i32) {
    %c0_i32 = arith.constant 0 : i32
    %c0_i32_0 = arith.constant 0 : i32
    return %c0_i32, %arg0 : i32, i32
  }
  func.func @transform_1(%arg0: i32) -> (i32, i32) {
    %c0_i32 = arith.constant 0 : i32
    %c0_i32_0 = arith.constant 0 : i32
    return %c0_i32, %arg0 : i32, i32
  }
  func.func @transform_2(%arg0: i32) -> (i32, i32) {
    %c0_i32 = arith.constant 0 : i32
    %c0_i32_0 = arith.constant 0 : i32
    %c0_i32_1 = arith.constant 0 : i32
    return %c0_i32, %c0_i32_0 : i32, i32
  }
  func.func @transform_3(%arg0: i32) -> (i32, i32) {
    %c0_i32 = arith.constant 0 : i32
    %c0_i32_0 = arith.constant 0 : i32
    %c0_i32_1 = arith.constant 0 : i32
    return %c0_i32, %c0_i32_0 : i32, i32
  }
  func.func @transform_4(%arg0: i32) -> (i32, i32) {
    %c0_i32 = arith.constant 0 : i32
    %c0_i32_0 = arith.constant 0 : i32
    %c0_i32_1 = arith.constant 0 : i32
    return %c0_i32, %c0_i32_0 : i32, i32
  }
  func.func @transform_5(%arg0: i32) -> (i32, i32) {
    %c0_i32 = arith.constant 0 : i32
    %c0_i32_0 = arith.constant 0 : i32
    return %c0_i32, %arg0 : i32, i32
  }
  func.func @transform_6(%arg0: i32) -> (i32, i32) {
    %c0_i32 = arith.constant 0 : i32
    %c0_i32_0 = arith.constant 0 : i32
    return %c0_i32, %arg0 : i32, i32
  }
}

module attributes {stable_mosaic.version = 11 : i64} {
  func.func @_nconv_kernel(%arg0: i32, %arg1: memref<72x128xbf16, #tpu.memory_space<vmem>>, %arg2: memref<72x128xbf16, #tpu.memory_space<vmem>>, %arg3: memref<4x72xbf16, #tpu.memory_space<vmem>>, %arg4: memref<4x1xf32, #tpu.memory_space<vmem>>, %arg5: memref<4x1xf32, #tpu.memory_space<vmem>>, %arg6: memref<4x128xf32, #tpu.memory_space<vmem>>, %arg7: memref<4x128xf32, #tpu.memory_space<vmem>>) attributes {dimension_semantics = [#tpu.dimension_semantics<parallel>], iteration_bounds = array<i64: 1>, scalar_prefetch = 0 : i64, scratch_operands = 0 : i64, tpu.core_type = #tpu.core_type<tc>, window_params = [{transform_indices = @transform_0, window_bounds = array<i64: 72, 128>}, {transform_indices = @transform_1, window_bounds = array<i64: 72, 128>}, {pipeline_mode = #tpu.pipeline_mode<synchronous>, transform_indices = @transform_2, window_bounds = array<i64: 4, 72>}, {pipeline_mode = #tpu.pipeline_mode<synchronous>, transform_indices = @transform_3, window_bounds = array<i64: 4, 1>}, {pipeline_mode = #tpu.pipeline_mode<synchronous>, transform_indices = @transform_4, window_bounds = array<i64: 4, 1>}, {transform_indices = @transform_5, window_bounds = array<i64: 4, 128>}, {transform_indices = @transform_6, window_bounds = array<i64: 4, 128>}]} {
    %c0 = arith.constant 0 : index
    %c0_0 = arith.constant 0 : index
    %0 = vector.load %arg1[%c0, %c0_0] : memref<72x128xbf16, #tpu.memory_space<vmem>>, vector<72x128xbf16>
    %c0_1 = arith.constant 0 : index
    %c0_2 = arith.constant 0 : index
    %1 = vector.load %arg2[%c0_1, %c0_2] : memref<72x128xbf16, #tpu.memory_space<vmem>>, vector<72x128xbf16>
    %c0_3 = arith.constant 0 : index
    %c0_4 = arith.constant 0 : index
    %2 = vector.load %arg3[%c0_3, %c0_4] : memref<4x72xbf16, #tpu.memory_space<vmem>>, vector<4x72xbf16>
    %3 = arith.mulf %0, %1 : vector<72x128xbf16>
    %4 = tpu.concatenate %1, %3 in 1 : vector<72x128xbf16>, vector<72x128xbf16> -> vector<72x256xbf16>
    %cst = arith.constant dense<0.000000e+00> : vector<4x256xf32>
    %5 = tpu.matmul %2, %4, %cst {dimension_numbers = #tpu.dot_dimension_numbers<[1], [0], [0], [1], [0, 0, 1, 1], [], []>} : vector<4x72xbf16>, vector<72x256xbf16>, vector<4x256xf32> -> vector<4x256xf32>
    %6 = vector.extract_strided_slice %5 {offsets = [0, 0], sizes = [4, 128], strides = [1, 1]} : vector<4x256xf32> to vector<4x128xf32>
    %7 = vector.extract_strided_slice %5 {offsets = [0, 128], sizes = [4, 128], strides = [1, 1]} : vector<4x256xf32> to vector<4x128xf32>
    %cst_5 = arith.constant 9.99999968E-21 : f32
    %8 = vector.broadcast %cst_5 : f32 to vector<4x128xf32>
    %9 = arith.addf %6, %8 : vector<4x128xf32>
    %10 = tpu.reciprocal %9 {approx = true} : vector<4x128xf32> -> vector<4x128xf32>
    %11 = arith.mulf %7, %10 : vector<4x128xf32>
    %c0_6 = arith.constant 0 : index
    %c0_7 = arith.constant 0 : index
    %12 = vector.load %arg4[%c0_6, %c0_7] : memref<4x1xf32, #tpu.memory_space<vmem>>, vector<4x1xf32>
    %13 = vector.broadcast %12 : vector<4x1xf32> to vector<4x128xf32>
    %14 = arith.addf %11, %13 : vector<4x128xf32>
    %c0_8 = arith.constant 0 : index
    %c0_9 = arith.constant 0 : index
    %15 = vector.load %arg6[%c0_8, %c0_9] : memref<4x128xf32, #tpu.memory_space<vmem>>, vector<4x128xf32>
    tpu.vector_store %arg6[%c0_8, %c0_9], %14 {strides = array<i32>} : memref<4x128xf32, #tpu.memory_space<vmem>>, vector<4x128xf32>,
    %c0_10 = arith.constant 0 : index
    %c0_11 = arith.constant 0 : index
    %16 = vector.load %arg5[%c0_10, %c0_11] : memref<4x1xf32, #tpu.memory_space<vmem>>, vector<4x1xf32>
    %17 = vector.broadcast %16 : vector<4x1xf32> to vector<4x128xf32>
    %18 = arith.mulf %6, %17 : vector<4x128xf32>
    %c0_12 = arith.constant 0 : index
    %c0_13 = arith.constant 0 : index
    %19 = vector.load %arg7[%c0_12, %c0_13] : memref<4x128xf32, #tpu.memory_space<vmem>>, vector<4x128xf32>
    tpu.vector_store %arg7[%c0_12, %c0_13], %18 {strides = array<i32>} : memref<4x128xf32, #tpu.memory_space<vmem>>, vector<4x128xf32>,
    return
  }
  func.func @transform_0(%arg0: i32) -> (i32, i32) {
    %c0_i32 = arith.constant 0 : i32
    %c0_i32_0 = arith.constant 0 : i32
    return %c0_i32, %arg0 : i32, i32
  }
  func.func @transform_1(%arg0: i32) -> (i32, i32) {
    %c0_i32 = arith.constant 0 : i32
    %c0_i32_0 = arith.constant 0 : i32
    return %c0_i32, %arg0 : i32, i32
  }
  func.func @transform_2(%arg0: i32) -> (i32, i32) {
    %c0_i32 = arith.constant 0 : i32
    %c0_i32_0 = arith.constant 0 : i32
    %c0_i32_1 = arith.constant 0 : i32
    return %c0_i32, %c0_i32_0 : i32, i32
  }
  func.func @transform_3(%arg0: i32) -> (i32, i32) {
    %c0_i32 = arith.constant 0 : i32
    %c0_i32_0 = arith.constant 0 : i32
    %c0_i32_1 = arith.constant 0 : i32
    return %c0_i32, %c0_i32_0 : i32, i32
  }
  func.func @transform_4(%arg0: i32) -> (i32, i32) {
    %c0_i32 = arith.constant 0 : i32
    %c0_i32_0 = arith.constant 0 : i32
    %c0_i32_1 = arith.constant 0 : i32
    return %c0_i32, %c0_i32_0 : i32, i32
  }
  func.func @transform_5(%arg0: i32) -> (i32, i32) {
    %c0_i32 = arith.constant 0 : i32
    %c0_i32_0 = arith.constant 0 : i32
    return %c0_i32, %arg0 : i32, i32
  }
  func.func @transform_6(%arg0: i32) -> (i32, i32) {
    %c0_i32 = arith.constant 0 : i32
    %c0_i32_0 = arith.constant 0 : i32
    return %c0_i32, %arg0 : i32, i32
  }
}

module attributes {stable_mosaic.version = 11 : i64} {
  func.func @_nconv_kernel(%arg0: i32, %arg1: memref<72x256xbf16, #tpu.memory_space<vmem>>, %arg2: memref<72x256xbf16, #tpu.memory_space<vmem>>, %arg3: memref<4x72xbf16, #tpu.memory_space<vmem>>, %arg4: memref<4x1xf32, #tpu.memory_space<vmem>>, %arg5: memref<4x1xf32, #tpu.memory_space<vmem>>, %arg6: memref<4x256xf32, #tpu.memory_space<vmem>>, %arg7: memref<4x256xf32, #tpu.memory_space<vmem>>) attributes {dimension_semantics = [#tpu.dimension_semantics<parallel>], iteration_bounds = array<i64: 2>, scalar_prefetch = 0 : i64, scratch_operands = 0 : i64, tpu.core_type = #tpu.core_type<tc>, window_params = [{transform_indices = @transform_0, window_bounds = array<i64: 72, 256>}, {transform_indices = @transform_1, window_bounds = array<i64: 72, 256>}, {pipeline_mode = #tpu.pipeline_mode<synchronous>, transform_indices = @transform_2, window_bounds = array<i64: 4, 72>}, {pipeline_mode = #tpu.pipeline_mode<synchronous>, transform_indices = @transform_3, window_bounds = array<i64: 4, 1>}, {pipeline_mode = #tpu.pipeline_mode<synchronous>, transform_indices = @transform_4, window_bounds = array<i64: 4, 1>}, {transform_indices = @transform_5, window_bounds = array<i64: 4, 256>}, {transform_indices = @transform_6, window_bounds = array<i64: 4, 256>}]} {
    %c0 = arith.constant 0 : index
    %c0_0 = arith.constant 0 : index
    %0 = vector.load %arg1[%c0, %c0_0] : memref<72x256xbf16, #tpu.memory_space<vmem>>, vector<72x256xbf16>
    %c0_1 = arith.constant 0 : index
    %c0_2 = arith.constant 0 : index
    %1 = vector.load %arg2[%c0_1, %c0_2] : memref<72x256xbf16, #tpu.memory_space<vmem>>, vector<72x256xbf16>
    %c0_3 = arith.constant 0 : index
    %c0_4 = arith.constant 0 : index
    %2 = vector.load %arg3[%c0_3, %c0_4] : memref<4x72xbf16, #tpu.memory_space<vmem>>, vector<4x72xbf16>
    %3 = arith.mulf %0, %1 : vector<72x256xbf16>
    %4 = tpu.concatenate %1, %3 in 1 : vector<72x256xbf16>, vector<72x256xbf16> -> vector<72x512xbf16>
    %cst = arith.constant dense<0.000000e+00> : vector<4x512xf32>
    %5 = tpu.matmul %2, %4, %cst {dimension_numbers = #tpu.dot_dimension_numbers<[1], [0], [0], [1], [0, 0, 1, 1], [], []>} : vector<4x72xbf16>, vector<72x512xbf16>, vector<4x512xf32> -> vector<4x512xf32>
    %6 = vector.extract_strided_slice %5 {offsets = [0, 0], sizes = [4, 256], strides = [1, 1]} : vector<4x512xf32> to vector<4x256xf32>
    %7 = vector.extract_strided_slice %5 {offsets = [0, 256], sizes = [4, 256], strides = [1, 1]} : vector<4x512xf32> to vector<4x256xf32>
    %cst_5 = arith.constant 9.99999968E-21 : f32
    %8 = vector.broadcast %cst_5 : f32 to vector<4x256xf32>
    %9 = arith.addf %6, %8 : vector<4x256xf32>
    %10 = tpu.reciprocal %9 {approx = true} : vector<4x256xf32> -> vector<4x256xf32>
    %11 = arith.mulf %7, %10 : vector<4x256xf32>
    %c0_6 = arith.constant 0 : index
    %c0_7 = arith.constant 0 : index
    %12 = vector.load %arg4[%c0_6, %c0_7] : memref<4x1xf32, #tpu.memory_space<vmem>>, vector<4x1xf32>
    %13 = vector.broadcast %12 : vector<4x1xf32> to vector<4x256xf32>
    %14 = arith.addf %11, %13 : vector<4x256xf32>
    %c0_8 = arith.constant 0 : index
    %c0_9 = arith.constant 0 : index
    %15 = vector.load %arg6[%c0_8, %c0_9] : memref<4x256xf32, #tpu.memory_space<vmem>>, vector<4x256xf32>
    tpu.vector_store %arg6[%c0_8, %c0_9], %14 {strides = array<i32>} : memref<4x256xf32, #tpu.memory_space<vmem>>, vector<4x256xf32>,
    %c0_10 = arith.constant 0 : index
    %c0_11 = arith.constant 0 : index
    %16 = vector.load %arg5[%c0_10, %c0_11] : memref<4x1xf32, #tpu.memory_space<vmem>>, vector<4x1xf32>
    %17 = vector.broadcast %16 : vector<4x1xf32> to vector<4x256xf32>
    %18 = arith.mulf %6, %17 : vector<4x256xf32>
    %c0_12 = arith.constant 0 : index
    %c0_13 = arith.constant 0 : index
    %19 = vector.load %arg7[%c0_12, %c0_13] : memref<4x256xf32, #tpu.memory_space<vmem>>, vector<4x256xf32>
    tpu.vector_store %arg7[%c0_12, %c0_13], %18 {strides = array<i32>} : memref<4x256xf32, #tpu.memory_space<vmem>>, vector<4x256xf32>,
    return
  }
  func.func @transform_0(%arg0: i32) -> (i32, i32) {
    %c0_i32 = arith.constant 0 : i32
    %c0_i32_0 = arith.constant 0 : i32
    return %c0_i32, %arg0 : i32, i32
  }
  func.func @transform_1(%arg0: i32) -> (i32, i32) {
    %c0_i32 = arith.constant 0 : i32
    %c0_i32_0 = arith.constant 0 : i32
    return %c0_i32, %arg0 : i32, i32
  }
  func.func @transform_2(%arg0: i32) -> (i32, i32) {
    %c0_i32 = arith.constant 0 : i32
    %c0_i32_0 = arith.constant 0 : i32
    %c0_i32_1 = arith.constant 0 : i32
    return %c0_i32, %c0_i32_0 : i32, i32
  }
  func.func @transform_3(%arg0: i32) -> (i32, i32) {
    %c0_i32 = arith.constant 0 : i32
    %c0_i32_0 = arith.constant 0 : i32
    %c0_i32_1 = arith.constant 0 : i32
    return %c0_i32, %c0_i32_0 : i32, i32
  }
  func.func @transform_4(%arg0: i32) -> (i32, i32) {
    %c0_i32 = arith.constant 0 : i32
    %c0_i32_0 = arith.constant 0 : i32
    %c0_i32_1 = arith.constant 0 : i32
    return %c0_i32, %c0_i32_0 : i32, i32
  }
  func.func @transform_5(%arg0: i32) -> (i32, i32) {
    %c0_i32 = arith.constant 0 : i32
    %c0_i32_0 = arith.constant 0 : i32
    return %c0_i32, %arg0 : i32, i32
  }
  func.func @transform_6(%arg0: i32) -> (i32, i32) {
    %c0_i32 = arith.constant 0 : i32
    %c0_i32_0 = arith.constant 0 : i32
    return %c0_i32, %arg0 : i32, i32
  }
}

module attributes {stable_mosaic.version = 11 : i64} {
  func.func @_nconv_kernel(%arg0: i32, %arg1: memref<4x256xbf16, #tpu.memory_space<vmem>>, %arg2: memref<4x256xbf16, #tpu.memory_space<vmem>>, %arg3: memref<1x4xbf16, #tpu.memory_space<vmem>>, %arg4: memref<1x1xf32, #tpu.memory_space<vmem>>, %arg5: memref<1x1xf32, #tpu.memory_space<vmem>>, %arg6: memref<1x256xf32, #tpu.memory_space<vmem>>, %arg7: memref<1x256xf32, #tpu.memory_space<vmem>>) attributes {dimension_semantics = [#tpu.dimension_semantics<parallel>], iteration_bounds = array<i64: 2>, scalar_prefetch = 0 : i64, scratch_operands = 0 : i64, tpu.core_type = #tpu.core_type<tc>, window_params = [{transform_indices = @transform_0, window_bounds = array<i64: 4, 256>}, {transform_indices = @transform_1, window_bounds = array<i64: 4, 256>}, {pipeline_mode = #tpu.pipeline_mode<synchronous>, transform_indices = @transform_2, window_bounds = array<i64: 1, 4>}, {pipeline_mode = #tpu.pipeline_mode<synchronous>, transform_indices = @transform_3, window_bounds = array<i64: 1, 1>}, {pipeline_mode = #tpu.pipeline_mode<synchronous>, transform_indices = @transform_4, window_bounds = array<i64: 1, 1>}, {transform_indices = @transform_5, window_bounds = array<i64: 1, 256>}, {transform_indices = @transform_6, window_bounds = array<i64: 1, 256>}]} {
    %c0 = arith.constant 0 : index
    %c0_0 = arith.constant 0 : index
    %0 = vector.load %arg1[%c0, %c0_0] : memref<4x256xbf16, #tpu.memory_space<vmem>>, vector<4x256xbf16>
    %c0_1 = arith.constant 0 : index
    %c0_2 = arith.constant 0 : index
    %1 = vector.load %arg2[%c0_1, %c0_2] : memref<4x256xbf16, #tpu.memory_space<vmem>>, vector<4x256xbf16>
    %c0_3 = arith.constant 0 : index
    %c0_4 = arith.constant 0 : index
    %2 = vector.load %arg3[%c0_3, %c0_4] : memref<1x4xbf16, #tpu.memory_space<vmem>>, vector<1x4xbf16>
    %3 = arith.mulf %0, %1 : vector<4x256xbf16>
    %4 = tpu.concatenate %1, %3 in 1 : vector<4x256xbf16>, vector<4x256xbf16> -> vector<4x512xbf16>
    %cst = arith.constant dense<0.000000e+00> : vector<1x512xf32>
    %5 = tpu.matmul %2, %4, %cst {dimension_numbers = #tpu.dot_dimension_numbers<[1], [0], [0], [1], [0, 0, 1, 1], [], []>} : vector<1x4xbf16>, vector<4x512xbf16>, vector<1x512xf32> -> vector<1x512xf32>
    %6 = vector.extract_strided_slice %5 {offsets = [0, 0], sizes = [1, 256], strides = [1, 1]} : vector<1x512xf32> to vector<1x256xf32>
    %7 = vector.extract_strided_slice %5 {offsets = [0, 256], sizes = [1, 256], strides = [1, 1]} : vector<1x512xf32> to vector<1x256xf32>
    %cst_5 = arith.constant 9.99999968E-21 : f32
    %8 = vector.broadcast %cst_5 : f32 to vector<1x256xf32>
    %9 = arith.addf %6, %8 : vector<1x256xf32>
    %10 = tpu.reciprocal %9 {approx = true} : vector<1x256xf32> -> vector<1x256xf32>
    %11 = arith.mulf %7, %10 : vector<1x256xf32>
    %c0_6 = arith.constant 0 : index
    %c0_7 = arith.constant 0 : index
    %12 = vector.load %arg4[%c0_6, %c0_7] : memref<1x1xf32, #tpu.memory_space<vmem>>, vector<1x1xf32>
    %13 = vector.broadcast %12 : vector<1x1xf32> to vector<1x256xf32>
    %14 = arith.addf %11, %13 : vector<1x256xf32>
    %c0_8 = arith.constant 0 : index
    %c0_9 = arith.constant 0 : index
    %15 = vector.load %arg6[%c0_8, %c0_9] : memref<1x256xf32, #tpu.memory_space<vmem>>, vector<1x256xf32>
    tpu.vector_store %arg6[%c0_8, %c0_9], %14 {strides = array<i32>} : memref<1x256xf32, #tpu.memory_space<vmem>>, vector<1x256xf32>,
    %c0_10 = arith.constant 0 : index
    %c0_11 = arith.constant 0 : index
    %16 = vector.load %arg5[%c0_10, %c0_11] : memref<1x1xf32, #tpu.memory_space<vmem>>, vector<1x1xf32>
    %17 = vector.broadcast %16 : vector<1x1xf32> to vector<1x256xf32>
    %18 = arith.mulf %6, %17 : vector<1x256xf32>
    %c0_12 = arith.constant 0 : index
    %c0_13 = arith.constant 0 : index
    %19 = vector.load %arg7[%c0_12, %c0_13] : memref<1x256xf32, #tpu.memory_space<vmem>>, vector<1x256xf32>
    tpu.vector_store %arg7[%c0_12, %c0_13], %18 {strides = array<i32>} : memref<1x256xf32, #tpu.memory_space<vmem>>, vector<1x256xf32>,
    return
  }
  func.func @transform_0(%arg0: i32) -> (i32, i32) {
    %c0_i32 = arith.constant 0 : i32
    %c0_i32_0 = arith.constant 0 : i32
    return %c0_i32, %arg0 : i32, i32
  }
  func.func @transform_1(%arg0: i32) -> (i32, i32) {
    %c0_i32 = arith.constant 0 : i32
    %c0_i32_0 = arith.constant 0 : i32
    return %c0_i32, %arg0 : i32, i32
  }
  func.func @transform_2(%arg0: i32) -> (i32, i32) {
    %c0_i32 = arith.constant 0 : i32
    %c0_i32_0 = arith.constant 0 : i32
    %c0_i32_1 = arith.constant 0 : i32
    return %c0_i32, %c0_i32_0 : i32, i32
  }
  func.func @transform_3(%arg0: i32) -> (i32, i32) {
    %c0_i32 = arith.constant 0 : i32
    %c0_i32_0 = arith.constant 0 : i32
    %c0_i32_1 = arith.constant 0 : i32
    return %c0_i32, %c0_i32_0 : i32, i32
  }
  func.func @transform_4(%arg0: i32) -> (i32, i32) {
    %c0_i32 = arith.constant 0 : i32
    %c0_i32_0 = arith.constant 0 : i32
    %c0_i32_1 = arith.constant 0 : i32
    return %c0_i32, %c0_i32_0 : i32, i32
  }
  func.func @transform_5(%arg0: i32) -> (i32, i32) {
    %c0_i32 = arith.constant 0 : i32
    %c0_i32_0 = arith.constant 0 : i32
    return %c0_i32, %arg0 : i32, i32
  }
  func.func @transform_6(%arg0: i32) -> (i32, i32) {
    %c0_i32 = arith.constant 0 : i32
    %c0_i32_0 = arith.constant 0 : i32
    return %c0_i32, %arg0 : i32, i32
  }
}

</mosaic_0001>

<llo_original>
// kernel: nconv_cnn_forward.11
$region0: #{nconv_cnn_forward.11}
  #allocation0 [shape = 'u32[]', space=smem, size = 0x4, offset = 0x4, fixed_abs, tag = 'smem constant byte address 0x4 - core index']
  #allocation1 [shape = 'u32[72,128]{1,0:T(1,128)}', space=vmem, size = 0x9000, scoped, tag = 'internal scratch']
  %s0 = inlined_call_operand.vmem [shape: bf16[25,512], index: 0, kind: input, shape index: {}]
  %s1 = inlined_call_operand.vmem [shape: bf16[25,512], index: 1, kind: input, shape index: {}]
  %s2 = inlined_call_operand.vmem [shape: bf16[4,25], index: 2, kind: input, shape index: {}]
  %s3 = inlined_call_operand.vmem [shape: f32[4,1], index: 3, kind: input, shape index: {}]
  %s4 = inlined_call_operand.vmem [shape: f32[4,1], index: 4, kind: input, shape index: {}]
  %s5 = inlined_call_operand.vmem [shape: f32[4,512], index: 5, kind: output, shape index: {0}]
  %s6 = inlined_call_operand.vmem [shape: f32[4,512], index: 6, kind: output, shape index: {1}]
  %7 = xla_tuple %s5, %s6
  %s8 = sld [smem:[#allocation0]]
  $region137: #{nconv_cnn_forward.11} parent=0
    _
  %s10 = ssub.s32 1, %s8
  %s11 = scalar_select 0, %s10, %s8
  $region1: #{nconv_cnn_forward.11} parent=0
    #allocation2 [shape = 'u8[32768]{0}', space=vmem, size = 0x8000, scoped, tag = 'input window, operand 0']
    #allocation3 [shape = 'u8[32768]{0}', space=vmem, size = 0x8000, scoped, tag = 'input window, operand 1']
    loop: start=0, step=1, limit=4
    $region2: #{nconv_cnn_forward.11} parent=1 // loop_pre_header
      _
    $region3: #{nconv_cnn_forward.11} parent=1 // loop_header
      %s13 = sphi 0, %s17
      %p14 = scmp.ge.s32.totalorder %s13, 4
      %s23 = sphi 0, %s25
      %s26 = sphi 0, %s23
      %s27 = sphi 0, %s26
      %s43 = sphi 0, %s27
      %s49 = sphi 0, %s51
      %s52 = sphi 0, %s49
      %s53 = sphi 0, %s52
      %s69 = sphi 0, %s53
      %s73 = sphi 0, %s73
      %s75 = sphi 0, %s73
      %s76 = sphi 0, %s75
      %s90 = sphi 0, %s76
      %s94 = sphi 0, %s94
      %s96 = sphi 0, %s94
      %s97 = sphi 0, %s96
      %s111 = sphi 0, %s97
      %s115 = sphi 0, %s115
      %s117 = sphi 0, %s115
      %s118 = sphi 0, %s117
      %s132 = sphi 0, %s118
      %s138 = sphi 0, %s140
      %s141 = sphi 0, %s138
      %s142 = sphi 0, %s141
      %s158 = sphi 0, %s142
      %s164 = sphi 0, %s166
      %s167 = sphi 0, %s164
      %s168 = sphi 0, %s167
      %s184 = sphi 0, %s168
    $region4: #{nconv_cnn_forward.11} parent=1 // loop_header_branch
      %16 = sbr.rel (%p14) target = $region8
    $region5: #{nconv_cnn_forward.11} parent=1 // loop_body
      %s18 = ssub.s32 %s13, 1
      %s19 = ssub.s32 %s13, 2
      %s20 = sadd.s32 %s13, 1
      %s21 = ssub.s32 %s13, %s20
      %p22 = scmp.eq.s32.totalorder %s21, 0
      %s24 = sadd.s32 %s23, 1
      %s25 = scalar_select %p22, %s23, %s24
      %p28 = pneg %p22
      %p29 = scmp.eq.s32.totalorder %s13, 1
      %p30 = por %p28, %p29
      %p31 = scmp.ne.s32.totalorder %s23, %s26
      %p32 = scmp.eq.s32.totalorder %s13, 0
      %p33 = por %p31, %p32
      %p34 = scmp.ne.s32.totalorder %s23, %s26
      %p35 = scmp.eq.s32.totalorder %s18, 1
      %p36 = por %p34, %p35
      %p37 = scmp.ne.s32.totalorder %s26, %s27
      %p38 = scmp.eq.s32.totalorder %s18, 0
      %p39 = por %p37, %p38
      %p40 = scmp.ne.s32.totalorder %s26, %s27
      %p41 = scmp.eq.s32.totalorder %s19, 1
      %p42 = por %p40, %p41
      %p44 = scmp.ne.s32.totalorder %s27, %s43
      %p45 = scmp.eq.s32.totalorder %s19, 0
      %p46 = por %p44, %p45
      %s47 = ssub.s32 %s13, %s20
      %p48 = scmp.eq.s32.totalorder %s47, 0
      %s50 = sadd.s32 %s49, 1
      %s51 = scalar_select %p48, %s49, %s50
      %p54 = pneg %p48
      %p55 = scmp.eq.s32.totalorder %s13, 1
      %p56 = por %p54, %p55
      %p57 = scmp.ne.s32.totalorder %s49, %s52
      %p58 = scmp.eq.s32.totalorder %s13, 0
      %p59 = por %p57, %p58
      %p60 = scmp.ne.s32.totalorder %s49, %s52
      %p61 = scmp.eq.s32.totalorder %s18, 1
      %p62 = por %p60, %p61
      %p63 = scmp.ne.s32.totalorder %s52, %s53
      %p64 = scmp.eq.s32.totalorder %s18, 0
      %p65 = por %p63, %p64
      %p66 = scmp.ne.s32.totalorder %s52, %s53
      %p67 = scmp.eq.s32.totalorder %s19, 1
      %p68 = por %p66, %p67
      %p70 = scmp.ne.s32.totalorder %s53, %s69
      %p71 = scmp.eq.s32.totalorder %s19, 0
      %p72 = por %p70, %p71
      %s74 = sadd.s32 %s73, 1
      %p77 = scmp.eq.s32.totalorder %s13, 1
      %p78 = scmp.ne.s32.totalorder %s73, %s75
      %p79 = scmp.eq.s32.totalorder %s13, 0
      %p80 = por %p78, %p79
      %p81 = scmp.ne.s32.totalorder %s73, %s75
      %p82 = scmp.eq.s32.totalorder %s18, 1
      %p83 = por %p81, %p82
      %p84 = scmp.ne.s32.totalorder %s75, %s76
      %p85 = scmp.eq.s32.totalorder %s18, 0
      %p86 = por %p84, %p85
      %p87 = scmp.ne.s32.totalorder %s75, %s76
      %p88 = scmp.eq.s32.totalorder %s19, 1
      %p89 = por %p87, %p88
      %p91 = scmp.ne.s32.totalorder %s76, %s90
      %p92 = scmp.eq.s32.totalorder %s19, 0
      %p93 = por %p91, %p92
      %s95 = sadd.s32 %s94, 1
      %p98 = scmp.eq.s32.totalorder %s13, 1
      %p99 = scmp.ne.s32.totalorder %s94, %s96
      %p100 = scmp.eq.s32.totalorder %s13, 0
      %p101 = por %p99, %p100
      %p102 = scmp.ne.s32.totalorder %s94, %s96
      %p103 = scmp.eq.s32.totalorder %s18, 1
      %p104 = por %p102, %p103
      %p105 = scmp.ne.s32.totalorder %s96, %s97
      %p106 = scmp.eq.s32.totalorder %s18, 0
      %p107 = por %p105, %p106
      %p108 = scmp.ne.s32.totalorder %s96, %s97
      %p109 = scmp.eq.s32.totalorder %s19, 1
      %p110 = por %p108, %p109
      %p112 = scmp.ne.s32.totalorder %s97, %s111
      %p113 = scmp.eq.s32.totalorder %s19, 0
      %p114 = por %p112, %p113
      %s116 = sadd.s32 %s115, 1
      %p119 = scmp.eq.s32.totalorder %s13, 1
      %p120 = scmp.ne.s32.totalorder %s115, %s117
      %p121 = scmp.eq.s32.totalorder %s13, 0
      %p122 = por %p120, %p121
      %p123 = scmp.ne.s32.totalorder %s115, %s117
      %p124 = scmp.eq.s32.totalorder %s18, 1
      %p125 = por %p123, %p124
      %p126 = scmp.ne.s32.totalorder %s117, %s118
      %p127 = scmp.eq.s32.totalorder %s18, 0
      %p128 = por %p126, %p127
      %p129 = scmp.ne.s32.totalorder %s117, %s118
      %p130 = scmp.eq.s32.totalorder %s19, 1
      %p131 = por %p129, %p130
      %p133 = scmp.ne.s32.totalorder %s118, %s132
      %p134 = scmp.eq.s32.totalorder %s19, 0
      %p135 = por %p133, %p134
      %s136 = ssub.s32 %s13, %s20
      %p137 = scmp.eq.s32.totalorder %s136, 0
      %s139 = sadd.s32 %s138, 1
      %s140 = scalar_select %p137, %s138, %s139
      %p143 = pneg %p137
      %p144 = scmp.eq.s32.totalorder %s13, 1
      %p145 = por %p143, %p144
      %p146 = scmp.ne.s32.totalorder %s138, %s141
      %p147 = scmp.eq.s32.totalorder %s13, 0
      %p148 = por %p146, %p147
      %p149 = scmp.ne.s32.totalorder %s138, %s141
      %p150 = scmp.eq.s32.totalorder %s18, 1
      %p151 = por %p149, %p150
      %p152 = scmp.ne.s32.totalorder %s141, %s142
      %p153 = scmp.eq.s32.totalorder %s18, 0
      %p154 = por %p152, %p153
      %p155 = scmp.ne.s32.totalorder %s141, %s142
      %p156 = scmp.eq.s32.totalorder %s19, 1
      %p157 = por %p155, %p156
      %p159 = scmp.ne.s32.totalorder %s142, %s158
      %p160 = scmp.eq.s32.totalorder %s19, 0
      %p161 = por %p159, %p160
      %s162 = ssub.s32 %s13, %s20
      %p163 = scmp.eq.s32.totalorder %s162, 0
      %s165 = sadd.s32 %s164, 1
      %s166 = scalar_select %p163, %s164, %s165
      %p169 = pneg %p163
      %p170 = scmp.eq.s32.totalorder %s13, 1
      %p171 = por %p169, %p170
      %p172 = scmp.ne.s32.totalorder %s164, %s167
      %p173 = scmp.eq.s32.totalorder %s13, 0
      %p174 = por %p172, %p173
      %p175 = scmp.ne.s32.totalorder %s164, %s167
      %p176 = scmp.eq.s32.totalorder %s18, 1
      %p177 = por %p175, %p176
      %p178 = scmp.ne.s32.totalorder %s167, %s168
      %p179 = scmp.eq.s32.totalorder %s18, 0
      %p180 = por %p178, %p179
      %p181 = scmp.ne.s32.totalorder %s167, %s168
      %p182 = scmp.eq.s32.totalorder %s19, 1
      %p183 = por %p181, %p182
      %p185 = scmp.ne.s32.totalorder %s168, %s184
      %p186 = scmp.eq.s32.totalorder %s19, 0
      %p187 = por %p185, %p186
      %p188 = scmp.le.s32.totalorder 1, %s13
      %p189 = scmp.lt.s32.totalorder %s13, 3
      %p190 = pnand %p188, %p189
      %p191 = pneg %p190
      // Predicated region
      $region9: #{nconv_cnn_forward.11} parent=5 // pred_check
        _
      $region10: #{nconv_cnn_forward.11} parent=5 // pred_check_branch
        %193 = sbr.rel (%p190) target = $region12
      $region11: #{nconv_cnn_forward.11} parent=5 // pred_region
        %s194 = ssub.s32 %s13, 1
        // Predicated region
        $region13: #{nconv_cnn_forward.11} parent=11 // pred_check
          %p195 = pneg %p86
        $region14: #{nconv_cnn_forward.11} parent=11 // pred_check_branch
          %197 = sbr.rel (%p195) target = $region16
        $region15: #{nconv_cnn_forward.11} parent=11 // pred_region
          _
        $region16: #{nconv_cnn_forward.11} parent=11 // pred_fallthru
          _
        // Predicated region
        $region17: #{nconv_cnn_forward.11} parent=11 // pred_check
          %p198 = pneg %p107
        $region18: #{nconv_cnn_forward.11} parent=11 // pred_check_branch
          %200 = sbr.rel (%p198) target = $region20
        $region19: #{nconv_cnn_forward.11} parent=11 // pred_region
          _
        $region20: #{nconv_cnn_forward.11} parent=11 // pred_fallthru
          _
        // Predicated region
        $region21: #{nconv_cnn_forward.11} parent=11 // pred_check
          %p201 = pneg %p128
        $region22: #{nconv_cnn_forward.11} parent=11 // pred_check_branch
          %203 = sbr.rel (%p201) target = $region24
        $region23: #{nconv_cnn_forward.11} parent=11 // pred_region
          _
        $region24: #{nconv_cnn_forward.11} parent=11 // pred_fallthru
          _
      $region12: #{nconv_cnn_forward.11} parent=5 // pred_fallthru
        _
      %p204 = scmp.lt.s32.totalorder %s13, 2
      // Predicated region
      $region25: #{nconv_cnn_forward.11} parent=5 // pred_check
        %p205 = pneg %p204
      $region26: #{nconv_cnn_forward.11} parent=5 // pred_check_branch
        %207 = sbr.rel (%p205) target = $region28
      $region27: #{nconv_cnn_forward.11} parent=5 // pred_region
        // Predicated region
        $region29: #{nconv_cnn_forward.11} parent=27 // pred_check
          %p208 = pneg %p33
        $region30: #{nconv_cnn_forward.11} parent=27 // pred_check_branch
          %210 = sbr.rel (%p208) target = $region32
        $region31: #{nconv_cnn_forward.11} parent=27 // pred_region
          %s211 = sand.u32 %s23, 1
          %s212 = sand.u32 %s23, 1
          %s213 = smul.addr %s212, 32
          %s214 = scalar_lea.vmem [#allocation2], %s213
          %s215 = smul.u32 2, %s13
          %s216 = smul.addr %s215, 4
          %s217 = scalar_lea.vmem %s0, %s216
          // Predicated region
          $region33: #{nconv_cnn_forward.11} parent=31 // pred_check
            _
          $region34: #{nconv_cnn_forward.11} parent=31 // pred_check_branch
            %219 = sbr.rel (0) target = $region36
          $region35: #{nconv_cnn_forward.11} parent=31 // pred_region
            // Predicated region
            $region37: #{nconv_cnn_forward.11} parent=35 // pred_check
              _
            $region38: #{nconv_cnn_forward.11} parent=35 // pred_check_branch
              %221 = sbr.rel (0) target = $region40
            $region39: #{nconv_cnn_forward.11} parent=35 // pred_region
              // Predicated region
              $region52: #{nconv_cnn_forward.11} parent=39 // pred_check
                _
              $region53: #{nconv_cnn_forward.11} parent=39 // pred_check_branch
                %243 = sbr.rel (0) target = $region55
              $region54: #{nconv_cnn_forward.11} parent=39 // pred_region
                loop: start=0, step=1, limit=1
                $region56: #{nconv_cnn_forward.11} parent=54 // loop_pre_header
                  _
                $region57: #{nconv_cnn_forward.11} parent=54 // loop_header
                  %s245 = sphi 0, %s249
                  %p246 = scmp.ge.s32.totalorder %s245, 1
                  %s250 = sphi %s217, %s217
                  %s251 = sphi %s214, %s214
                $region58: #{nconv_cnn_forward.11} parent=54 // loop_header_branch
                  %248 = sbr.rel (%p246) target = $region62
                $region59: #{nconv_cnn_forward.11} parent=54 // loop_body
                  %v252 = vld [vmem:[%s250] sm:$0xff]
                  %253 = vst [vmem:[%s251] sm:$0xff] %v252
                  %v254 = vld [vmem:[%s250 + $0x10] sm:$0xff]
                  %255 = vst [vmem:[%s251 + $0x8] sm:$0xff] %v254
                  %v256 = vld [vmem:[%s250 + $0x20] sm:$0xff]
                  %257 = vst [vmem:[%s251 + $0x10] sm:$0xff] %v256
                  %v258 = vld [vmem:[%s250 + $0x30] sm:$0xff]
                  %259 = vst [vmem:[%s251 + $0x18] sm:$0xff] %v258
                $region60: #{nconv_cnn_forward.11} parent=54 // loop_footer
                  %s249 = sadd.s32 1, %s245
                $region61: #{nconv_cnn_forward.11} parent=54 // loop_footer_branch
                  %244 = sbr.rel target = $region57
                $region62: #{nconv_cnn_forward.11} parent=54 // loop_exit
                  _
              $region55: #{nconv_cnn_forward.11} parent=39 // pred_fallthru
                _
              // Predicated region
              $region63: #{nconv_cnn_forward.11} parent=39 // pred_check
                _
              $region64: #{nconv_cnn_forward.11} parent=39 // pred_check_branch
                %261 = sbr.rel target = $region66
              $region65: #{nconv_cnn_forward.11} parent=39 // pred_region
                _
              $region66: #{nconv_cnn_forward.11} parent=39 // pred_fallthru
                _
            $region40: #{nconv_cnn_forward.11} parent=35 // pred_fallthru
              _
            // Predicated region
            $region41: #{nconv_cnn_forward.11} parent=35 // pred_check
              _
            $region42: #{nconv_cnn_forward.11} parent=35 // pred_check_branch
              %223 = sbr.rel target = $region44
            $region43: #{nconv_cnn_forward.11} parent=35 // pred_region
              %s225 = ssub.s32 256, 1
              loop: start=0, step=1, limit=1
              $region45: #{nconv_cnn_forward.11} parent=43 // loop_pre_header
                _
              $region46: #{nconv_cnn_forward.11} parent=43 // loop_header
                %s227 = sphi 0, %s231
                %p228 = scmp.ge.s32.totalorder %s227, 1
                %s232 = sphi %s217, %s217
                %s233 = sphi %s214, %s214
              $region47: #{nconv_cnn_forward.11} parent=43 // loop_header_branch
                %230 = sbr.rel (%p228) target = $region51
              $region48: #{nconv_cnn_forward.11} parent=43 // loop_body
                %v234 = vld [vmem:[%s232] sm:%s225]
                %235 = vst [vmem:[%s233] sm:%s225] %v234
                %v236 = vld [vmem:[%s232 + $0x10] sm:%s225]
                %237 = vst [vmem:[%s233 + $0x8] sm:%s225] %v236
                %v238 = vld [vmem:[%s232 + $0x20] sm:%s225]
                %239 = vst [vmem:[%s233 + $0x10] sm:%s225] %v238
                %v240 = vld [vmem:[%s232 + $0x30] sm:%s225]
                %241 = vst [vmem:[%s233 + $0x18] sm:%s225] %v240
              $region49: #{nconv_cnn_forward.11} parent=43 // loop_footer
                %s231 = sadd.s32 1, %s227
              $region50: #{nconv_cnn_forward.11} parent=43 // loop_footer_branch
                %226 = sbr.rel target = $region46
              $region51: #{nconv_cnn_forward.11} parent=43 // loop_exit
                _
            $region44: #{nconv_cnn_forward.11} parent=35 // pred_fallthru
              _
          $region36: #{nconv_cnn_forward.11} parent=31 // pred_fallthru
            _
          %262 = vnop
        $region32: #{nconv_cnn_forward.11} parent=27 // pred_fallthru
          _
        // Predicated region
        $region67: #{nconv_cnn_forward.11} parent=27 // pred_check
          %p263 = pneg %p59
        $region68: #{nconv_cnn_forward.11} parent=27 // pred_check_branch
          %265 = sbr.rel (%p263) target = $region70
        $region69: #{nconv_cnn_forward.11} parent=27 // pred_region
          %s266 = sand.u32 %s49, 1
          %s267 = sand.u32 %s49, 1
          %s268 = smul.addr %s267, 32
          %s269 = scalar_lea.vmem [#allocation3], %s268
          %s270 = smul.u32 2, %s13
          %s271 = smul.addr %s270, 4
          %s272 = scalar_lea.vmem %s1, %s271
          // Predicated region
          $region71: #{nconv_cnn_forward.11} parent=69 // pred_check
            _
          $region72: #{nconv_cnn_forward.11} parent=69 // pred_check_branch
            %274 = sbr.rel (0) target = $region74
          $region73: #{nconv_cnn_forward.11} parent=69 // pred_region
            // Predicated region
            $region75: #{nconv_cnn_forward.11} parent=73 // pred_check
              _
            $region76: #{nconv_cnn_forward.11} parent=73 // pred_check_branch
              %276 = sbr.rel (0) target = $region78
            $region77: #{nconv_cnn_forward.11} parent=73 // pred_region
              // Predicated region
              $region90: #{nconv_cnn_forward.11} parent=77 // pred_check
                _
              $region91: #{nconv_cnn_forward.11} parent=77 // pred_check_branch
                %298 = sbr.rel (0) target = $region93
              $region92: #{nconv_cnn_forward.11} parent=77 // pred_region
                loop: start=0, step=1, limit=1
                $region94: #{nconv_cnn_forward.11} parent=92 // loop_pre_header
                  _
                $region95: #{nconv_cnn_forward.11} parent=92 // loop_header
                  %s300 = sphi 0, %s304
                  %p301 = scmp.ge.s32.totalorder %s300, 1
                  %s305 = sphi %s272, %s272
                  %s306 = sphi %s269, %s269
                $region96: #{nconv_cnn_forward.11} parent=92 // loop_header_branch
                  %303 = sbr.rel (%p301) target = $region100
                $region97: #{nconv_cnn_forward.11} parent=92 // loop_body
                  %v307 = vld [vmem:[%s305] sm:$0xff]
                  %308 = vst [vmem:[%s306] sm:$0xff] %v307
                  %v309 = vld [vmem:[%s305 + $0x10] sm:$0xff]
                  %310 = vst [vmem:[%s306 + $0x8] sm:$0xff] %v309
                  %v311 = vld [vmem:[%s305 + $0x20] sm:$0xff]
                  %312 = vst [vmem:[%s306 + $0x10] sm:$0xff] %v311
                  %v313 = vld [vmem:[%s305 + $0x30] sm:$0xff]
                  %314 = vst [vmem:[%s306 + $0x18] sm:$0xff] %v313
                $region98: #{nconv_cnn_forward.11} parent=92 // loop_footer
                  %s304 = sadd.s32 1, %s300
                $region99: #{nconv_cnn_forward.11} parent=92 // loop_footer_branch
                  %299 = sbr.rel target = $region95
                $region100: #{nconv_cnn_forward.11} parent=92 // loop_exit
                  _
              $region93: #{nconv_cnn_forward.11} parent=77 // pred_fallthru
                _
              // Predicated region
              $region101: #{nconv_cnn_forward.11} parent=77 // pred_check
                _
              $region102: #{nconv_cnn_forward.11} parent=77 // pred_check_branch
                %316 = sbr.rel target = $region104
              $region103: #{nconv_cnn_forward.11} parent=77 // pred_region
                _
              $region104: #{nconv_cnn_forward.11} parent=77 // pred_fallthru
                _
            $region78: #{nconv_cnn_forward.11} parent=73 // pred_fallthru
              _
            // Predicated region
            $region79: #{nconv_cnn_forward.11} parent=73 // pred_check
              _
            $region80: #{nconv_cnn_forward.11} parent=73 // pred_check_branch
              %278 = sbr.rel target = $region82
            $region81: #{nconv_cnn_forward.11} parent=73 // pred_region
              %s280 = ssub.s32 256, 1
              loop: start=0, step=1, limit=1
              $region83: #{nconv_cnn_forward.11} parent=81 // loop_pre_header
                _
              $region84: #{nconv_cnn_forward.11} parent=81 // loop_header
                %s282 = sphi 0, %s286
                %p283 = scmp.ge.s32.totalorder %s282, 1
                %s287 = sphi %s272, %s272
                %s288 = sphi %s269, %s269
              $region85: #{nconv_cnn_forward.11} parent=81 // loop_header_branch
                %285 = sbr.rel (%p283) target = $region89
              $region86: #{nconv_cnn_forward.11} parent=81 // loop_body
                %v289 = vld [vmem:[%s287] sm:%s280]
                %290 = vst [vmem:[%s288] sm:%s280] %v289
                %v291 = vld [vmem:[%s287 + $0x10] sm:%s280]
                %292 = vst [vmem:[%s288 + $0x8] sm:%s280] %v291
                %v293 = vld [vmem:[%s287 + $0x20] sm:%s280]
                %294 = vst [vmem:[%s288 + $0x10] sm:%s280] %v293
                %v295 = vld [vmem:[%s287 + $0x30] sm:%s280]
                %296 = vst [vmem:[%s288 + $0x18] sm:%s280] %v295
              $region87: #{nconv_cnn_forward.11} parent=81 // loop_footer
                %s286 = sadd.s32 1, %s282
              $region88: #{nconv_cnn_forward.11} parent=81 // loop_footer_branch
                %281 = sbr.rel target = $region84
              $region89: #{nconv_cnn_forward.11} parent=81 // loop_exit
                _
            $region82: #{nconv_cnn_forward.11} parent=73 // pred_fallthru
              _
          $region74: #{nconv_cnn_forward.11} parent=69 // pred_fallthru
            _
          %317 = vnop
        $region70: #{nconv_cnn_forward.11} parent=27 // pred_fallthru
          _
      $region28: #{nconv_cnn_forward.11} parent=5 // pred_fallthru
        _
      %p318 = scmp.le.s32.totalorder 1, %s13
      %p319 = scmp.lt.s32.totalorder %s13, 3
      %p320 = pnand %p318, %p319
      %p321 = pneg %p320
      // Predicated region
      $region105: #{nconv_cnn_forward.11} parent=5 // pred_check
        _
      $region106: #{nconv_cnn_forward.11} parent=5 // pred_check_branch
        %323 = sbr.rel (%p320) target = $region108
      $region107: #{nconv_cnn_forward.11} parent=5 // pred_region
        %s324 = ssub.s32 %s13, 1
        %s325 = sand.u32 %s26, 1
        %s326 = sand.u32 %s26, 1
        %s327 = smul.addr %s326, 32
        %s328 = scalar_lea.vmem [#allocation2], %s327
        // Predicated region
        $region109: #{nconv_cnn_forward.11} parent=107 // pred_check
          %p329 = pneg %p39
        $region110: #{nconv_cnn_forward.11} parent=107 // pred_check_branch
          %331 = sbr.rel (%p329) target = $region112
        $region111: #{nconv_cnn_forward.11} parent=107 // pred_region
          _
        $region112: #{nconv_cnn_forward.11} parent=107 // pred_fallthru
          _
        %s332 = sand.u32 %s52, 1
        %s333 = sand.u32 %s52, 1
        %s334 = smul.addr %s333, 32
        %s335 = scalar_lea.vmem [#allocation3], %s334
        // Predicated region
        $region113: #{nconv_cnn_forward.11} parent=107 // pred_check
          %p336 = pneg %p65
        $region114: #{nconv_cnn_forward.11} parent=107 // pred_check_branch
          %338 = sbr.rel (%p336) target = $region116
        $region115: #{nconv_cnn_forward.11} parent=107 // pred_region
          _
        $region116: #{nconv_cnn_forward.11} parent=107 // pred_fallthru
          _
        %s339 = sand.u32 %s26, 1
        %s340 = sand.u32 %s26, 1
        %s341 = smul.addr %s340, 32
        %s342 = scalar_lea.vmem [#allocation2], %s341
        %p343 = pneg %p39
        %p344 = pneg %p36
        %s345 = sand.u32 %s52, 1
        %s346 = sand.u32 %s52, 1
        %s347 = smul.addr %s346, 32
        %s348 = scalar_lea.vmem [#allocation3], %s347
        %p349 = pneg %p65
        %p350 = pneg %p62
        %p351 = pneg %p86
        %p352 = pneg %p83
        %p353 = pneg %p107
        %p354 = pneg %p104
        %p355 = pneg %p128
        %p356 = pneg %p125
        %p357 = pneg %p154
        %p358 = pneg %p151
        %s359 = smul.u32 2, %s18
        %p360 = scmp.lt.s32.totalorder %s359, 3
        %s361 = scalar_select %p360, %s359, 3
        %s362 = smul.addr %s361, 4
        %s363 = scalar_lea.vmem %s5, %s362
        %p364 = pneg %p180
        %p365 = pneg %p177
        %s366 = smul.u32 2, %s18
        %p367 = scmp.lt.s32.totalorder %s366, 3
        %s368 = scalar_select %p367, %s366, 3
        %s369 = smul.addr %s368, 4
        %s370 = scalar_lea.vmem %s6, %s369
        %s371 = smul.u32 2, %s18
        %s372 = smul.u32 2, %s18
        %s373 = smul.u32 2, %s18
        %p374 = scmp.lt.s32.totalorder %s373, 3
        %s375 = scalar_select %p374, %s373, 3
        %s376 = smul.addr %s375, 4
        %s377 = scalar_lea.vmem %s5, %s376
        %s378 = smul.u32 2, %s18
        %s379 = smul.u32 2, %s18
        %p380 = scmp.lt.s32.totalorder %s379, 3
        %s381 = scalar_select %p380, %s379, 3
        %s382 = smul.addr %s381, 4
        %s383 = scalar_lea.vmem %s6, %s382
        %s384 = smul.u32 2, %s18
        %v386 = vld [vmem:[%s328] sm:$0xff]
        %v387 = vld [vmem:[%s328 + $0x8] sm:$0xff]
        %v388 = vld [vmem:[%s328 + $0x10] sm:$0xff]
        %v389 = vld [vmem:[%s328 + $0x18] sm:$0x11]
        %v390 = vld [vmem:[%s335] sm:$0xff]
        %v391 = vld [vmem:[%s335 + $0x8] sm:$0xff]
        %v392 = vld [vmem:[%s335 + $0x10] sm:$0xff]
        %v393 = vld [vmem:[%s335 + $0x18] sm:$0x11]
        %v394 = vld [vmem:[%s2] sm:$0x3]
        %v395 = vunpack.c.l.bf16 %v386
        %v396 = vunpack.c.h.bf16 %v386
        %v397 = vunpack.c.l.bf16 %v387
        %v398 = vunpack.c.h.bf16 %v387
        %v399 = vunpack.c.l.bf16 %v388
        %v400 = vunpack.c.h.bf16 %v388
        %v401 = vunpack.c.l.bf16 %v389
        %v402 = vunpack.c.h.bf16 %v389
        %v403 = vunpack.c.l.bf16 %v390
        %v404 = vunpack.c.h.bf16 %v390
        %v405 = vunpack.c.l.bf16 %v391
        %v406 = vunpack.c.h.bf16 %v391
        %v407 = vunpack.c.l.bf16 %v392
        %v408 = vunpack.c.h.bf16 %v392
        %v409 = vunpack.c.l.bf16 %v393
        %v410 = vunpack.c.h.bf16 %v393
        %v411 = vmul.f32 %v395, %v403
        %v412 = vmul.f32 %v396, %v404
        %v413 = vmul.f32 %v397, %v405
        %v414 = vmul.f32 %v398, %v406
        %v415 = vmul.f32 %v399, %v407
        %v416 = vmul.f32 %v400, %v408
        %v417 = vmul.f32 %v401, %v409
        %v418 = vmul.f32 %v402, %v410
        %v419 = vpack.c.bf16 %v412, %v411
        %v420 = vpack.c.bf16 %v414, %v413
        %v421 = vpack.c.bf16 %v416, %v415
        %v422 = vpack.c.bf16 %v418, %v417
        %v427 = vunpack.c.l.b16 %v390
        %v428 = vunpack.c.h.b16 %v390
        %v429 = vunpack.c.l.b16 %v391
        %v430 = vunpack.c.h.b16 %v391
        %v431 = vunpack.c.l.b16 %v392
        %v432 = vunpack.c.h.b16 %v392
        %v433 = vunpack.c.l.b16 %v393
        %v434 = vunpack.c.h.b16 %v393
        %v435 = vpack.c.b16 %v429, %v427
        %v436 = vpack.c.b16 %v430, %v428
        %v437 = vpack.c.b16 %v433, %v431
        %v438 = vpack.c.b16 %v434, %v432
        %v445 = vunpack.c.l.b16 %v419
        %v446 = vunpack.c.h.b16 %v419
        %v447 = vunpack.c.l.b16 %v420
        %v448 = vunpack.c.h.b16 %v420
        %v449 = vunpack.c.l.b16 %v421
        %v450 = vunpack.c.h.b16 %v421
        %v451 = vunpack.c.l.b16 %v422
        %v452 = vunpack.c.h.b16 %v422
        %v453 = vpack.c.b16 %v447, %v445
        %v454 = vpack.c.b16 %v448, %v446
        %v455 = vpack.c.b16 %v451, %v449
        %v456 = vpack.c.b16 %v452, %v450
        %vm459 = vcmask 203776
        %v461 = vsel %vm459, %v394, 0
        %vm463 = vcmask 1043456
        %vm464 = vcmask 1044480
        %v465 = vsel %vm463, 4294967295, 65535
        %v466 = vsel %vm464, %v465, 0
        %v468 = vand.u32 %v437, %v466
        %v471 = vand.u32 %v438, %v466
        %v474 = vand.u32 %v455, %v466
        %v477 = vand.u32 %v456, %v466
        %479 = vmatpush.bf16.msra.mxu0 0
        %480 = vmatpush.bf16.msra.mxu0 0
        %481 = vmatpush.bf16.msra.mxu0 0
        %482 = vmatpush.bf16.msra.mxu0 0
        %483 = vmatpush.bf16.msra.mxu0 0
        %484 = vmatpush.bf16.msra.mxu0 0
        %485 = vmatpush.bf16.msra.mxu0 %v468
        %486 = vmatpush.bf16.msra.mxu0 %v435
        %487 = vmatmul.bf16.gmra.mxu0 %v461
        %v488 = vpop.f32.mrf.mxu0
        %v489 = vadd.f32 0.0, %v488
        %v490 = vpop.f32.mrf.mxu0
        %491 = vdwg.mxu0
        %492 = vmatpush.bf16.msra.mxu0 0
        %493 = vmatpush.bf16.msra.mxu0 0
        %494 = vmatpush.bf16.msra.mxu0 0
        %495 = vmatpush.bf16.msra.mxu0 0
        %496 = vmatpush.bf16.msra.mxu0 0
        %497 = vmatpush.bf16.msra.mxu0 0
        %498 = vmatpush.bf16.msra.mxu0 %v471
        %499 = vmatpush.bf16.msra.mxu0 %v436
        %500 = vmatmul.bf16.gmra.mxu0 %v461
        %v501 = vpop.f32.mrf.mxu0
        %v502 = vadd.f32 0.0, %v501
        %v503 = vpop.f32.mrf.mxu0
        %504 = vdwg.mxu0
        %505 = vmatpush.bf16.msra.mxu0 0
        %506 = vmatpush.bf16.msra.mxu0 0
        %507 = vmatpush.bf16.msra.mxu0 0
        %508 = vmatpush.bf16.msra.mxu0 0
        %509 = vmatpush.bf16.msra.mxu0 0
        %510 = vmatpush.bf16.msra.mxu0 0
        %511 = vmatpush.bf16.msra.mxu0 %v474
        %512 = vmatpush.bf16.msra.mxu0 %v453
        %513 = vmatmul.bf16.gmra.mxu0 %v461
        %v514 = vpop.f32.mrf.mxu0
        %v515 = vadd.f32 0.0, %v514
        %v516 = vpop.f32.mrf.mxu0
        %517 = vdwg.mxu0
        %518 = vmatpush.bf16.msra.mxu0 0
        %519 = vmatpush.bf16.msra.mxu0 0
        %520 = vmatpush.bf16.msra.mxu0 0
        %521 = vmatpush.bf16.msra.mxu0 0
        %522 = vmatpush.bf16.msra.mxu0 0
        %523 = vmatpush.bf16.msra.mxu0 0
        %524 = vmatpush.bf16.msra.mxu0 %v477
        %525 = vmatpush.bf16.msra.mxu0 %v454
        %526 = vmatmul.bf16.gmra.mxu0 %v461
        %v527 = vpop.f32.mrf.mxu0
        %v528 = vadd.f32 0.0, %v527
        %v529 = vpop.f32.mrf.mxu0
        %530 = vdwg.mxu0
        %v531 = vadd.f32 %v489, 1e-20
        %v532 = vadd.f32 %v502, 1e-20
        %v533 = vrcp.pop %v531
        %v534 = vrcp.pop %v532
        %v535 = vmul.f32 %v515, %v533
        %v536 = vmul.f32 %v528, %v534
        %v537 = vld [vmem:[%s3] sm:$0xf]
        %539 = vset.pattern.permute.xlu0 0
        %540 = vperm.xlu0 %539, %v537
        %v541 = vpop.permute.xlu0 %540
        %v543 = vadd.f32 %v535, %v541
        %v544 = vadd.f32 %v536, %v541
        %v547 = vrot.slane %v544, 4
        %v548 = vsel %vm463, %v543, %v547
        %550 = vst [vmem:[%s377] sm:$0xff] %v548
        %v551 = vld [vmem:[%s4] sm:$0xf]
        %553 = vset.pattern.permute.xlu0 0
        %554 = vperm.xlu0 %553, %v551
        %v555 = vpop.permute.xlu0 %554
        %v557 = vmul.f32 %v489, %v555
        %v558 = vmul.f32 %v502, %v555
        %v561 = vrot.slane %v558, 4
        %v562 = vsel %vm463, %v557, %v561
        %564 = vst [vmem:[%s383] sm:$0xff] %v562
        %s565 = smul.u32 2, %s18
        %p566 = scmp.lt.s32.totalorder %s565, 3
        %s567 = scalar_select %p566, %s565, 3
        %s568 = smul.addr %s567, 4
        %s569 = scalar_lea.vmem %s5, %s568
        %s570 = smul.u32 2, %s18
        %p571 = scmp.lt.s32.totalorder %s570, 3
        %s572 = scalar_select %p571, %s570, 3
        %s573 = smul.addr %s572, 4
        %s574 = scalar_lea.vmem %s6, %s573
        // Predicated region
        $region117: #{nconv_cnn_forward.11} parent=107 // pred_check
          %p575 = pneg %p151
        $region118: #{nconv_cnn_forward.11} parent=107 // pred_check_branch
          %577 = sbr.rel (%p575) target = $region120
        $region119: #{nconv_cnn_forward.11} parent=107 // pred_region
          %s578 = smul.u32 2, %s18
        $region120: #{nconv_cnn_forward.11} parent=107 // pred_fallthru
          _
        // Predicated region
        $region121: #{nconv_cnn_forward.11} parent=107 // pred_check
          %p579 = pneg %p177
        $region122: #{nconv_cnn_forward.11} parent=107 // pred_check_branch
          %581 = sbr.rel (%p579) target = $region124
        $region123: #{nconv_cnn_forward.11} parent=107 // pred_region
          %s582 = smul.u32 2, %s18
        $region124: #{nconv_cnn_forward.11} parent=107 // pred_fallthru
          _
      $region108: #{nconv_cnn_forward.11} parent=5 // pred_fallthru
        _
      %p583 = scmp.le.s32.totalorder 2, %s13
      // Predicated region
      $region125: #{nconv_cnn_forward.11} parent=5 // pred_check
        %p584 = pneg %p583
      $region126: #{nconv_cnn_forward.11} parent=5 // pred_check_branch
        %586 = sbr.rel (%p584) target = $region128
      $region127: #{nconv_cnn_forward.11} parent=5 // pred_region
        %s587 = ssub.s32 %s13, 2
        // Predicated region
        $region129: #{nconv_cnn_forward.11} parent=127 // pred_check
          %p588 = pneg %p157
        $region130: #{nconv_cnn_forward.11} parent=127 // pred_check_branch
          %590 = sbr.rel (%p588) target = $region132
        $region131: #{nconv_cnn_forward.11} parent=127 // pred_region
          %s591 = smul.u32 2, %s19
          %p592 = scmp.lt.s32.totalorder %s591, 3
          %s593 = scalar_select %p592, %s591, 3
          %s594 = smul.addr %s593, 4
          %s595 = scalar_lea.vmem %s5, %s594
        $region132: #{nconv_cnn_forward.11} parent=127 // pred_fallthru
          _
        // Predicated region
        $region133: #{nconv_cnn_forward.11} parent=127 // pred_check
          %p596 = pneg %p183
        $region134: #{nconv_cnn_forward.11} parent=127 // pred_check_branch
          %598 = sbr.rel (%p596) target = $region136
        $region135: #{nconv_cnn_forward.11} parent=127 // pred_region
          %s599 = smul.u32 2, %s19
          %p600 = scmp.lt.s32.totalorder %s599, 3
          %s601 = scalar_select %p600, %s599, 3
          %s602 = smul.addr %s601, 4
          %s603 = scalar_lea.vmem %s6, %s602
        $region136: #{nconv_cnn_forward.11} parent=127 // pred_fallthru
          _
      $region128: #{nconv_cnn_forward.11} parent=5 // pred_fallthru
        _
    $region6: #{nconv_cnn_forward.11} parent=1 // loop_footer
      %s17 = sadd.s32 1, %s13
    $region7: #{nconv_cnn_forward.11} parent=1 // loop_footer_branch
      %12 = sbr.rel target = $region3
    $region8: #{nconv_cnn_forward.11} parent=1 // loop_exit
      _

// kernel: nconv_cnn_forward.12
$region0: #{nconv_cnn_forward.12}
  #allocation0 [shape = 'u32[]', space=smem, size = 0x4, offset = 0x4, fixed_abs, tag = 'smem constant byte address 0x4 - core index']
  #allocation1 [shape = 'u32[72,128]{1,0:T(1,128)}', space=vmem, size = 0x9000, scoped, tag = 'internal scratch']
  %s0 = inlined_call_operand.vmem [shape: bf16[100,512], index: 0, kind: input, shape index: {}]
  %s1 = inlined_call_operand.vmem [shape: bf16[100,512], index: 1, kind: input, shape index: {}]
  %s2 = inlined_call_operand.vmem [shape: bf16[4,100], index: 2, kind: input, shape index: {}]
  %s3 = inlined_call_operand.vmem [shape: f32[4,1], index: 3, kind: input, shape index: {}]
  %s4 = inlined_call_operand.vmem [shape: f32[4,1], index: 4, kind: input, shape index: {}]
  %s5 = inlined_call_operand.vmem [shape: f32[4,512], index: 5, kind: output, shape index: {0}]
  %s6 = inlined_call_operand.vmem [shape: f32[4,512], index: 6, kind: output, shape index: {1}]
  %7 = xla_tuple %s5, %s6
  %s8 = sld [smem:[#allocation0]]
  $region137: #{nconv_cnn_forward.12} parent=0
    _
  %s10 = ssub.s32 1, %s8
  %s11 = scalar_select 0, %s10, %s8
  $region1: #{nconv_cnn_forward.12} parent=0
    #allocation2 [shape = 'u8[106496]{0}', space=vmem, size = 0x1a000, scoped, tag = 'input window, operand 0']
    #allocation3 [shape = 'u8[106496]{0}', space=vmem, size = 0x1a000, scoped, tag = 'input window, operand 1']
    loop: start=0, step=1, limit=4
    $region2: #{nconv_cnn_forward.12} parent=1 // loop_pre_header
      _
    $region3: #{nconv_cnn_forward.12} parent=1 // loop_header
      %s13 = sphi 0, %s17
      %p14 = scmp.ge.s32.totalorder %s13, 4
      %s23 = sphi 0, %s25
      %s26 = sphi 0, %s23
      %s27 = sphi 0, %s26
      %s43 = sphi 0, %s27
      %s49 = sphi 0, %s51
      %s52 = sphi 0, %s49
      %s53 = sphi 0, %s52
      %s69 = sphi 0, %s53
      %s73 = sphi 0, %s73
      %s75 = sphi 0, %s73
      %s76 = sphi 0, %s75
      %s90 = sphi 0, %s76
      %s94 = sphi 0, %s94
      %s96 = sphi 0, %s94
      %s97 = sphi 0, %s96
      %s111 = sphi 0, %s97
      %s115 = sphi 0, %s115
      %s117 = sphi 0, %s115
      %s118 = sphi 0, %s117
      %s132 = sphi 0, %s118
      %s138 = sphi 0, %s140
      %s141 = sphi 0, %s138
      %s142 = sphi 0, %s141
      %s158 = sphi 0, %s142
      %s164 = sphi 0, %s166
      %s167 = sphi 0, %s164
      %s168 = sphi 0, %s167
      %s184 = sphi 0, %s168
    $region4: #{nconv_cnn_forward.12} parent=1 // loop_header_branch
      %16 = sbr.rel (%p14) target = $region8
    $region5: #{nconv_cnn_forward.12} parent=1 // loop_body
      %s18 = ssub.s32 %s13, 1
      %s19 = ssub.s32 %s13, 2
      %s20 = sadd.s32 %s13, 1
      %s21 = ssub.s32 %s13, %s20
      %p22 = scmp.eq.s32.totalorder %s21, 0
      %s24 = sadd.s32 %s23, 1
      %s25 = scalar_select %p22, %s23, %s24
      %p28 = pneg %p22
      %p29 = scmp.eq.s32.totalorder %s13, 1
      %p30 = por %p28, %p29
      %p31 = scmp.ne.s32.totalorder %s23, %s26
      %p32 = scmp.eq.s32.totalorder %s13, 0
      %p33 = por %p31, %p32
      %p34 = scmp.ne.s32.totalorder %s23, %s26
      %p35 = scmp.eq.s32.totalorder %s18, 1
      %p36 = por %p34, %p35
      %p37 = scmp.ne.s32.totalorder %s26, %s27
      %p38 = scmp.eq.s32.totalorder %s18, 0
      %p39 = por %p37, %p38
      %p40 = scmp.ne.s32.totalorder %s26, %s27
      %p41 = scmp.eq.s32.totalorder %s19, 1
      %p42 = por %p40, %p41
      %p44 = scmp.ne.s32.totalorder %s27, %s43
      %p45 = scmp.eq.s32.totalorder %s19, 0
      %p46 = por %p44, %p45
      %s47 = ssub.s32 %s13, %s20
      %p48 = scmp.eq.s32.totalorder %s47, 0
      %s50 = sadd.s32 %s49, 1
      %s51 = scalar_select %p48, %s49, %s50
      %p54 = pneg %p48
      %p55 = scmp.eq.s32.totalorder %s13, 1
      %p56 = por %p54, %p55
      %p57 = scmp.ne.s32.totalorder %s49, %s52
      %p58 = scmp.eq.s32.totalorder %s13, 0
      %p59 = por %p57, %p58
      %p60 = scmp.ne.s32.totalorder %s49, %s52
      %p61 = scmp.eq.s32.totalorder %s18, 1
      %p62 = por %p60, %p61
      %p63 = scmp.ne.s32.totalorder %s52, %s53
      %p64 = scmp.eq.s32.totalorder %s18, 0
      %p65 = por %p63, %p64
      %p66 = scmp.ne.s32.totalorder %s52, %s53
      %p67 = scmp.eq.s32.totalorder %s19, 1
      %p68 = por %p66, %p67
      %p70 = scmp.ne.s32.totalorder %s53, %s69
      %p71 = scmp.eq.s32.totalorder %s19, 0
      %p72 = por %p70, %p71
      %s74 = sadd.s32 %s73, 1
      %p77 = scmp.eq.s32.totalorder %s13, 1
      %p78 = scmp.ne.s32.totalorder %s73, %s75
      %p79 = scmp.eq.s32.totalorder %s13, 0
      %p80 = por %p78, %p79
      %p81 = scmp.ne.s32.totalorder %s73, %s75
      %p82 = scmp.eq.s32.totalorder %s18, 1
      %p83 = por %p81, %p82
      %p84 = scmp.ne.s32.totalorder %s75, %s76
      %p85 = scmp.eq.s32.totalorder %s18, 0
      %p86 = por %p84, %p85
      %p87 = scmp.ne.s32.totalorder %s75, %s76
      %p88 = scmp.eq.s32.totalorder %s19, 1
      %p89 = por %p87, %p88
      %p91 = scmp.ne.s32.totalorder %s76, %s90
      %p92 = scmp.eq.s32.totalorder %s19, 0
      %p93 = por %p91, %p92
      %s95 = sadd.s32 %s94, 1
      %p98 = scmp.eq.s32.totalorder %s13, 1
      %p99 = scmp.ne.s32.totalorder %s94, %s96
      %p100 = scmp.eq.s32.totalorder %s13, 0
      %p101 = por %p99, %p100
      %p102 = scmp.ne.s32.totalorder %s94, %s96
      %p103 = scmp.eq.s32.totalorder %s18, 1
      %p104 = por %p102, %p103
      %p105 = scmp.ne.s32.totalorder %s96, %s97
      %p106 = scmp.eq.s32.totalorder %s18, 0
      %p107 = por %p105, %p106
      %p108 = scmp.ne.s32.totalorder %s96, %s97
      %p109 = scmp.eq.s32.totalorder %s19, 1
      %p110 = por %p108, %p109
      %p112 = scmp.ne.s32.totalorder %s97, %s111
      %p113 = scmp.eq.s32.totalorder %s19, 0
      %p114 = por %p112, %p113
      %s116 = sadd.s32 %s115, 1
      %p119 = scmp.eq.s32.totalorder %s13, 1
      %p120 = scmp.ne.s32.totalorder %s115, %s117
      %p121 = scmp.eq.s32.totalorder %s13, 0
      %p122 = por %p120, %p121
      %p123 = scmp.ne.s32.totalorder %s115, %s117
      %p124 = scmp.eq.s32.totalorder %s18, 1
      %p125 = por %p123, %p124
      %p126 = scmp.ne.s32.totalorder %s117, %s118
      %p127 = scmp.eq.s32.totalorder %s18, 0
      %p128 = por %p126, %p127
      %p129 = scmp.ne.s32.totalorder %s117, %s118
      %p130 = scmp.eq.s32.totalorder %s19, 1
      %p131 = por %p129, %p130
      %p133 = scmp.ne.s32.totalorder %s118, %s132
      %p134 = scmp.eq.s32.totalorder %s19, 0
      %p135 = por %p133, %p134
      %s136 = ssub.s32 %s13, %s20
      %p137 = scmp.eq.s32.totalorder %s136, 0
      %s139 = sadd.s32 %s138, 1
      %s140 = scalar_select %p137, %s138, %s139
      %p143 = pneg %p137
      %p144 = scmp.eq.s32.totalorder %s13, 1
      %p145 = por %p143, %p144
      %p146 = scmp.ne.s32.totalorder %s138, %s141
      %p147 = scmp.eq.s32.totalorder %s13, 0
      %p148 = por %p146, %p147
      %p149 = scmp.ne.s32.totalorder %s138, %s141
      %p150 = scmp.eq.s32.totalorder %s18, 1
      %p151 = por %p149, %p150
      %p152 = scmp.ne.s32.totalorder %s141, %s142
      %p153 = scmp.eq.s32.totalorder %s18, 0
      %p154 = por %p152, %p153
      %p155 = scmp.ne.s32.totalorder %s141, %s142
      %p156 = scmp.eq.s32.totalorder %s19, 1
      %p157 = por %p155, %p156
      %p159 = scmp.ne.s32.totalorder %s142, %s158
      %p160 = scmp.eq.s32.totalorder %s19, 0
      %p161 = por %p159, %p160
      %s162 = ssub.s32 %s13, %s20
      %p163 = scmp.eq.s32.totalorder %s162, 0
      %s165 = sadd.s32 %s164, 1
      %s166 = scalar_select %p163, %s164, %s165
      %p169 = pneg %p163
      %p170 = scmp.eq.s32.totalorder %s13, 1
      %p171 = por %p169, %p170
      %p172 = scmp.ne.s32.totalorder %s164, %s167
      %p173 = scmp.eq.s32.totalorder %s13, 0
      %p174 = por %p172, %p173
      %p175 = scmp.ne.s32.totalorder %s164, %s167
      %p176 = scmp.eq.s32.totalorder %s18, 1
      %p177 = por %p175, %p176
      %p178 = scmp.ne.s32.totalorder %s167, %s168
      %p179 = scmp.eq.s32.totalorder %s18, 0
      %p180 = por %p178, %p179
      %p181 = scmp.ne.s32.totalorder %s167, %s168
      %p182 = scmp.eq.s32.totalorder %s19, 1
      %p183 = por %p181, %p182
      %p185 = scmp.ne.s32.totalorder %s168, %s184
      %p186 = scmp.eq.s32.totalorder %s19, 0
      %p187 = por %p185, %p186
      %p188 = scmp.le.s32.totalorder 1, %s13
      %p189 = scmp.lt.s32.totalorder %s13, 3
      %p190 = pnand %p188, %p189
      %p191 = pneg %p190
      // Predicated region
      $region9: #{nconv_cnn_forward.12} parent=5 // pred_check
        _
      $region10: #{nconv_cnn_forward.12} parent=5 // pred_check_branch
        %193 = sbr.rel (%p190) target = $region12
      $region11: #{nconv_cnn_forward.12} parent=5 // pred_region
        %s194 = ssub.s32 %s13, 1
        // Predicated region
        $region13: #{nconv_cnn_forward.12} parent=11 // pred_check
          %p195 = pneg %p86
        $region14: #{nconv_cnn_forward.12} parent=11 // pred_check_branch
          %197 = sbr.rel (%p195) target = $region16
        $region15: #{nconv_cnn_forward.12} parent=11 // pred_region
          _
        $region16: #{nconv_cnn_forward.12} parent=11 // pred_fallthru
          _
        // Predicated region
        $region17: #{nconv_cnn_forward.12} parent=11 // pred_check
          %p198 = pneg %p107
        $region18: #{nconv_cnn_forward.12} parent=11 // pred_check_branch
          %200 = sbr.rel (%p198) target = $region20
        $region19: #{nconv_cnn_forward.12} parent=11 // pred_region
          _
        $region20: #{nconv_cnn_forward.12} parent=11 // pred_fallthru
          _
        // Predicated region
        $region21: #{nconv_cnn_forward.12} parent=11 // pred_check
          %p201 = pneg %p128
        $region22: #{nconv_cnn_forward.12} parent=11 // pred_check_branch
          %203 = sbr.rel (%p201) target = $region24
        $region23: #{nconv_cnn_forward.12} parent=11 // pred_region
          _
        $region24: #{nconv_cnn_forward.12} parent=11 // pred_fallthru
          _
      $region12: #{nconv_cnn_forward.12} parent=5 // pred_fallthru
        _
      %p204 = scmp.lt.s32.totalorder %s13, 2
      // Predicated region
      $region25: #{nconv_cnn_forward.12} parent=5 // pred_check
        %p205 = pneg %p204
      $region26: #{nconv_cnn_forward.12} parent=5 // pred_check_branch
        %207 = sbr.rel (%p205) target = $region28
      $region27: #{nconv_cnn_forward.12} parent=5 // pred_region
        // Predicated region
        $region29: #{nconv_cnn_forward.12} parent=27 // pred_check
          %p208 = pneg %p33
        $region30: #{nconv_cnn_forward.12} parent=27 // pred_check_branch
          %210 = sbr.rel (%p208) target = $region32
        $region31: #{nconv_cnn_forward.12} parent=27 // pred_region
          %s211 = sand.u32 %s23, 1
          %s212 = sand.u32 %s23, 1
          %s213 = smul.addr %s212, 104
          %s214 = scalar_lea.vmem [#allocation2], %s213
          %s215 = smul.u32 2, %s13
          %s216 = smul.addr %s215, 4
          %s217 = scalar_lea.vmem %s0, %s216
          // Predicated region
          $region33: #{nconv_cnn_forward.12} parent=31 // pred_check
            _
          $region34: #{nconv_cnn_forward.12} parent=31 // pred_check_branch
            %219 = sbr.rel (0) target = $region36
          $region35: #{nconv_cnn_forward.12} parent=31 // pred_region
            // Predicated region
            $region37: #{nconv_cnn_forward.12} parent=35 // pred_check
              _
            $region38: #{nconv_cnn_forward.12} parent=35 // pred_check_branch
              %221 = sbr.rel (0) target = $region40
            $region39: #{nconv_cnn_forward.12} parent=35 // pred_region
              // Predicated region
              $region52: #{nconv_cnn_forward.12} parent=39 // pred_check
                _
              $region53: #{nconv_cnn_forward.12} parent=39 // pred_check_branch
                %261 = sbr.rel (0) target = $region55
              $region54: #{nconv_cnn_forward.12} parent=39 // pred_region
                loop: start=0, step=1, limit=1
                $region56: #{nconv_cnn_forward.12} parent=54 // loop_pre_header
                  _
                $region57: #{nconv_cnn_forward.12} parent=54 // loop_header
                  %s263 = sphi 0, %s267
                  %p264 = scmp.ge.s32.totalorder %s263, 1
                  %s268 = sphi %s217, %s217
                  %s269 = sphi %s214, %s214
                $region58: #{nconv_cnn_forward.12} parent=54 // loop_header_branch
                  %266 = sbr.rel (%p264) target = $region62
                $region59: #{nconv_cnn_forward.12} parent=54 // loop_body
                  %v270 = vld [vmem:[%s268] sm:$0xff]
                  %271 = vst [vmem:[%s269] sm:$0xff] %v270
                  %v272 = vld [vmem:[%s268 + $0x10] sm:$0xff]
                  %273 = vst [vmem:[%s269 + $0x8] sm:$0xff] %v272
                  %v274 = vld [vmem:[%s268 + $0x20] sm:$0xff]
                  %275 = vst [vmem:[%s269 + $0x10] sm:$0xff] %v274
                  %v276 = vld [vmem:[%s268 + $0x30] sm:$0xff]
                  %277 = vst [vmem:[%s269 + $0x18] sm:$0xff] %v276
                  %v278 = vld [vmem:[%s268 + $0x40] sm:$0xff]
                  %279 = vst [vmem:[%s269 + $0x20] sm:$0xff] %v278
                  %v280 = vld [vmem:[%s268 + $0x50] sm:$0xff]
                  %281 = vst [vmem:[%s269 + $0x28] sm:$0xff] %v280
                  %v282 = vld [vmem:[%s268 + $0x60] sm:$0xff]
                  %283 = vst [vmem:[%s269 + $0x30] sm:$0xff] %v282
                  %v284 = vld [vmem:[%s268 + $0x70] sm:$0xff]
                  %285 = vst [vmem:[%s269 + $0x38] sm:$0xff] %v284
                  %v286 = vld [vmem:[%s268 + $0x80] sm:$0xff]
                  %287 = vst [vmem:[%s269 + $0x40] sm:$0xff] %v286
                  %v288 = vld [vmem:[%s268 + $0x90] sm:$0xff]
                  %289 = vst [vmem:[%s269 + $0x48] sm:$0xff] %v288
                  %v290 = vld [vmem:[%s268 + $0xa0] sm:$0xff]
                  %291 = vst [vmem:[%s269 + $0x50] sm:$0xff] %v290
                  %v292 = vld [vmem:[%s268 + $0xb0] sm:$0xff]
                  %293 = vst [vmem:[%s269 + $0x58] sm:$0xff] %v292
                  %v294 = vld [vmem:[%s268 + $0xc0] sm:$0xff]
                  %295 = vst [vmem:[%s269 + $0x60] sm:$0xff] %v294
                $region60: #{nconv_cnn_forward.12} parent=54 // loop_footer
                  %s267 = sadd.s32 1, %s263
                $region61: #{nconv_cnn_forward.12} parent=54 // loop_footer_branch
                  %262 = sbr.rel target = $region57
                $region62: #{nconv_cnn_forward.12} parent=54 // loop_exit
                  _
              $region55: #{nconv_cnn_forward.12} parent=39 // pred_fallthru
                _
              // Predicated region
              $region63: #{nconv_cnn_forward.12} parent=39 // pred_check
                _
              $region64: #{nconv_cnn_forward.12} parent=39 // pred_check_branch
                %297 = sbr.rel target = $region66
              $region65: #{nconv_cnn_forward.12} parent=39 // pred_region
                _
              $region66: #{nconv_cnn_forward.12} parent=39 // pred_fallthru
                _
            $region40: #{nconv_cnn_forward.12} parent=35 // pred_fallthru
              _
            // Predicated region
            $region41: #{nconv_cnn_forward.12} parent=35 // pred_check
              _
            $region42: #{nconv_cnn_forward.12} parent=35 // pred_check_branch
              %223 = sbr.rel target = $region44
            $region43: #{nconv_cnn_forward.12} parent=35 // pred_region
              %s225 = ssub.s32 256, 1
              loop: start=0, step=1, limit=1
              $region45: #{nconv_cnn_forward.12} parent=43 // loop_pre_header
                _
              $region46: #{nconv_cnn_forward.12} parent=43 // loop_header
                %s227 = sphi 0, %s231
                %p228 = scmp.ge.s32.totalorder %s227, 1
                %s232 = sphi %s217, %s217
                %s233 = sphi %s214, %s214
              $region47: #{nconv_cnn_forward.12} parent=43 // loop_header_branch
                %230 = sbr.rel (%p228) target = $region51
              $region48: #{nconv_cnn_forward.12} parent=43 // loop_body
                %v234 = vld [vmem:[%s232] sm:%s225]
                %235 = vst [vmem:[%s233] sm:%s225] %v234
                %v236 = vld [vmem:[%s232 + $0x10] sm:%s225]
                %237 = vst [vmem:[%s233 + $0x8] sm:%s225] %v236
                %v238 = vld [vmem:[%s232 + $0x20] sm:%s225]
                %239 = vst [vmem:[%s233 + $0x10] sm:%s225] %v238
                %v240 = vld [vmem:[%s232 + $0x30] sm:%s225]
                %241 = vst [vmem:[%s233 + $0x18] sm:%s225] %v240
                %v242 = vld [vmem:[%s232 + $0x40] sm:%s225]
                %243 = vst [vmem:[%s233 + $0x20] sm:%s225] %v242
                %v244 = vld [vmem:[%s232 + $0x50] sm:%s225]
                %245 = vst [vmem:[%s233 + $0x28] sm:%s225] %v244
                %v246 = vld [vmem:[%s232 + $0x60] sm:%s225]
                %247 = vst [vmem:[%s233 + $0x30] sm:%s225] %v246
                %v248 = vld [vmem:[%s232 + $0x70] sm:%s225]
                %249 = vst [vmem:[%s233 + $0x38] sm:%s225] %v248
                %v250 = vld [vmem:[%s232 + $0x80] sm:%s225]
                %251 = vst [vmem:[%s233 + $0x40] sm:%s225] %v250
                %v252 = vld [vmem:[%s232 + $0x90] sm:%s225]
                %253 = vst [vmem:[%s233 + $0x48] sm:%s225] %v252
                %v254 = vld [vmem:[%s232 + $0xa0] sm:%s225]
                %255 = vst [vmem:[%s233 + $0x50] sm:%s225] %v254
                %v256 = vld [vmem:[%s232 + $0xb0] sm:%s225]
                %257 = vst [vmem:[%s233 + $0x58] sm:%s225] %v256
                %v258 = vld [vmem:[%s232 + $0xc0] sm:%s225]
                %259 = vst [vmem:[%s233 + $0x60] sm:%s225] %v258
              $region49: #{nconv_cnn_forward.12} parent=43 // loop_footer
                %s231 = sadd.s32 1, %s227
              $region50: #{nconv_cnn_forward.12} parent=43 // loop_footer_branch
                %226 = sbr.rel target = $region46
              $region51: #{nconv_cnn_forward.12} parent=43 // loop_exit
                _
            $region44: #{nconv_cnn_forward.12} parent=35 // pred_fallthru
              _
          $region36: #{nconv_cnn_forward.12} parent=31 // pred_fallthru
            _
          %298 = vnop
        $region32: #{nconv_cnn_forward.12} parent=27 // pred_fallthru
          _
        // Predicated region
        $region67: #{nconv_cnn_forward.12} parent=27 // pred_check
          %p299 = pneg %p59
        $region68: #{nconv_cnn_forward.12} parent=27 // pred_check_branch
          %301 = sbr.rel (%p299) target = $region70
        $region69: #{nconv_cnn_forward.12} parent=27 // pred_region
          %s302 = sand.u32 %s49, 1
          %s303 = sand.u32 %s49, 1
          %s304 = smul.addr %s303, 104
          %s305 = scalar_lea.vmem [#allocation3], %s304
          %s306 = smul.u32 2, %s13
          %s307 = smul.addr %s306, 4
          %s308 = scalar_lea.vmem %s1, %s307
          // Predicated region
          $region71: #{nconv_cnn_forward.12} parent=69 // pred_check
            _
          $region72: #{nconv_cnn_forward.12} parent=69 // pred_check_branch
            %310 = sbr.rel (0) target = $region74
          $region73: #{nconv_cnn_forward.12} parent=69 // pred_region
            // Predicated region
            $region75: #{nconv_cnn_forward.12} parent=73 // pred_check
              _
            $region76: #{nconv_cnn_forward.12} parent=73 // pred_check_branch
              %312 = sbr.rel (0) target = $region78
            $region77: #{nconv_cnn_forward.12} parent=73 // pred_region
              // Predicated region
              $region90: #{nconv_cnn_forward.12} parent=77 // pred_check
                _
              $region91: #{nconv_cnn_forward.12} parent=77 // pred_check_branch
                %352 = sbr.rel (0) target = $region93
              $region92: #{nconv_cnn_forward.12} parent=77 // pred_region
                loop: start=0, step=1, limit=1
                $region94: #{nconv_cnn_forward.12} parent=92 // loop_pre_header
                  _
                $region95: #{nconv_cnn_forward.12} parent=92 // loop_header
                  %s354 = sphi 0, %s358
                  %p355 = scmp.ge.s32.totalorder %s354, 1
                  %s359 = sphi %s308, %s308
                  %s360 = sphi %s305, %s305
                $region96: #{nconv_cnn_forward.12} parent=92 // loop_header_branch
                  %357 = sbr.rel (%p355) target = $region100
                $region97: #{nconv_cnn_forward.12} parent=92 // loop_body
                  %v361 = vld [vmem:[%s359] sm:$0xff]
                  %362 = vst [vmem:[%s360] sm:$0xff] %v361
                  %v363 = vld [vmem:[%s359 + $0x10] sm:$0xff]
                  %364 = vst [vmem:[%s360 + $0x8] sm:$0xff] %v363
                  %v365 = vld [vmem:[%s359 + $0x20] sm:$0xff]
                  %366 = vst [vmem:[%s360 + $0x10] sm:$0xff] %v365
                  %v367 = vld [vmem:[%s359 + $0x30] sm:$0xff]
                  %368 = vst [vmem:[%s360 + $0x18] sm:$0xff] %v367
                  %v369 = vld [vmem:[%s359 + $0x40] sm:$0xff]
                  %370 = vst [vmem:[%s360 + $0x20] sm:$0xff] %v369
                  %v371 = vld [vmem:[%s359 + $0x50] sm:$0xff]
                  %372 = vst [vmem:[%s360 + $0x28] sm:$0xff] %v371
                  %v373 = vld [vmem:[%s359 + $0x60] sm:$0xff]
                  %374 = vst [vmem:[%s360 + $0x30] sm:$0xff] %v373
                  %v375 = vld [vmem:[%s359 + $0x70] sm:$0xff]
                  %376 = vst [vmem:[%s360 + $0x38] sm:$0xff] %v375
                  %v377 = vld [vmem:[%s359 + $0x80] sm:$0xff]
                  %378 = vst [vmem:[%s360 + $0x40] sm:$0xff] %v377
                  %v379 = vld [vmem:[%s359 + $0x90] sm:$0xff]
                  %380 = vst [vmem:[%s360 + $0x48] sm:$0xff] %v379
                  %v381 = vld [vmem:[%s359 + $0xa0] sm:$0xff]
                  %382 = vst [vmem:[%s360 + $0x50] sm:$0xff] %v381
                  %v383 = vld [vmem:[%s359 + $0xb0] sm:$0xff]
                  %384 = vst [vmem:[%s360 + $0x58] sm:$0xff] %v383
                  %v385 = vld [vmem:[%s359 + $0xc0] sm:$0xff]
                  %386 = vst [vmem:[%s360 + $0x60] sm:$0xff] %v385
                $region98: #{nconv_cnn_forward.12} parent=92 // loop_footer
                  %s358 = sadd.s32 1, %s354
                $region99: #{nconv_cnn_forward.12} parent=92 // loop_footer_branch
                  %353 = sbr.rel target = $region95
                $region100: #{nconv_cnn_forward.12} parent=92 // loop_exit
                  _
              $region93: #{nconv_cnn_forward.12} parent=77 // pred_fallthru
                _
              // Predicated region
              $region101: #{nconv_cnn_forward.12} parent=77 // pred_check
                _
              $region102: #{nconv_cnn_forward.12} parent=77 // pred_check_branch
                %388 = sbr.rel target = $region104
              $region103: #{nconv_cnn_forward.12} parent=77 // pred_region
                _
              $region104: #{nconv_cnn_forward.12} parent=77 // pred_fallthru
                _
            $region78: #{nconv_cnn_forward.12} parent=73 // pred_fallthru
              _
            // Predicated region
            $region79: #{nconv_cnn_forward.12} parent=73 // pred_check
              _
            $region80: #{nconv_cnn_forward.12} parent=73 // pred_check_branch
              %314 = sbr.rel target = $region82
            $region81: #{nconv_cnn_forward.12} parent=73 // pred_region
              %s316 = ssub.s32 256, 1
              loop: start=0, step=1, limit=1
              $region83: #{nconv_cnn_forward.12} parent=81 // loop_pre_header
                _
              $region84: #{nconv_cnn_forward.12} parent=81 // loop_header
                %s318 = sphi 0, %s322
                %p319 = scmp.ge.s32.totalorder %s318, 1
                %s323 = sphi %s308, %s308
                %s324 = sphi %s305, %s305
              $region85: #{nconv_cnn_forward.12} parent=81 // loop_header_branch
                %321 = sbr.rel (%p319) target = $region89
              $region86: #{nconv_cnn_forward.12} parent=81 // loop_body
                %v325 = vld [vmem:[%s323] sm:%s316]
                %326 = vst [vmem:[%s324] sm:%s316] %v325
                %v327 = vld [vmem:[%s323 + $0x10] sm:%s316]
                %328 = vst [vmem:[%s324 + $0x8] sm:%s316] %v327
                %v329 = vld [vmem:[%s323 + $0x20] sm:%s316]
                %330 = vst [vmem:[%s324 + $0x10] sm:%s316] %v329
                %v331 = vld [vmem:[%s323 + $0x30] sm:%s316]
                %332 = vst [vmem:[%s324 + $0x18] sm:%s316] %v331
                %v333 = vld [vmem:[%s323 + $0x40] sm:%s316]
                %334 = vst [vmem:[%s324 + $0x20] sm:%s316] %v333
                %v335 = vld [vmem:[%s323 + $0x50] sm:%s316]
                %336 = vst [vmem:[%s324 + $0x28] sm:%s316] %v335
                %v337 = vld [vmem:[%s323 + $0x60] sm:%s316]
                %338 = vst [vmem:[%s324 + $0x30] sm:%s316] %v337
                %v339 = vld [vmem:[%s323 + $0x70] sm:%s316]
                %340 = vst [vmem:[%s324 + $0x38] sm:%s316] %v339
                %v341 = vld [vmem:[%s323 + $0x80] sm:%s316]
                %342 = vst [vmem:[%s324 + $0x40] sm:%s316] %v341
                %v343 = vld [vmem:[%s323 + $0x90] sm:%s316]
                %344 = vst [vmem:[%s324 + $0x48] sm:%s316] %v343
                %v345 = vld [vmem:[%s323 + $0xa0] sm:%s316]
                %346 = vst [vmem:[%s324 + $0x50] sm:%s316] %v345
                %v347 = vld [vmem:[%s323 + $0xb0] sm:%s316]
                %348 = vst [vmem:[%s324 + $0x58] sm:%s316] %v347
                %v349 = vld [vmem:[%s323 + $0xc0] sm:%s316]
                %350 = vst [vmem:[%s324 + $0x60] sm:%s316] %v349
              $region87: #{nconv_cnn_forward.12} parent=81 // loop_footer
                %s322 = sadd.s32 1, %s318
              $region88: #{nconv_cnn_forward.12} parent=81 // loop_footer_branch
                %317 = sbr.rel target = $region84
              $region89: #{nconv_cnn_forward.12} parent=81 // loop_exit
                _
            $region82: #{nconv_cnn_forward.12} parent=73 // pred_fallthru
              _
          $region74: #{nconv_cnn_forward.12} parent=69 // pred_fallthru
            _
          %389 = vnop
        $region70: #{nconv_cnn_forward.12} parent=27 // pred_fallthru
          _
      $region28: #{nconv_cnn_forward.12} parent=5 // pred_fallthru
        _
      %p390 = scmp.le.s32.totalorder 1, %s13
      %p391 = scmp.lt.s32.totalorder %s13, 3
      %p392 = pnand %p390, %p391
      %p393 = pneg %p392
      // Predicated region
      $region105: #{nconv_cnn_forward.12} parent=5 // pred_check
        _
      $region106: #{nconv_cnn_forward.12} parent=5 // pred_check_branch
        %395 = sbr.rel (%p392) target = $region108
      $region107: #{nconv_cnn_forward.12} parent=5 // pred_region
        %s396 = ssub.s32 %s13, 1
        %s397 = sand.u32 %s26, 1
        %s398 = sand.u32 %s26, 1
        %s399 = smul.addr %s398, 104
        %s400 = scalar_lea.vmem [#allocation2], %s399
        // Predicated region
        $region109: #{nconv_cnn_forward.12} parent=107 // pred_check
          %p401 = pneg %p39
        $region110: #{nconv_cnn_forward.12} parent=107 // pred_check_branch
          %403 = sbr.rel (%p401) target = $region112
        $region111: #{nconv_cnn_forward.12} parent=107 // pred_region
          _
        $region112: #{nconv_cnn_forward.12} parent=107 // pred_fallthru
          _
        %s404 = sand.u32 %s52, 1
        %s405 = sand.u32 %s52, 1
        %s406 = smul.addr %s405, 104
        %s407 = scalar_lea.vmem [#allocation3], %s406
        // Predicated region
        $region113: #{nconv_cnn_forward.12} parent=107 // pred_check
          %p408 = pneg %p65
        $region114: #{nconv_cnn_forward.12} parent=107 // pred_check_branch
          %410 = sbr.rel (%p408) target = $region116
        $region115: #{nconv_cnn_forward.12} parent=107 // pred_region
          _
        $region116: #{nconv_cnn_forward.12} parent=107 // pred_fallthru
          _
        %s411 = sand.u32 %s26, 1
        %s412 = sand.u32 %s26, 1
        %s413 = smul.addr %s412, 104
        %s414 = scalar_lea.vmem [#allocation2], %s413
        %p415 = pneg %p39
        %p416 = pneg %p36
        %s417 = sand.u32 %s52, 1
        %s418 = sand.u32 %s52, 1
        %s419 = smul.addr %s418, 104
        %s420 = scalar_lea.vmem [#allocation3], %s419
        %p421 = pneg %p65
        %p422 = pneg %p62
        %p423 = pneg %p86
        %p424 = pneg %p83
        %p425 = pneg %p107
        %p426 = pneg %p104
        %p427 = pneg %p128
        %p428 = pneg %p125
        %p429 = pneg %p154
        %p430 = pneg %p151
        %s431 = smul.u32 2, %s18
        %p432 = scmp.lt.s32.totalorder %s431, 3
        %s433 = scalar_select %p432, %s431, 3
        %s434 = smul.addr %s433, 4
        %s435 = scalar_lea.vmem %s5, %s434
        %p436 = pneg %p180
        %p437 = pneg %p177
        %s438 = smul.u32 2, %s18
        %p439 = scmp.lt.s32.totalorder %s438, 3
        %s440 = scalar_select %p439, %s438, 3
        %s441 = smul.addr %s440, 4
        %s442 = scalar_lea.vmem %s6, %s441
        %s443 = smul.u32 2, %s18
        %s444 = smul.u32 2, %s18
        %s445 = smul.u32 2, %s18
        %p446 = scmp.lt.s32.totalorder %s445, 3
        %s447 = scalar_select %p446, %s445, 3
        %s448 = smul.addr %s447, 4
        %s449 = scalar_lea.vmem %s5, %s448
        %s450 = smul.u32 2, %s18
        %s451 = smul.u32 2, %s18
        %p452 = scmp.lt.s32.totalorder %s451, 3
        %s453 = scalar_select %p452, %s451, 3
        %s454 = smul.addr %s453, 4
        %s455 = scalar_lea.vmem %s6, %s454
        %s456 = smul.u32 2, %s18
        %v458 = vld [vmem:[%s400] sm:$0xff]
        %v459 = vld [vmem:[%s400 + $0x8] sm:$0xff]
        %v460 = vld [vmem:[%s400 + $0x10] sm:$0xff]
        %v461 = vld [vmem:[%s400 + $0x18] sm:$0xff]
        %v462 = vld [vmem:[%s400 + $0x20] sm:$0xff]
        %v463 = vld [vmem:[%s400 + $0x28] sm:$0xff]
        %v464 = vld [vmem:[%s400 + $0x30] sm:$0xff]
        %v465 = vld [vmem:[%s400 + $0x38] sm:$0xff]
        %v466 = vld [vmem:[%s400 + $0x40] sm:$0xff]
        %v467 = vld [vmem:[%s400 + $0x48] sm:$0xff]
        %v468 = vld [vmem:[%s400 + $0x50] sm:$0xff]
        %v469 = vld [vmem:[%s400 + $0x58] sm:$0xff]
        %v470 = vld [vmem:[%s400 + $0x60] sm:$0x33]
        %v471 = vld [vmem:[%s407] sm:$0xff]
        %v472 = vld [vmem:[%s407 + $0x8] sm:$0xff]
        %v473 = vld [vmem:[%s407 + $0x10] sm:$0xff]
        %v474 = vld [vmem:[%s407 + $0x18] sm:$0xff]
        %v475 = vld [vmem:[%s407 + $0x20] sm:$0xff]
        %v476 = vld [vmem:[%s407 + $0x28] sm:$0xff]
        %v477 = vld [vmem:[%s407 + $0x30] sm:$0xff]
        %v478 = vld [vmem:[%s407 + $0x38] sm:$0xff]
        %v479 = vld [vmem:[%s407 + $0x40] sm:$0xff]
        %v480 = vld [vmem:[%s407 + $0x48] sm:$0xff]
        %v481 = vld [vmem:[%s407 + $0x50] sm:$0xff]
        %v482 = vld [vmem:[%s407 + $0x58] sm:$0xff]
        %v483 = vld [vmem:[%s407 + $0x60] sm:$0x33]
        %v484 = vld [vmem:[%s2] sm:$0x3]
        %v485 = vunpack.c.l.bf16 %v458
        %v486 = vunpack.c.h.bf16 %v458
        %v487 = vunpack.c.l.bf16 %v459
        %v488 = vunpack.c.h.bf16 %v459
        %v489 = vunpack.c.l.bf16 %v460
        %v490 = vunpack.c.h.bf16 %v460
        %v491 = vunpack.c.l.bf16 %v461
        %v492 = vunpack.c.h.bf16 %v461
        %v493 = vunpack.c.l.bf16 %v462
        %v494 = vunpack.c.h.bf16 %v462
        %v495 = vunpack.c.l.bf16 %v463
        %v496 = vunpack.c.h.bf16 %v463
        %v497 = vunpack.c.l.bf16 %v464
        %v498 = vunpack.c.h.bf16 %v464
        %v499 = vunpack.c.l.bf16 %v465
        %v500 = vunpack.c.h.bf16 %v465
        %v501 = vunpack.c.l.bf16 %v466
        %v502 = vunpack.c.h.bf16 %v466
        %v503 = vunpack.c.l.bf16 %v467
        %v504 = vunpack.c.h.bf16 %v467
        %v505 = vunpack.c.l.bf16 %v468
        %v506 = vunpack.c.h.bf16 %v468
        %v507 = vunpack.c.l.bf16 %v469
        %v508 = vunpack.c.h.bf16 %v469
        %v509 = vunpack.c.l.bf16 %v470
        %v510 = vunpack.c.h.bf16 %v470
        %v511 = vunpack.c.l.bf16 %v471
        %v512 = vunpack.c.h.bf16 %v471
        %v513 = vunpack.c.l.bf16 %v472
        %v514 = vunpack.c.h.bf16 %v472
        %v515 = vunpack.c.l.bf16 %v473
        %v516 = vunpack.c.h.bf16 %v473
        %v517 = vunpack.c.l.bf16 %v474
        %v518 = vunpack.c.h.bf16 %v474
        %v519 = vunpack.c.l.bf16 %v475
        %v520 = vunpack.c.h.bf16 %v475
        %v521 = vunpack.c.l.bf16 %v476
        %v522 = vunpack.c.h.bf16 %v476
        %v523 = vunpack.c.l.bf16 %v477
        %v524 = vunpack.c.h.bf16 %v477
        %v525 = vunpack.c.l.bf16 %v478
        %v526 = vunpack.c.h.bf16 %v478
        %v527 = vunpack.c.l.bf16 %v479
        %v528 = vunpack.c.h.bf16 %v479
        %v529 = vunpack.c.l.bf16 %v480
        %v530 = vunpack.c.h.bf16 %v480
        %v531 = vunpack.c.l.bf16 %v481
        %v532 = vunpack.c.h.bf16 %v481
        %v533 = vunpack.c.l.bf16 %v482
        %v534 = vunpack.c.h.bf16 %v482
        %v535 = vunpack.c.l.bf16 %v483
        %v536 = vunpack.c.h.bf16 %v483
        %v537 = vmul.f32 %v485, %v511
        %v538 = vmul.f32 %v486, %v512
        %v539 = vmul.f32 %v487, %v513
        %v540 = vmul.f32 %v488, %v514
        %v541 = vmul.f32 %v489, %v515
        %v542 = vmul.f32 %v490, %v516
        %v543 = vmul.f32 %v491, %v517
        %v544 = vmul.f32 %v492, %v518
        %v545 = vmul.f32 %v493, %v519
        %v546 = vmul.f32 %v494, %v520
        %v547 = vmul.f32 %v495, %v521
        %v548 = vmul.f32 %v496, %v522
        %v549 = vmul.f32 %v497, %v523
        %v550 = vmul.f32 %v498, %v524
        %v551 = vmul.f32 %v499, %v525
        %v552 = vmul.f32 %v500, %v526
        %v553 = vmul.f32 %v501, %v527
        %v554 = vmul.f32 %v502, %v528
        %v555 = vmul.f32 %v503, %v529
        %v556 = vmul.f32 %v504, %v530
        %v557 = vmul.f32 %v505, %v531
        %v558 = vmul.f32 %v506, %v532
        %v559 = vmul.f32 %v507, %v533
        %v560 = vmul.f32 %v508, %v534
        %v561 = vmul.f32 %v509, %v535
        %v562 = vmul.f32 %v510, %v536
        %v563 = vpack.c.bf16 %v538, %v537
        %v564 = vpack.c.bf16 %v540, %v539
        %v565 = vpack.c.bf16 %v542, %v541
        %v566 = vpack.c.bf16 %v544, %v543
        %v567 = vpack.c.bf16 %v546, %v545
        %v568 = vpack.c.bf16 %v548, %v547
        %v569 = vpack.c.bf16 %v550, %v549
        %v570 = vpack.c.bf16 %v552, %v551
        %v571 = vpack.c.bf16 %v554, %v553
        %v572 = vpack.c.bf16 %v556, %v555
        %v573 = vpack.c.bf16 %v558, %v557
        %v574 = vpack.c.bf16 %v560, %v559
        %v575 = vpack.c.bf16 %v562, %v561
        %v589 = vunpack.c.l.b16 %v471
        %v590 = vunpack.c.h.b16 %v471
        %v591 = vunpack.c.l.b16 %v472
        %v592 = vunpack.c.h.b16 %v472
        %v593 = vunpack.c.l.b16 %v473
        %v594 = vunpack.c.h.b16 %v473
        %v595 = vunpack.c.l.b16 %v474
        %v596 = vunpack.c.h.b16 %v474
        %v597 = vunpack.c.l.b16 %v475
        %v598 = vunpack.c.h.b16 %v475
        %v599 = vunpack.c.l.b16 %v476
        %v600 = vunpack.c.h.b16 %v476
        %v601 = vunpack.c.l.b16 %v477
        %v602 = vunpack.c.h.b16 %v477
        %v603 = vunpack.c.l.b16 %v478
        %v604 = vunpack.c.h.b16 %v478
        %v605 = vunpack.c.l.b16 %v479
        %v606 = vunpack.c.h.b16 %v479
        %v607 = vunpack.c.l.b16 %v480
        %v608 = vunpack.c.h.b16 %v480
        %v609 = vunpack.c.l.b16 %v481
        %v610 = vunpack.c.h.b16 %v481
        %v611 = vunpack.c.l.b16 %v482
        %v612 = vunpack.c.h.b16 %v482
        %v613 = vunpack.c.l.b16 %v483
        %v614 = vunpack.c.h.b16 %v483
        %v615 = vpack.c.b16 %v591, %v589
        %v616 = vpack.c.b16 %v592, %v590
        %v617 = vpack.c.b16 %v595, %v593
        %v618 = vpack.c.b16 %v596, %v594
        %v619 = vpack.c.b16 %v599, %v597
        %v620 = vpack.c.b16 %v600, %v598
        %v621 = vpack.c.b16 %v603, %v601
        %v622 = vpack.c.b16 %v604, %v602
        %v623 = vpack.c.b16 %v607, %v605
        %v624 = vpack.c.b16 %v608, %v606
        %v625 = vpack.c.b16 %v611, %v609
        %v626 = vpack.c.b16 %v612, %v610
        %v627 = vpack.c.b16 %v613, %v613
        %v628 = vpack.c.b16 %v614, %v614
        %v654 = vunpack.c.l.b16 %v563
        %v655 = vunpack.c.h.b16 %v563
        %v656 = vunpack.c.l.b16 %v564
        %v657 = vunpack.c.h.b16 %v564
        %v658 = vunpack.c.l.b16 %v565
        %v659 = vunpack.c.h.b16 %v565
        %v660 = vunpack.c.l.b16 %v566
        %v661 = vunpack.c.h.b16 %v566
        %v662 = vunpack.c.l.b16 %v567
        %v663 = vunpack.c.h.b16 %v567
        %v664 = vunpack.c.l.b16 %v568
        %v665 = vunpack.c.h.b16 %v568
        %v666 = vunpack.c.l.b16 %v569
        %v667 = vunpack.c.h.b16 %v569
        %v668 = vunpack.c.l.b16 %v570
        %v669 = vunpack.c.h.b16 %v570
        %v670 = vunpack.c.l.b16 %v571
        %v671 = vunpack.c.h.b16 %v571
        %v672 = vunpack.c.l.b16 %v572
        %v673 = vunpack.c.h.b16 %v572
        %v674 = vunpack.c.l.b16 %v573
        %v675 = vunpack.c.h.b16 %v573
        %v676 = vunpack.c.l.b16 %v574
        %v677 = vunpack.c.h.b16 %v574
        %v678 = vunpack.c.l.b16 %v575
        %v679 = vunpack.c.h.b16 %v575
        %v680 = vpack.c.b16 %v656, %v654
        %v681 = vpack.c.b16 %v657, %v655
        %v682 = vpack.c.b16 %v660, %v658
        %v683 = vpack.c.b16 %v661, %v659
        %v684 = vpack.c.b16 %v664, %v662
        %v685 = vpack.c.b16 %v665, %v663
        %v686 = vpack.c.b16 %v668, %v666
        %v687 = vpack.c.b16 %v669, %v667
        %v688 = vpack.c.b16 %v672, %v670
        %v689 = vpack.c.b16 %v673, %v671
        %v690 = vpack.c.b16 %v676, %v674
        %v691 = vpack.c.b16 %v677, %v675
        %v692 = vpack.c.b16 %v678, %v678
        %v693 = vpack.c.b16 %v679, %v679
        %vm706 = vcmask 818176
        %v708 = vsel %vm706, %v484, 0
        %vm710 = vcmask 1041408
        %v712 = vsel %vm710, %v627, 0
        %v715 = vsel %vm710, %v628, 0
        %v718 = vsel %vm710, %v692, 0
        %v721 = vsel %vm710, %v693, 0
        %723 = vmatpush.bf16.msra.mxu0 0
        %724 = vmatpush.bf16.msra.mxu0 %v712
        %725 = vmatpush.bf16.msra.mxu0 %v625
        %726 = vmatpush.bf16.msra.mxu0 %v623
        %727 = vmatpush.bf16.msra.mxu0 %v621
        %728 = vmatpush.bf16.msra.mxu0 %v619
        %729 = vmatpush.bf16.msra.mxu0 %v617
        %730 = vmatpush.bf16.msra.mxu0 %v615
        %731 = vmatmul.bf16.gmra.mxu0 %v708
        %v732 = vpop.f32.mrf.mxu0
        %v733 = vadd.f32 0.0, %v732
        %v734 = vpop.f32.mrf.mxu0
        %735 = vdwg.mxu0
        %736 = vmatpush.bf16.msra.mxu0 0
        %737 = vmatpush.bf16.msra.mxu0 %v715
        %738 = vmatpush.bf16.msra.mxu0 %v626
        %739 = vmatpush.bf16.msra.mxu0 %v624
        %740 = vmatpush.bf16.msra.mxu0 %v622
        %741 = vmatpush.bf16.msra.mxu0 %v620
        %742 = vmatpush.bf16.msra.mxu0 %v618
        %743 = vmatpush.bf16.msra.mxu0 %v616
        %744 = vmatmul.bf16.gmra.mxu0 %v708
        %v745 = vpop.f32.mrf.mxu0
        %v746 = vadd.f32 0.0, %v745
        %v747 = vpop.f32.mrf.mxu0
        %748 = vdwg.mxu0
        %749 = vmatpush.bf16.msra.mxu0 0
        %750 = vmatpush.bf16.msra.mxu0 %v718
        %751 = vmatpush.bf16.msra.mxu0 %v690
        %752 = vmatpush.bf16.msra.mxu0 %v688
        %753 = vmatpush.bf16.msra.mxu0 %v686
        %754 = vmatpush.bf16.msra.mxu0 %v684
        %755 = vmatpush.bf16.msra.mxu0 %v682
        %756 = vmatpush.bf16.msra.mxu0 %v680
        %757 = vmatmul.bf16.gmra.mxu0 %v708
        %v758 = vpop.f32.mrf.mxu0
        %v759 = vadd.f32 0.0, %v758
        %v760 = vpop.f32.mrf.mxu0
        %761 = vdwg.mxu0
        %762 = vmatpush.bf16.msra.mxu0 0
        %763 = vmatpush.bf16.msra.mxu0 %v721
        %764 = vmatpush.bf16.msra.mxu0 %v691
        %765 = vmatpush.bf16.msra.mxu0 %v689
        %766 = vmatpush.bf16.msra.mxu0 %v687
        %767 = vmatpush.bf16.msra.mxu0 %v685
        %768 = vmatpush.bf16.msra.mxu0 %v683
        %769 = vmatpush.bf16.msra.mxu0 %v681
        %770 = vmatmul.bf16.gmra.mxu0 %v708
        %v771 = vpop.f32.mrf.mxu0
        %v772 = vadd.f32 0.0, %v771
        %v773 = vpop.f32.mrf.mxu0
        %774 = vdwg.mxu0
        %v775 = vadd.f32 %v733, 1e-20
        %v776 = vadd.f32 %v746, 1e-20
        %v777 = vrcp.pop %v775
        %v778 = vrcp.pop %v776
        %v779 = vmul.f32 %v759, %v777
        %v780 = vmul.f32 %v772, %v778
        %v781 = vld [vmem:[%s3] sm:$0xf]
        %783 = vset.pattern.permute.xlu0 0
        %784 = vperm.xlu0 %783, %v781
        %v785 = vpop.permute.xlu0 %784
        %v787 = vadd.f32 %v779, %v785
        %v788 = vadd.f32 %v780, %v785
        %v791 = vrot.slane %v788, 4
        %vm792 = vcmask 1043456
        %v793 = vsel %vm792, %v787, %v791
        %795 = vst [vmem:[%s449] sm:$0xff] %v793
        %v796 = vld [vmem:[%s4] sm:$0xf]
        %798 = vset.pattern.permute.xlu0 0
        %799 = vperm.xlu0 %798, %v796
        %v800 = vpop.permute.xlu0 %799
        %v802 = vmul.f32 %v733, %v800
        %v803 = vmul.f32 %v746, %v800
        %v806 = vrot.slane %v803, 4
        %v807 = vsel %vm792, %v802, %v806
        %809 = vst [vmem:[%s455] sm:$0xff] %v807
        %s810 = smul.u32 2, %s18
        %p811 = scmp.lt.s32.totalorder %s810, 3
        %s812 = scalar_select %p811, %s810, 3
        %s813 = smul.addr %s812, 4
        %s814 = scalar_lea.vmem %s5, %s813
        %s815 = smul.u32 2, %s18
        %p816 = scmp.lt.s32.totalorder %s815, 3
        %s817 = scalar_select %p816, %s815, 3
        %s818 = smul.addr %s817, 4
        %s819 = scalar_lea.vmem %s6, %s818
        // Predicated region
        $region117: #{nconv_cnn_forward.12} parent=107 // pred_check
          %p820 = pneg %p151
        $region118: #{nconv_cnn_forward.12} parent=107 // pred_check_branch
          %822 = sbr.rel (%p820) target = $region120
        $region119: #{nconv_cnn_forward.12} parent=107 // pred_region
          %s823 = smul.u32 2, %s18
        $region120: #{nconv_cnn_forward.12} parent=107 // pred_fallthru
          _
        // Predicated region
        $region121: #{nconv_cnn_forward.12} parent=107 // pred_check
          %p824 = pneg %p177
        $region122: #{nconv_cnn_forward.12} parent=107 // pred_check_branch
          %826 = sbr.rel (%p824) target = $region124
        $region123: #{nconv_cnn_forward.12} parent=107 // pred_region
          %s827 = smul.u32 2, %s18
        $region124: #{nconv_cnn_forward.12} parent=107 // pred_fallthru
          _
      $region108: #{nconv_cnn_forward.12} parent=5 // pred_fallthru
        _
      %p828 = scmp.le.s32.totalorder 2, %s13
      // Predicated region
      $region125: #{nconv_cnn_forward.12} parent=5 // pred_check
        %p829 = pneg %p828
      $region126: #{nconv_cnn_forward.12} parent=5 // pred_check_branch
        %831 = sbr.rel (%p829) target = $region128
      $region127: #{nconv_cnn_forward.12} parent=5 // pred_region
        %s832 = ssub.s32 %s13, 2
        // Predicated region
        $region129: #{nconv_cnn_forward.12} parent=127 // pred_check
          %p833 = pneg %p157
        $region130: #{nconv_cnn_forward.12} parent=127 // pred_check_branch
          %835 = sbr.rel (%p833) target = $region132
        $region131: #{nconv_cnn_forward.12} parent=127 // pred_region
          %s836 = smul.u32 2, %s19
          %p837 = scmp.lt.s32.totalorder %s836, 3
          %s838 = scalar_select %p837, %s836, 3
          %s839 = smul.addr %s838, 4
          %s840 = scalar_lea.vmem %s5, %s839
        $region132: #{nconv_cnn_forward.12} parent=127 // pred_fallthru
          _
        // Predicated region
        $region133: #{nconv_cnn_forward.12} parent=127 // pred_check
          %p841 = pneg %p183
        $region134: #{nconv_cnn_forward.12} parent=127 // pred_check_branch
          %843 = sbr.rel (%p841) target = $region136
        $region135: #{nconv_cnn_forward.12} parent=127 // pred_region
          %s844 = smul.u32 2, %s19
          %p845 = scmp.lt.s32.totalorder %s844, 3
          %s846 = scalar_select %p845, %s844, 3
          %s847 = smul.addr %s846, 4
          %s848 = scalar_lea.vmem %s6, %s847
        $region136: #{nconv_cnn_forward.12} parent=127 // pred_fallthru
          _
      $region128: #{nconv_cnn_forward.12} parent=5 // pred_fallthru
        _
    $region6: #{nconv_cnn_forward.12} parent=1 // loop_footer
      %s17 = sadd.s32 1, %s13
    $region7: #{nconv_cnn_forward.12} parent=1 // loop_footer_branch
      %12 = sbr.rel target = $region3
    $region8: #{nconv_cnn_forward.12} parent=1 // loop_exit
      _

// kernel: nconv_cnn_forward.14
$region0: #{nconv_cnn_forward.14}
  #allocation0 [shape = 'u32[]', space=smem, size = 0x4, offset = 0x4, fixed_abs, tag = 'smem constant byte address 0x4 - core index']
  #allocation1 [shape = 'u32[72,128]{1,0:T(1,128)}', space=vmem, size = 0x9000, scoped, tag = 'internal scratch']
  %s0 = inlined_call_operand.vmem [shape: bf16[100,128], index: 0, kind: input, shape index: {}]
  %s1 = inlined_call_operand.vmem [shape: bf16[100,128], index: 1, kind: input, shape index: {}]
  %s2 = inlined_call_operand.vmem [shape: bf16[4,100], index: 2, kind: input, shape index: {}]
  %s3 = inlined_call_operand.vmem [shape: f32[4,1], index: 3, kind: input, shape index: {}]
  %s4 = inlined_call_operand.vmem [shape: f32[4,1], index: 4, kind: input, shape index: {}]
  %s5 = inlined_call_operand.vmem [shape: f32[4,128], index: 5, kind: output, shape index: {0}]
  %s6 = inlined_call_operand.vmem [shape: f32[4,128], index: 6, kind: output, shape index: {1}]
  %7 = xla_tuple %s5, %s6
  %s8 = sld [smem:[#allocation0]]
  $region38: #{nconv_cnn_forward.14} parent=0
    _
  %s10 = ssub.s32 1, %s8
  %s11 = scalar_select 0, %s10, %s8
  // Predicated region
  $region2: #{nconv_cnn_forward.14} parent=0 // pred_check
    _
  $region3: #{nconv_cnn_forward.14} parent=0 // pred_check_branch
    %13 = sbr.rel (0) target = $region5
  $region4: #{nconv_cnn_forward.14} parent=0 // pred_region
    _
  $region5: #{nconv_cnn_forward.14} parent=0 // pred_fallthru
    _
  // Predicated region
  $region6: #{nconv_cnn_forward.14} parent=0 // pred_check
    _
  $region7: #{nconv_cnn_forward.14} parent=0 // pred_check_branch
    %15 = sbr.rel (0) target = $region9
  $region8: #{nconv_cnn_forward.14} parent=0 // pred_region
    _
  $region9: #{nconv_cnn_forward.14} parent=0 // pred_fallthru
    _
  // Predicated region
  $region10: #{nconv_cnn_forward.14} parent=0 // pred_check
    _
  $region11: #{nconv_cnn_forward.14} parent=0 // pred_check_branch
    %17 = sbr.rel (0) target = $region13
  $region12: #{nconv_cnn_forward.14} parent=0 // pred_region
    _
  $region13: #{nconv_cnn_forward.14} parent=0 // pred_fallthru
    _
  // Predicated region
  $region14: #{nconv_cnn_forward.14} parent=0 // pred_check
    _
  $region15: #{nconv_cnn_forward.14} parent=0 // pred_check_branch
    %19 = sbr.rel (0) target = $region17
  $region16: #{nconv_cnn_forward.14} parent=0 // pred_region
    _
  $region17: #{nconv_cnn_forward.14} parent=0 // pred_fallthru
    _
  // Predicated region
  $region18: #{nconv_cnn_forward.14} parent=0 // pred_check
    _
  $region19: #{nconv_cnn_forward.14} parent=0 // pred_check_branch
    %21 = sbr.rel (0) target = $region21
  $region20: #{nconv_cnn_forward.14} parent=0 // pred_region
    _
  $region21: #{nconv_cnn_forward.14} parent=0 // pred_fallthru
    _
  %v23 = vld [vmem:[%s0] sm:$0xf]
  %v24 = vld [vmem:[%s0 + $0x4] sm:$0xf]
  %v25 = vld [vmem:[%s0 + $0x8] sm:$0xf]
  %v26 = vld [vmem:[%s0 + $0xc] sm:$0xf]
  %v27 = vld [vmem:[%s0 + $0x10] sm:$0xf]
  %v28 = vld [vmem:[%s0 + $0x14] sm:$0xf]
  %v29 = vld [vmem:[%s0 + $0x18] sm:$0xf]
  %v30 = vld [vmem:[%s0 + $0x1c] sm:$0xf]
  %v31 = vld [vmem:[%s0 + $0x20] sm:$0xf]
  %v32 = vld [vmem:[%s0 + $0x24] sm:$0xf]
  %v33 = vld [vmem:[%s0 + $0x28] sm:$0xf]
  %v34 = vld [vmem:[%s0 + $0x2c] sm:$0xf]
  %v35 = vld [vmem:[%s0 + $0x30] sm:$0x3]
  %v36 = vld [vmem:[%s1] sm:$0xf]
  %v37 = vld [vmem:[%s1 + $0x4] sm:$0xf]
  %v38 = vld [vmem:[%s1 + $0x8] sm:$0xf]
  %v39 = vld [vmem:[%s1 + $0xc] sm:$0xf]
  %v40 = vld [vmem:[%s1 + $0x10] sm:$0xf]
  %v41 = vld [vmem:[%s1 + $0x14] sm:$0xf]
  %v42 = vld [vmem:[%s1 + $0x18] sm:$0xf]
  %v43 = vld [vmem:[%s1 + $0x1c] sm:$0xf]
  %v44 = vld [vmem:[%s1 + $0x20] sm:$0xf]
  %v45 = vld [vmem:[%s1 + $0x24] sm:$0xf]
  %v46 = vld [vmem:[%s1 + $0x28] sm:$0xf]
  %v47 = vld [vmem:[%s1 + $0x2c] sm:$0xf]
  %v48 = vld [vmem:[%s1 + $0x30] sm:$0x3]
  %v49 = vld [vmem:[%s2] sm:$0x3]
  %v50 = vunpack.c.l.bf16 %v23
  %v51 = vunpack.c.l.bf16 %v24
  %v52 = vunpack.c.l.bf16 %v25
  %v53 = vunpack.c.l.bf16 %v26
  %v54 = vunpack.c.l.bf16 %v27
  %v55 = vunpack.c.l.bf16 %v28
  %v56 = vunpack.c.l.bf16 %v29
  %v57 = vunpack.c.l.bf16 %v30
  %v58 = vunpack.c.l.bf16 %v31
  %v59 = vunpack.c.l.bf16 %v32
  %v60 = vunpack.c.l.bf16 %v33
  %v61 = vunpack.c.l.bf16 %v34
  %v62 = vunpack.c.l.bf16 %v35
  %v63 = vunpack.c.l.bf16 %v36
  %v64 = vunpack.c.l.bf16 %v37
  %v65 = vunpack.c.l.bf16 %v38
  %v66 = vunpack.c.l.bf16 %v39
  %v67 = vunpack.c.l.bf16 %v40
  %v68 = vunpack.c.l.bf16 %v41
  %v69 = vunpack.c.l.bf16 %v42
  %v70 = vunpack.c.l.bf16 %v43
  %v71 = vunpack.c.l.bf16 %v44
  %v72 = vunpack.c.l.bf16 %v45
  %v73 = vunpack.c.l.bf16 %v46
  %v74 = vunpack.c.l.bf16 %v47
  %v75 = vunpack.c.l.bf16 %v48
  %v76 = vmul.f32 %v50, %v63
  %v77 = vmul.f32 %v51, %v64
  %v78 = vmul.f32 %v52, %v65
  %v79 = vmul.f32 %v53, %v66
  %v80 = vmul.f32 %v54, %v67
  %v81 = vmul.f32 %v55, %v68
  %v82 = vmul.f32 %v56, %v69
  %v83 = vmul.f32 %v57, %v70
  %v84 = vmul.f32 %v58, %v71
  %v85 = vmul.f32 %v59, %v72
  %v86 = vmul.f32 %v60, %v73
  %v87 = vmul.f32 %v61, %v74
  %v88 = vmul.f32 %v62, %v75
  %v89 = vpack.c.bf16 %v76, %v76
  %v90 = vpack.c.bf16 %v77, %v77
  %v91 = vpack.c.bf16 %v78, %v78
  %v92 = vpack.c.bf16 %v79, %v79
  %v93 = vpack.c.bf16 %v80, %v80
  %v94 = vpack.c.bf16 %v81, %v81
  %v95 = vpack.c.bf16 %v82, %v82
  %v96 = vpack.c.bf16 %v83, %v83
  %v97 = vpack.c.bf16 %v84, %v84
  %v98 = vpack.c.bf16 %v85, %v85
  %v99 = vpack.c.bf16 %v86, %v86
  %v100 = vpack.c.bf16 %v87, %v87
  %v101 = vpack.c.bf16 %v88, %v88
  %v115 = vunpack.c.l.b16 %v36
  %v116 = vunpack.c.l.b16 %v37
  %v117 = vunpack.c.l.b16 %v38
  %v118 = vunpack.c.l.b16 %v39
  %v119 = vunpack.c.l.b16 %v40
  %v120 = vunpack.c.l.b16 %v41
  %v121 = vunpack.c.l.b16 %v42
  %v122 = vunpack.c.l.b16 %v43
  %v123 = vunpack.c.l.b16 %v44
  %v124 = vunpack.c.l.b16 %v45
  %v125 = vunpack.c.l.b16 %v46
  %v126 = vunpack.c.l.b16 %v47
  %v127 = vunpack.c.l.b16 %v48
  %v128 = vpack.c.b16 %v116, %v115
  %v129 = vpack.c.b16 %v118, %v117
  %v130 = vpack.c.b16 %v120, %v119
  %v131 = vpack.c.b16 %v122, %v121
  %v132 = vpack.c.b16 %v124, %v123
  %v133 = vpack.c.b16 %v126, %v125
  %v134 = vpack.c.b16 %v127, %v127
  %v154 = vunpack.c.l.b16 %v89
  %v155 = vunpack.c.l.b16 %v90
  %v156 = vunpack.c.l.b16 %v91
  %v157 = vunpack.c.l.b16 %v92
  %v158 = vunpack.c.l.b16 %v93
  %v159 = vunpack.c.l.b16 %v94
  %v160 = vunpack.c.l.b16 %v95
  %v161 = vunpack.c.l.b16 %v96
  %v162 = vunpack.c.l.b16 %v97
  %v163 = vunpack.c.l.b16 %v98
  %v164 = vunpack.c.l.b16 %v99
  %v165 = vunpack.c.l.b16 %v100
  %v166 = vunpack.c.l.b16 %v101
  %v167 = vpack.c.b16 %v155, %v154
  %v168 = vpack.c.b16 %v157, %v156
  %v169 = vpack.c.b16 %v159, %v158
  %v170 = vpack.c.b16 %v161, %v160
  %v171 = vpack.c.b16 %v163, %v162
  %v172 = vpack.c.b16 %v165, %v164
  %v173 = vpack.c.b16 %v166, %v166
  %vm180 = vcmask 818176
  %v182 = vsel %vm180, %v49, 0
  %vm184 = vcmask 1041408
  %v186 = vsel %vm184, %v134, 0
  %v189 = vsel %vm184, %v173, 0
  %191 = vmatpush.bf16.msra.mxu0 0
  %192 = vmatpush.bf16.msra.mxu0 %v186
  %193 = vmatpush.bf16.msra.mxu0 %v133
  %194 = vmatpush.bf16.msra.mxu0 %v132
  %195 = vmatpush.bf16.msra.mxu0 %v131
  %196 = vmatpush.bf16.msra.mxu0 %v130
  %197 = vmatpush.bf16.msra.mxu0 %v129
  %198 = vmatpush.bf16.msra.mxu0 %v128
  %199 = vmatmul.bf16.gmra.mxu0 %v182
  %v200 = vpop.f32.mrf.mxu0
  %v201 = vadd.f32 0.0, %v200
  %v202 = vpop.f32.mrf.mxu0
  %203 = vdwg.mxu0
  %204 = vmatpush.bf16.msra.mxu0 0
  %205 = vmatpush.bf16.msra.mxu0 %v189
  %206 = vmatpush.bf16.msra.mxu0 %v172
  %207 = vmatpush.bf16.msra.mxu0 %v171
  %208 = vmatpush.bf16.msra.mxu0 %v170
  %209 = vmatpush.bf16.msra.mxu0 %v169
  %210 = vmatpush.bf16.msra.mxu0 %v168
  %211 = vmatpush.bf16.msra.mxu0 %v167
  %212 = vmatmul.bf16.gmra.mxu0 %v182
  %v213 = vpop.f32.mrf.mxu0
  %v214 = vadd.f32 0.0, %v213
  %v215 = vpop.f32.mrf.mxu0
  %216 = vdwg.mxu0
  %v217 = vadd.f32 %v201, 1e-20
  %v218 = vrcp.pop %v217
  %v219 = vmul.f32 %v214, %v218
  %v220 = vld [vmem:[%s3] sm:$0xf]
  %222 = vset.pattern.permute.xlu0 0
  %223 = vperm.xlu0 %222, %v220
  %v224 = vpop.permute.xlu0 %223
  %v226 = vadd.f32 %v219, %v224
  %227 = vst [vmem:[%s5] sm:$0xf] %v226
  %v228 = vld [vmem:[%s4] sm:$0xf]
  %230 = vset.pattern.permute.xlu0 0
  %231 = vperm.xlu0 %230, %v228
  %v232 = vpop.permute.xlu0 %231
  %v234 = vmul.f32 %v201, %v232
  %235 = vst [vmem:[%s6] sm:$0xf] %v234
  // Predicated region
  $region22: #{nconv_cnn_forward.14} parent=0 // pred_check
    _
  $region23: #{nconv_cnn_forward.14} parent=0 // pred_check_branch
    %237 = sbr.rel (0) target = $region25
  $region24: #{nconv_cnn_forward.14} parent=0 // pred_region
    _
  $region25: #{nconv_cnn_forward.14} parent=0 // pred_fallthru
    _
  // Predicated region
  $region26: #{nconv_cnn_forward.14} parent=0 // pred_check
    _
  $region27: #{nconv_cnn_forward.14} parent=0 // pred_check_branch
    %239 = sbr.rel (0) target = $region29
  $region28: #{nconv_cnn_forward.14} parent=0 // pred_region
    _
  $region29: #{nconv_cnn_forward.14} parent=0 // pred_fallthru
    _
  // Predicated region
  $region30: #{nconv_cnn_forward.14} parent=0 // pred_check
    _
  $region31: #{nconv_cnn_forward.14} parent=0 // pred_check_branch
    %241 = sbr.rel (0) target = $region33
  $region32: #{nconv_cnn_forward.14} parent=0 // pred_region
    _
  $region33: #{nconv_cnn_forward.14} parent=0 // pred_fallthru
    _
  // Predicated region
  $region34: #{nconv_cnn_forward.14} parent=0 // pred_check
    _
  $region35: #{nconv_cnn_forward.14} parent=0 // pred_check_branch
    %243 = sbr.rel (0) target = $region37
  $region36: #{nconv_cnn_forward.14} parent=0 // pred_region
    _
  $region37: #{nconv_cnn_forward.14} parent=0 // pred_fallthru
    _

// kernel: nconv_cnn_forward.16
$region0: #{nconv_cnn_forward.16}
  #allocation0 [shape = 'u32[]', space=smem, size = 0x4, offset = 0x4, fixed_abs, tag = 'smem constant byte address 0x4 - core index']
  #allocation1 [shape = 'u32[72,128]{1,0:T(1,128)}', space=vmem, size = 0x9000, scoped, tag = 'internal scratch']
  %s0 = inlined_call_operand.vmem [shape: bf16[100,32], index: 0, kind: input, shape index: {}]
  %s1 = inlined_call_operand.vmem [shape: bf16[100,32], index: 1, kind: input, shape index: {}]
  %s2 = inlined_call_operand.vmem [shape: bf16[4,100], index: 2, kind: input, shape index: {}]
  %s3 = inlined_call_operand.vmem [shape: f32[4,1], index: 3, kind: input, shape index: {}]
  %s4 = inlined_call_operand.vmem [shape: f32[4,1], index: 4, kind: input, shape index: {}]
  %s5 = inlined_call_operand.vmem [shape: f32[4,32], index: 5, kind: output, shape index: {0}]
  %s6 = inlined_call_operand.vmem [shape: f32[4,32], index: 6, kind: output, shape index: {1}]
  %7 = xla_tuple %s5, %s6
  %s8 = sld [smem:[#allocation0]]
  $region38: #{nconv_cnn_forward.16} parent=0
    _
  %s10 = ssub.s32 1, %s8
  %s11 = scalar_select 0, %s10, %s8
  // Predicated region
  $region2: #{nconv_cnn_forward.16} parent=0 // pred_check
    _
  $region3: #{nconv_cnn_forward.16} parent=0 // pred_check_branch
    %13 = sbr.rel (0) target = $region5
  $region4: #{nconv_cnn_forward.16} parent=0 // pred_region
    _
  $region5: #{nconv_cnn_forward.16} parent=0 // pred_fallthru
    _
  // Predicated region
  $region6: #{nconv_cnn_forward.16} parent=0 // pred_check
    _
  $region7: #{nconv_cnn_forward.16} parent=0 // pred_check_branch
    %15 = sbr.rel (0) target = $region9
  $region8: #{nconv_cnn_forward.16} parent=0 // pred_region
    _
  $region9: #{nconv_cnn_forward.16} parent=0 // pred_fallthru
    _
  // Predicated region
  $region10: #{nconv_cnn_forward.16} parent=0 // pred_check
    _
  $region11: #{nconv_cnn_forward.16} parent=0 // pred_check_branch
    %17 = sbr.rel (0) target = $region13
  $region12: #{nconv_cnn_forward.16} parent=0 // pred_region
    _
  $region13: #{nconv_cnn_forward.16} parent=0 // pred_fallthru
    _
  // Predicated region
  $region14: #{nconv_cnn_forward.16} parent=0 // pred_check
    _
  $region15: #{nconv_cnn_forward.16} parent=0 // pred_check_branch
    %19 = sbr.rel (0) target = $region17
  $region16: #{nconv_cnn_forward.16} parent=0 // pred_region
    _
  $region17: #{nconv_cnn_forward.16} parent=0 // pred_fallthru
    _
  // Predicated region
  $region18: #{nconv_cnn_forward.16} parent=0 // pred_check
    _
  $region19: #{nconv_cnn_forward.16} parent=0 // pred_check_branch
    %21 = sbr.rel (0) target = $region21
  $region20: #{nconv_cnn_forward.16} parent=0 // pred_region
    _
  $region21: #{nconv_cnn_forward.16} parent=0 // pred_fallthru
    _
  %v23 = vld [vmem:[%s0] sm:$0xf]
  %v24 = vld [vmem:[%s0 + $0x4] sm:$0xf]
  %v25 = vld [vmem:[%s0 + $0x8] sm:$0xf]
  %v26 = vld [vmem:[%s0 + $0xc] sm:$0xf]
  %v27 = vld [vmem:[%s0 + $0x10] sm:$0xf]
  %v28 = vld [vmem:[%s0 + $0x14] sm:$0xf]
  %v29 = vld [vmem:[%s0 + $0x18] sm:$0xf]
  %v30 = vld [vmem:[%s0 + $0x1c] sm:$0xf]
  %v31 = vld [vmem:[%s0 + $0x20] sm:$0xf]
  %v32 = vld [vmem:[%s0 + $0x24] sm:$0xf]
  %v33 = vld [vmem:[%s0 + $0x28] sm:$0xf]
  %v34 = vld [vmem:[%s0 + $0x2c] sm:$0xf]
  %v35 = vld [vmem:[%s0 + $0x30] sm:$0x3]
  %v36 = vld [vmem:[%s1] sm:$0xf]
  %v37 = vld [vmem:[%s1 + $0x4] sm:$0xf]
  %v38 = vld [vmem:[%s1 + $0x8] sm:$0xf]
  %v39 = vld [vmem:[%s1 + $0xc] sm:$0xf]
  %v40 = vld [vmem:[%s1 + $0x10] sm:$0xf]
  %v41 = vld [vmem:[%s1 + $0x14] sm:$0xf]
  %v42 = vld [vmem:[%s1 + $0x18] sm:$0xf]
  %v43 = vld [vmem:[%s1 + $0x1c] sm:$0xf]
  %v44 = vld [vmem:[%s1 + $0x20] sm:$0xf]
  %v45 = vld [vmem:[%s1 + $0x24] sm:$0xf]
  %v46 = vld [vmem:[%s1 + $0x28] sm:$0xf]
  %v47 = vld [vmem:[%s1 + $0x2c] sm:$0xf]
  %v48 = vld [vmem:[%s1 + $0x30] sm:$0x3]
  %v49 = vld [vmem:[%s2] sm:$0x3]
  %v50 = vunpack.c.l.bf16 %v23
  %v51 = vunpack.c.l.bf16 %v24
  %v52 = vunpack.c.l.bf16 %v25
  %v53 = vunpack.c.l.bf16 %v26
  %v54 = vunpack.c.l.bf16 %v27
  %v55 = vunpack.c.l.bf16 %v28
  %v56 = vunpack.c.l.bf16 %v29
  %v57 = vunpack.c.l.bf16 %v30
  %v58 = vunpack.c.l.bf16 %v31
  %v59 = vunpack.c.l.bf16 %v32
  %v60 = vunpack.c.l.bf16 %v33
  %v61 = vunpack.c.l.bf16 %v34
  %v62 = vunpack.c.l.bf16 %v35
  %v63 = vunpack.c.l.bf16 %v36
  %v64 = vunpack.c.l.bf16 %v37
  %v65 = vunpack.c.l.bf16 %v38
  %v66 = vunpack.c.l.bf16 %v39
  %v67 = vunpack.c.l.bf16 %v40
  %v68 = vunpack.c.l.bf16 %v41
  %v69 = vunpack.c.l.bf16 %v42
  %v70 = vunpack.c.l.bf16 %v43
  %v71 = vunpack.c.l.bf16 %v44
  %v72 = vunpack.c.l.bf16 %v45
  %v73 = vunpack.c.l.bf16 %v46
  %v74 = vunpack.c.l.bf16 %v47
  %v75 = vunpack.c.l.bf16 %v48
  %v76 = vmul.f32 %v50, %v63
  %v77 = vmul.f32 %v51, %v64
  %v78 = vmul.f32 %v52, %v65
  %v79 = vmul.f32 %v53, %v66
  %v80 = vmul.f32 %v54, %v67
  %v81 = vmul.f32 %v55, %v68
  %v82 = vmul.f32 %v56, %v69
  %v83 = vmul.f32 %v57, %v70
  %v84 = vmul.f32 %v58, %v71
  %v85 = vmul.f32 %v59, %v72
  %v86 = vmul.f32 %v60, %v73
  %v87 = vmul.f32 %v61, %v74
  %v88 = vmul.f32 %v62, %v75
  %v89 = vpack.c.bf16 %v77, %v76
  %v90 = vpack.c.bf16 %v79, %v78
  %v91 = vpack.c.bf16 %v81, %v80
  %v92 = vpack.c.bf16 %v83, %v82
  %v93 = vpack.c.bf16 %v85, %v84
  %v94 = vpack.c.bf16 %v87, %v86
  %v95 = vpack.c.bf16 %v88, %v88
  %v109 = vunpack.c.l.b16 %v36
  %v110 = vunpack.c.l.b16 %v37
  %v111 = vunpack.c.l.b16 %v38
  %v112 = vunpack.c.l.b16 %v39
  %v113 = vunpack.c.l.b16 %v40
  %v114 = vunpack.c.l.b16 %v41
  %v115 = vunpack.c.l.b16 %v42
  %v116 = vunpack.c.l.b16 %v43
  %v117 = vunpack.c.l.b16 %v44
  %v118 = vunpack.c.l.b16 %v45
  %v119 = vunpack.c.l.b16 %v46
  %v120 = vunpack.c.l.b16 %v47
  %v121 = vunpack.c.l.b16 %v48
  %v122 = vpack.c.b16 %v110, %v109
  %v123 = vpack.c.b16 %v112, %v111
  %v124 = vpack.c.b16 %v114, %v113
  %v125 = vpack.c.b16 %v116, %v115
  %v126 = vpack.c.b16 %v118, %v117
  %v127 = vpack.c.b16 %v120, %v119
  %v128 = vpack.c.b16 %v121, %v121
  %vm135 = vcmask 818176
  %v137 = vsel %vm135, %v49, 0
  %vm139 = vcmask 1041408
  %v141 = vsel %vm139, %v128, 0
  %143 = vmatpush.bf16.msra.mxu0 0
  %144 = vmatpush.bf16.msra.mxu0 %v141
  %145 = vmatpush.bf16.msra.mxu0 %v127
  %146 = vmatpush.bf16.msra.mxu0 %v126
  %147 = vmatpush.bf16.msra.mxu0 %v125
  %148 = vmatpush.bf16.msra.mxu0 %v124
  %149 = vmatpush.bf16.msra.mxu0 %v123
  %150 = vmatpush.bf16.msra.mxu0 %v122
  %151 = vmatmul.bf16.gmra.mxu0 %v137
  %v152 = vpop.f32.mrf.mxu0
  %v153 = vadd.f32 0.0, %v152
  %v154 = vpop.f32.mrf.mxu0
  %155 = vdwg.mxu0
  %v157 = vsel %vm139, %v95, 0
  %159 = vmatpush.bf16.msra.mxu0 0
  %160 = vmatpush.bf16.msra.mxu0 %v157
  %161 = vmatpush.bf16.msra.mxu0 %v94
  %162 = vmatpush.bf16.msra.mxu0 %v93
  %163 = vmatpush.bf16.msra.mxu0 %v92
  %164 = vmatpush.bf16.msra.mxu0 %v91
  %165 = vmatpush.bf16.msra.mxu0 %v90
  %166 = vmatpush.bf16.msra.mxu0 %v89
  %167 = vmatmul.bf16.gmra.mxu0 %v137
  %v168 = vpop.f32.mrf.mxu0
  %v169 = vadd.f32 0.0, %v168
  %v170 = vpop.f32.mrf.mxu0
  %171 = vdwg.mxu0
  %v172 = vadd.f32 %v153, 1e-20
  %v173 = vrcp.pop %v172
  %v174 = vmul.f32 %v169, %v173
  %v175 = vld [vmem:[%s3] sm:$0xf]
  %177 = vset.pattern.permute.xlu0 0
  %178 = vperm.xlu0 %177, %v175
  %v179 = vpop.permute.xlu0 %178
  %v181 = vadd.f32 %v174, %v179
  %vm182 = vcmask 257024
  %183 = vst.msk [vmem:[%s5] sm:$0xf] %vm182, %v181
  %v184 = vld [vmem:[%s4] sm:$0xf]
  %186 = vset.pattern.permute.xlu0 0
  %187 = vperm.xlu0 %186, %v184
  %v188 = vpop.permute.xlu0 %187
  %v190 = vmul.f32 %v153, %v188
  %191 = vst.msk [vmem:[%s6] sm:$0xf] %vm182, %v190
  // Predicated region
  $region22: #{nconv_cnn_forward.16} parent=0 // pred_check
    _
  $region23: #{nconv_cnn_forward.16} parent=0 // pred_check_branch
    %193 = sbr.rel (0) target = $region25
  $region24: #{nconv_cnn_forward.16} parent=0 // pred_region
    _
  $region25: #{nconv_cnn_forward.16} parent=0 // pred_fallthru
    _
  // Predicated region
  $region26: #{nconv_cnn_forward.16} parent=0 // pred_check
    _
  $region27: #{nconv_cnn_forward.16} parent=0 // pred_check_branch
    %195 = sbr.rel (0) target = $region29
  $region28: #{nconv_cnn_forward.16} parent=0 // pred_region
    _
  $region29: #{nconv_cnn_forward.16} parent=0 // pred_fallthru
    _
  // Predicated region
  $region30: #{nconv_cnn_forward.16} parent=0 // pred_check
    _
  $region31: #{nconv_cnn_forward.16} parent=0 // pred_check_branch
    %197 = sbr.rel (0) target = $region33
  $region32: #{nconv_cnn_forward.16} parent=0 // pred_region
    _
  $region33: #{nconv_cnn_forward.16} parent=0 // pred_fallthru
    _
  // Predicated region
  $region34: #{nconv_cnn_forward.16} parent=0 // pred_check
    _
  $region35: #{nconv_cnn_forward.16} parent=0 // pred_check_branch
    %199 = sbr.rel (0) target = $region37
  $region36: #{nconv_cnn_forward.16} parent=0 // pred_region
    _
  $region37: #{nconv_cnn_forward.16} parent=0 // pred_fallthru
    _

// kernel: nconv_cnn_forward.17
$region0: #{nconv_cnn_forward.17}
  #allocation0 [shape = 'u32[]', space=smem, size = 0x4, offset = 0x4, fixed_abs, tag = 'smem constant byte address 0x4 - core index']
  #allocation1 [shape = 'u32[72,128]{1,0:T(1,128)}', space=vmem, size = 0x9000, scoped, tag = 'internal scratch']
  %s0 = inlined_call_operand.vmem [shape: bf16[100,8], index: 0, kind: input, shape index: {}]
  %s1 = inlined_call_operand.vmem [shape: bf16[100,8], index: 1, kind: input, shape index: {}]
  %s2 = inlined_call_operand.vmem [shape: bf16[4,100], index: 2, kind: input, shape index: {}]
  %s3 = inlined_call_operand.vmem [shape: f32[4,1], index: 3, kind: input, shape index: {}]
  %s4 = inlined_call_operand.vmem [shape: f32[4,1], index: 4, kind: input, shape index: {}]
  %s5 = inlined_call_operand.vmem [shape: f32[4,8], index: 5, kind: output, shape index: {0}]
  %s6 = inlined_call_operand.vmem [shape: f32[4,8], index: 6, kind: output, shape index: {1}]
  %7 = xla_tuple %s5, %s6
  %s8 = sld [smem:[#allocation0]]
  $region38: #{nconv_cnn_forward.17} parent=0
    _
  %s10 = ssub.s32 1, %s8
  %s11 = scalar_select 0, %s10, %s8
  // Predicated region
  $region2: #{nconv_cnn_forward.17} parent=0 // pred_check
    _
  $region3: #{nconv_cnn_forward.17} parent=0 // pred_check_branch
    %13 = sbr.rel (0) target = $region5
  $region4: #{nconv_cnn_forward.17} parent=0 // pred_region
    _
  $region5: #{nconv_cnn_forward.17} parent=0 // pred_fallthru
    _
  // Predicated region
  $region6: #{nconv_cnn_forward.17} parent=0 // pred_check
    _
  $region7: #{nconv_cnn_forward.17} parent=0 // pred_check_branch
    %15 = sbr.rel (0) target = $region9
  $region8: #{nconv_cnn_forward.17} parent=0 // pred_region
    _
  $region9: #{nconv_cnn_forward.17} parent=0 // pred_fallthru
    _
  // Predicated region
  $region10: #{nconv_cnn_forward.17} parent=0 // pred_check
    _
  $region11: #{nconv_cnn_forward.17} parent=0 // pred_check_branch
    %17 = sbr.rel (0) target = $region13
  $region12: #{nconv_cnn_forward.17} parent=0 // pred_region
    _
  $region13: #{nconv_cnn_forward.17} parent=0 // pred_fallthru
    _
  // Predicated region
  $region14: #{nconv_cnn_forward.17} parent=0 // pred_check
    _
  $region15: #{nconv_cnn_forward.17} parent=0 // pred_check_branch
    %19 = sbr.rel (0) target = $region17
  $region16: #{nconv_cnn_forward.17} parent=0 // pred_region
    _
  $region17: #{nconv_cnn_forward.17} parent=0 // pred_fallthru
    _
  // Predicated region
  $region18: #{nconv_cnn_forward.17} parent=0 // pred_check
    _
  $region19: #{nconv_cnn_forward.17} parent=0 // pred_check_branch
    %21 = sbr.rel (0) target = $region21
  $region20: #{nconv_cnn_forward.17} parent=0 // pred_region
    _
  $region21: #{nconv_cnn_forward.17} parent=0 // pred_fallthru
    _
  %v23 = vld [vmem:[%s0] sm:$0xf]
  %v24 = vld [vmem:[%s0 + $0x4] sm:$0xf]
  %v25 = vld [vmem:[%s0 + $0x8] sm:$0xf]
  %v26 = vld [vmem:[%s0 + $0xc] sm:$0xf]
  %v27 = vld [vmem:[%s0 + $0x10] sm:$0xf]
  %v28 = vld [vmem:[%s0 + $0x14] sm:$0xf]
  %v29 = vld [vmem:[%s0 + $0x18] sm:$0xf]
  %v30 = vld [vmem:[%s0 + $0x1c] sm:$0xf]
  %v31 = vld [vmem:[%s0 + $0x20] sm:$0xf]
  %v32 = vld [vmem:[%s0 + $0x24] sm:$0xf]
  %v33 = vld [vmem:[%s0 + $0x28] sm:$0xf]
  %v34 = vld [vmem:[%s0 + $0x2c] sm:$0xf]
  %v35 = vld [vmem:[%s0 + $0x30] sm:$0x3]
  %v36 = vld [vmem:[%s1] sm:$0xf]
  %v37 = vld [vmem:[%s1 + $0x4] sm:$0xf]
  %v38 = vld [vmem:[%s1 + $0x8] sm:$0xf]
  %v39 = vld [vmem:[%s1 + $0xc] sm:$0xf]
  %v40 = vld [vmem:[%s1 + $0x10] sm:$0xf]
  %v41 = vld [vmem:[%s1 + $0x14] sm:$0xf]
  %v42 = vld [vmem:[%s1 + $0x18] sm:$0xf]
  %v43 = vld [vmem:[%s1 + $0x1c] sm:$0xf]
  %v44 = vld [vmem:[%s1 + $0x20] sm:$0xf]
  %v45 = vld [vmem:[%s1 + $0x24] sm:$0xf]
  %v46 = vld [vmem:[%s1 + $0x28] sm:$0xf]
  %v47 = vld [vmem:[%s1 + $0x2c] sm:$0xf]
  %v48 = vld [vmem:[%s1 + $0x30] sm:$0x3]
  %v49 = vld [vmem:[%s2] sm:$0x3]
  %v50 = vunpack.c.l.bf16 %v23
  %v51 = vunpack.c.l.bf16 %v24
  %v52 = vunpack.c.l.bf16 %v25
  %v53 = vunpack.c.l.bf16 %v26
  %v54 = vunpack.c.l.bf16 %v27
  %v55 = vunpack.c.l.bf16 %v28
  %v56 = vunpack.c.l.bf16 %v29
  %v57 = vunpack.c.l.bf16 %v30
  %v58 = vunpack.c.l.bf16 %v31
  %v59 = vunpack.c.l.bf16 %v32
  %v60 = vunpack.c.l.bf16 %v33
  %v61 = vunpack.c.l.bf16 %v34
  %v62 = vunpack.c.l.bf16 %v35
  %v63 = vunpack.c.l.bf16 %v36
  %v64 = vunpack.c.l.bf16 %v37
  %v65 = vunpack.c.l.bf16 %v38
  %v66 = vunpack.c.l.bf16 %v39
  %v67 = vunpack.c.l.bf16 %v40
  %v68 = vunpack.c.l.bf16 %v41
  %v69 = vunpack.c.l.bf16 %v42
  %v70 = vunpack.c.l.bf16 %v43
  %v71 = vunpack.c.l.bf16 %v44
  %v72 = vunpack.c.l.bf16 %v45
  %v73 = vunpack.c.l.bf16 %v46
  %v74 = vunpack.c.l.bf16 %v47
  %v75 = vunpack.c.l.bf16 %v48
  %v76 = vmul.f32 %v50, %v63
  %v77 = vmul.f32 %v51, %v64
  %v78 = vmul.f32 %v52, %v65
  %v79 = vmul.f32 %v53, %v66
  %v80 = vmul.f32 %v54, %v67
  %v81 = vmul.f32 %v55, %v68
  %v82 = vmul.f32 %v56, %v69
  %v83 = vmul.f32 %v57, %v70
  %v84 = vmul.f32 %v58, %v71
  %v85 = vmul.f32 %v59, %v72
  %v86 = vmul.f32 %v60, %v73
  %v87 = vmul.f32 %v61, %v74
  %v88 = vmul.f32 %v62, %v75
  %v89 = vpack.c.bf16 %v77, %v76
  %v90 = vpack.c.bf16 %v79, %v78
  %v91 = vpack.c.bf16 %v81, %v80
  %v92 = vpack.c.bf16 %v83, %v82
  %v93 = vpack.c.bf16 %v85, %v84
  %v94 = vpack.c.bf16 %v87, %v86
  %v95 = vpack.c.bf16 %v88, %v88
  %v109 = vunpack.c.l.b16 %v36
  %v110 = vunpack.c.l.b16 %v37
  %v111 = vunpack.c.l.b16 %v38
  %v112 = vunpack.c.l.b16 %v39
  %v113 = vunpack.c.l.b16 %v40
  %v114 = vunpack.c.l.b16 %v41
  %v115 = vunpack.c.l.b16 %v42
  %v116 = vunpack.c.l.b16 %v43
  %v117 = vunpack.c.l.b16 %v44
  %v118 = vunpack.c.l.b16 %v45
  %v119 = vunpack.c.l.b16 %v46
  %v120 = vunpack.c.l.b16 %v47
  %v121 = vunpack.c.l.b16 %v48
  %v122 = vpack.c.b16 %v110, %v109
  %v123 = vpack.c.b16 %v112, %v111
  %v124 = vpack.c.b16 %v114, %v113
  %v125 = vpack.c.b16 %v116, %v115
  %v126 = vpack.c.b16 %v118, %v117
  %v127 = vpack.c.b16 %v120, %v119
  %v128 = vpack.c.b16 %v121, %v121
  %vm135 = vcmask 818176
  %v137 = vsel %vm135, %v49, 0
  %vm139 = vcmask 1041408
  %v141 = vsel %vm139, %v128, 0
  %143 = vmatpush.bf16.msra.mxu0 0
  %144 = vmatpush.bf16.msra.mxu0 %v141
  %145 = vmatpush.bf16.msra.mxu0 %v127
  %146 = vmatpush.bf16.msra.mxu0 %v126
  %147 = vmatpush.bf16.msra.mxu0 %v125
  %148 = vmatpush.bf16.msra.mxu0 %v124
  %149 = vmatpush.bf16.msra.mxu0 %v123
  %150 = vmatpush.bf16.msra.mxu0 %v122
  %151 = vmatmul.bf16.gmra.mxu0 %v137
  %v152 = vpop.f32.mrf.mxu0
  %v153 = vadd.f32 0.0, %v152
  %v154 = vpop.f32.mrf.mxu0
  %155 = vdwg.mxu0
  %v157 = vsel %vm139, %v95, 0
  %159 = vmatpush.bf16.msra.mxu0 0
  %160 = vmatpush.bf16.msra.mxu0 %v157
  %161 = vmatpush.bf16.msra.mxu0 %v94
  %162 = vmatpush.bf16.msra.mxu0 %v93
  %163 = vmatpush.bf16.msra.mxu0 %v92
  %164 = vmatpush.bf16.msra.mxu0 %v91
  %165 = vmatpush.bf16.msra.mxu0 %v90
  %166 = vmatpush.bf16.msra.mxu0 %v89
  %167 = vmatmul.bf16.gmra.mxu0 %v137
  %v168 = vpop.f32.mrf.mxu0
  %v169 = vadd.f32 0.0, %v168
  %v170 = vpop.f32.mrf.mxu0
  %171 = vdwg.mxu0
  %v172 = vadd.f32 %v153, 1e-20
  %v173 = vrcp.pop %v172
  %v174 = vmul.f32 %v169, %v173
  %v175 = vld [vmem:[%s3] sm:$0xf]
  %177 = vset.pattern.permute.xlu0 0
  %178 = vperm.xlu0 %177, %v175
  %v179 = vpop.permute.xlu0 %178
  %v181 = vadd.f32 %v174, %v179
  %vm182 = vcmask 60416
  %183 = vst.msk [vmem:[%s5] sm:$0xf] %vm182, %v181
  %v184 = vld [vmem:[%s4] sm:$0xf]
  %186 = vset.pattern.permute.xlu0 0
  %187 = vperm.xlu0 %186, %v184
  %v188 = vpop.permute.xlu0 %187
  %v190 = vmul.f32 %v153, %v188
  %191 = vst.msk [vmem:[%s6] sm:$0xf] %vm182, %v190
  // Predicated region
  $region22: #{nconv_cnn_forward.17} parent=0 // pred_check
    _
  $region23: #{nconv_cnn_forward.17} parent=0 // pred_check_branch
    %193 = sbr.rel (0) target = $region25
  $region24: #{nconv_cnn_forward.17} parent=0 // pred_region
    _
  $region25: #{nconv_cnn_forward.17} parent=0 // pred_fallthru
    _
  // Predicated region
  $region26: #{nconv_cnn_forward.17} parent=0 // pred_check
    _
  $region27: #{nconv_cnn_forward.17} parent=0 // pred_check_branch
    %195 = sbr.rel (0) target = $region29
  $region28: #{nconv_cnn_forward.17} parent=0 // pred_region
    _
  $region29: #{nconv_cnn_forward.17} parent=0 // pred_fallthru
    _
  // Predicated region
  $region30: #{nconv_cnn_forward.17} parent=0 // pred_check
    _
  $region31: #{nconv_cnn_forward.17} parent=0 // pred_check_branch
    %197 = sbr.rel (0) target = $region33
  $region32: #{nconv_cnn_forward.17} parent=0 // pred_region
    _
  $region33: #{nconv_cnn_forward.17} parent=0 // pred_fallthru
    _
  // Predicated region
  $region34: #{nconv_cnn_forward.17} parent=0 // pred_check
    _
  $region35: #{nconv_cnn_forward.17} parent=0 // pred_check_branch
    %199 = sbr.rel (0) target = $region37
  $region36: #{nconv_cnn_forward.17} parent=0 // pred_region
    _
  $region37: #{nconv_cnn_forward.17} parent=0 // pred_fallthru
    _

// kernel: nconv_cnn_forward.18
$region0: #{nconv_cnn_forward.18}
  #allocation0 [shape = 'u32[]', space=smem, size = 0x4, offset = 0x4, fixed_abs, tag = 'smem constant byte address 0x4 - core index']
  #allocation1 [shape = 'u32[72,128]{1,0:T(1,128)}', space=vmem, size = 0x9000, scoped, tag = 'internal scratch']
  %s0 = inlined_call_operand.vmem [shape: bf16[72,32], index: 0, kind: input, shape index: {}]
  %s1 = inlined_call_operand.vmem [shape: bf16[72,32], index: 1, kind: input, shape index: {}]
  %s2 = inlined_call_operand.vmem [shape: bf16[4,72], index: 2, kind: input, shape index: {}]
  %s3 = inlined_call_operand.vmem [shape: f32[4,1], index: 3, kind: input, shape index: {}]
  %s4 = inlined_call_operand.vmem [shape: f32[4,1], index: 4, kind: input, shape index: {}]
  %s5 = inlined_call_operand.vmem [shape: f32[4,32], index: 5, kind: output, shape index: {0}]
  %s6 = inlined_call_operand.vmem [shape: f32[4,32], index: 6, kind: output, shape index: {1}]
  %7 = xla_tuple %s5, %s6
  %s8 = sld [smem:[#allocation0]]
  $region38: #{nconv_cnn_forward.18} parent=0
    _
  %s10 = ssub.s32 1, %s8
  %s11 = scalar_select 0, %s10, %s8
  // Predicated region
  $region2: #{nconv_cnn_forward.18} parent=0 // pred_check
    _
  $region3: #{nconv_cnn_forward.18} parent=0 // pred_check_branch
    %13 = sbr.rel (0) target = $region5
  $region4: #{nconv_cnn_forward.18} parent=0 // pred_region
    _
  $region5: #{nconv_cnn_forward.18} parent=0 // pred_fallthru
    _
  // Predicated region
  $region6: #{nconv_cnn_forward.18} parent=0 // pred_check
    _
  $region7: #{nconv_cnn_forward.18} parent=0 // pred_check_branch
    %15 = sbr.rel (0) target = $region9
  $region8: #{nconv_cnn_forward.18} parent=0 // pred_region
    _
  $region9: #{nconv_cnn_forward.18} parent=0 // pred_fallthru
    _
  // Predicated region
  $region10: #{nconv_cnn_forward.18} parent=0 // pred_check
    _
  $region11: #{nconv_cnn_forward.18} parent=0 // pred_check_branch
    %17 = sbr.rel (0) target = $region13
  $region12: #{nconv_cnn_forward.18} parent=0 // pred_region
    _
  $region13: #{nconv_cnn_forward.18} parent=0 // pred_fallthru
    _
  // Predicated region
  $region14: #{nconv_cnn_forward.18} parent=0 // pred_check
    _
  $region15: #{nconv_cnn_forward.18} parent=0 // pred_check_branch
    %19 = sbr.rel (0) target = $region17
  $region16: #{nconv_cnn_forward.18} parent=0 // pred_region
    _
  $region17: #{nconv_cnn_forward.18} parent=0 // pred_fallthru
    _
  // Predicated region
  $region18: #{nconv_cnn_forward.18} parent=0 // pred_check
    _
  $region19: #{nconv_cnn_forward.18} parent=0 // pred_check_branch
    %21 = sbr.rel (0) target = $region21
  $region20: #{nconv_cnn_forward.18} parent=0 // pred_region
    _
  $region21: #{nconv_cnn_forward.18} parent=0 // pred_fallthru
    _
  %v23 = vld [vmem:[%s0] sm:$0xf]
  %v24 = vld [vmem:[%s0 + $0x4] sm:$0xf]
  %v25 = vld [vmem:[%s0 + $0x8] sm:$0xf]
  %v26 = vld [vmem:[%s0 + $0xc] sm:$0xf]
  %v27 = vld [vmem:[%s0 + $0x10] sm:$0xf]
  %v28 = vld [vmem:[%s0 + $0x14] sm:$0xf]
  %v29 = vld [vmem:[%s0 + $0x18] sm:$0xf]
  %v30 = vld [vmem:[%s0 + $0x1c] sm:$0xf]
  %v31 = vld [vmem:[%s0 + $0x20] sm:$0xf]
  %v32 = vld [vmem:[%s1] sm:$0xf]
  %v33 = vld [vmem:[%s1 + $0x4] sm:$0xf]
  %v34 = vld [vmem:[%s1 + $0x8] sm:$0xf]
  %v35 = vld [vmem:[%s1 + $0xc] sm:$0xf]
  %v36 = vld [vmem:[%s1 + $0x10] sm:$0xf]
  %v37 = vld [vmem:[%s1 + $0x14] sm:$0xf]
  %v38 = vld [vmem:[%s1 + $0x18] sm:$0xf]
  %v39 = vld [vmem:[%s1 + $0x1c] sm:$0xf]
  %v40 = vld [vmem:[%s1 + $0x20] sm:$0xf]
  %v41 = vld [vmem:[%s2] sm:$0x3]
  %v42 = vunpack.c.l.bf16 %v23
  %v43 = vunpack.c.l.bf16 %v24
  %v44 = vunpack.c.l.bf16 %v25
  %v45 = vunpack.c.l.bf16 %v26
  %v46 = vunpack.c.l.bf16 %v27
  %v47 = vunpack.c.l.bf16 %v28
  %v48 = vunpack.c.l.bf16 %v29
  %v49 = vunpack.c.l.bf16 %v30
  %v50 = vunpack.c.l.bf16 %v31
  %v51 = vunpack.c.l.bf16 %v32
  %v52 = vunpack.c.l.bf16 %v33
  %v53 = vunpack.c.l.bf16 %v34
  %v54 = vunpack.c.l.bf16 %v35
  %v55 = vunpack.c.l.bf16 %v36
  %v56 = vunpack.c.l.bf16 %v37
  %v57 = vunpack.c.l.bf16 %v38
  %v58 = vunpack.c.l.bf16 %v39
  %v59 = vunpack.c.l.bf16 %v40
  %v60 = vmul.f32 %v42, %v51
  %v61 = vmul.f32 %v43, %v52
  %v62 = vmul.f32 %v44, %v53
  %v63 = vmul.f32 %v45, %v54
  %v64 = vmul.f32 %v46, %v55
  %v65 = vmul.f32 %v47, %v56
  %v66 = vmul.f32 %v48, %v57
  %v67 = vmul.f32 %v49, %v58
  %v68 = vmul.f32 %v50, %v59
  %v69 = vpack.c.bf16 %v61, %v60
  %v70 = vpack.c.bf16 %v63, %v62
  %v71 = vpack.c.bf16 %v65, %v64
  %v72 = vpack.c.bf16 %v67, %v66
  %v73 = vpack.c.bf16 %v68, %v68
  %v83 = vunpack.c.l.b16 %v32
  %v84 = vunpack.c.l.b16 %v33
  %v85 = vunpack.c.l.b16 %v34
  %v86 = vunpack.c.l.b16 %v35
  %v87 = vunpack.c.l.b16 %v36
  %v88 = vunpack.c.l.b16 %v37
  %v89 = vunpack.c.l.b16 %v38
  %v90 = vunpack.c.l.b16 %v39
  %v91 = vunpack.c.l.b16 %v40
  %v92 = vpack.c.b16 %v84, %v83
  %v93 = vpack.c.b16 %v86, %v85
  %v94 = vpack.c.b16 %v88, %v87
  %v95 = vpack.c.b16 %v90, %v89
  %v96 = vpack.c.b16 %v91, %v91
  %vm101 = vcmask 588800
  %v103 = vsel %vm101, %v41, 0
  %vm105 = vcmask 1043456
  %v107 = vsel %vm105, %v96, 0
  %109 = vmatpush.bf16.msra.mxu0 0
  %110 = vmatpush.bf16.msra.mxu0 0
  %111 = vmatpush.bf16.msra.mxu0 0
  %112 = vmatpush.bf16.msra.mxu0 %v107
  %113 = vmatpush.bf16.msra.mxu0 %v95
  %114 = vmatpush.bf16.msra.mxu0 %v94
  %115 = vmatpush.bf16.msra.mxu0 %v93
  %116 = vmatpush.bf16.msra.mxu0 %v92
  %117 = vmatmul.bf16.gmra.mxu0 %v103
  %v118 = vpop.f32.mrf.mxu0
  %v119 = vadd.f32 0.0, %v118
  %v120 = vpop.f32.mrf.mxu0
  %121 = vdwg.mxu0
  %v123 = vsel %vm105, %v73, 0
  %125 = vmatpush.bf16.msra.mxu0 0
  %126 = vmatpush.bf16.msra.mxu0 0
  %127 = vmatpush.bf16.msra.mxu0 0
  %128 = vmatpush.bf16.msra.mxu0 %v123
  %129 = vmatpush.bf16.msra.mxu0 %v72
  %130 = vmatpush.bf16.msra.mxu0 %v71
  %131 = vmatpush.bf16.msra.mxu0 %v70
  %132 = vmatpush.bf16.msra.mxu0 %v69
  %133 = vmatmul.bf16.gmra.mxu0 %v103
  %v134 = vpop.f32.mrf.mxu0
  %v135 = vadd.f32 0.0, %v134
  %v136 = vpop.f32.mrf.mxu0
  %137 = vdwg.mxu0
  %v138 = vadd.f32 %v119, 1e-20
  %v139 = vrcp.pop %v138
  %v140 = vmul.f32 %v135, %v139
  %v141 = vld [vmem:[%s3] sm:$0xf]
  %143 = vset.pattern.permute.xlu0 0
  %144 = vperm.xlu0 %143, %v141
  %v145 = vpop.permute.xlu0 %144
  %v147 = vadd.f32 %v140, %v145
  %vm148 = vcmask 257024
  %149 = vst.msk [vmem:[%s5] sm:$0xf] %vm148, %v147
  %v150 = vld [vmem:[%s4] sm:$0xf]
  %152 = vset.pattern.permute.xlu0 0
  %153 = vperm.xlu0 %152, %v150
  %v154 = vpop.permute.xlu0 %153
  %v156 = vmul.f32 %v119, %v154
  %157 = vst.msk [vmem:[%s6] sm:$0xf] %vm148, %v156
  // Predicated region
  $region22: #{nconv_cnn_forward.18} parent=0 // pred_check
    _
  $region23: #{nconv_cnn_forward.18} parent=0 // pred_check_branch
    %159 = sbr.rel (0) target = $region25
  $region24: #{nconv_cnn_forward.18} parent=0 // pred_region
    _
  $region25: #{nconv_cnn_forward.18} parent=0 // pred_fallthru
    _
  // Predicated region
  $region26: #{nconv_cnn_forward.18} parent=0 // pred_check
    _
  $region27: #{nconv_cnn_forward.18} parent=0 // pred_check_branch
    %161 = sbr.rel (0) target = $region29
  $region28: #{nconv_cnn_forward.18} parent=0 // pred_region
    _
  $region29: #{nconv_cnn_forward.18} parent=0 // pred_fallthru
    _
  // Predicated region
  $region30: #{nconv_cnn_forward.18} parent=0 // pred_check
    _
  $region31: #{nconv_cnn_forward.18} parent=0 // pred_check_branch
    %163 = sbr.rel (0) target = $region33
  $region32: #{nconv_cnn_forward.18} parent=0 // pred_region
    _
  $region33: #{nconv_cnn_forward.18} parent=0 // pred_fallthru
    _
  // Predicated region
  $region34: #{nconv_cnn_forward.18} parent=0 // pred_check
    _
  $region35: #{nconv_cnn_forward.18} parent=0 // pred_check_branch
    %165 = sbr.rel (0) target = $region37
  $region36: #{nconv_cnn_forward.18} parent=0 // pred_region
    _
  $region37: #{nconv_cnn_forward.18} parent=0 // pred_fallthru
    _

// kernel: nconv_cnn_forward.19
$region0: #{nconv_cnn_forward.19}
  #allocation0 [shape = 'u32[]', space=smem, size = 0x4, offset = 0x4, fixed_abs, tag = 'smem constant byte address 0x4 - core index']
  #allocation1 [shape = 'u32[72,128]{1,0:T(1,128)}', space=vmem, size = 0x9000, scoped, tag = 'internal scratch']
  %s0 = inlined_call_operand.vmem [shape: bf16[72,128], index: 0, kind: input, shape index: {}]
  %s1 = inlined_call_operand.vmem [shape: bf16[72,128], index: 1, kind: input, shape index: {}]
  %s2 = inlined_call_operand.vmem [shape: bf16[4,72], index: 2, kind: input, shape index: {}]
  %s3 = inlined_call_operand.vmem [shape: f32[4,1], index: 3, kind: input, shape index: {}]
  %s4 = inlined_call_operand.vmem [shape: f32[4,1], index: 4, kind: input, shape index: {}]
  %s5 = inlined_call_operand.vmem [shape: f32[4,128], index: 5, kind: output, shape index: {0}]
  %s6 = inlined_call_operand.vmem [shape: f32[4,128], index: 6, kind: output, shape index: {1}]
  %7 = xla_tuple %s5, %s6
  %s8 = sld [smem:[#allocation0]]
  $region38: #{nconv_cnn_forward.19} parent=0
    _
  %s10 = ssub.s32 1, %s8
  %s11 = scalar_select 0, %s10, %s8
  // Predicated region
  $region2: #{nconv_cnn_forward.19} parent=0 // pred_check
    _
  $region3: #{nconv_cnn_forward.19} parent=0 // pred_check_branch
    %13 = sbr.rel (0) target = $region5
  $region4: #{nconv_cnn_forward.19} parent=0 // pred_region
    _
  $region5: #{nconv_cnn_forward.19} parent=0 // pred_fallthru
    _
  // Predicated region
  $region6: #{nconv_cnn_forward.19} parent=0 // pred_check
    _
  $region7: #{nconv_cnn_forward.19} parent=0 // pred_check_branch
    %15 = sbr.rel (0) target = $region9
  $region8: #{nconv_cnn_forward.19} parent=0 // pred_region
    _
  $region9: #{nconv_cnn_forward.19} parent=0 // pred_fallthru
    _
  // Predicated region
  $region10: #{nconv_cnn_forward.19} parent=0 // pred_check
    _
  $region11: #{nconv_cnn_forward.19} parent=0 // pred_check_branch
    %17 = sbr.rel (0) target = $region13
  $region12: #{nconv_cnn_forward.19} parent=0 // pred_region
    _
  $region13: #{nconv_cnn_forward.19} parent=0 // pred_fallthru
    _
  // Predicated region
  $region14: #{nconv_cnn_forward.19} parent=0 // pred_check
    _
  $region15: #{nconv_cnn_forward.19} parent=0 // pred_check_branch
    %19 = sbr.rel (0) target = $region17
  $region16: #{nconv_cnn_forward.19} parent=0 // pred_region
    _
  $region17: #{nconv_cnn_forward.19} parent=0 // pred_fallthru
    _
  // Predicated region
  $region18: #{nconv_cnn_forward.19} parent=0 // pred_check
    _
  $region19: #{nconv_cnn_forward.19} parent=0 // pred_check_branch
    %21 = sbr.rel (0) target = $region21
  $region20: #{nconv_cnn_forward.19} parent=0 // pred_region
    _
  $region21: #{nconv_cnn_forward.19} parent=0 // pred_fallthru
    _
  %v23 = vld [vmem:[%s0] sm:$0xf]
  %v24 = vld [vmem:[%s0 + $0x4] sm:$0xf]
  %v25 = vld [vmem:[%s0 + $0x8] sm:$0xf]
  %v26 = vld [vmem:[%s0 + $0xc] sm:$0xf]
  %v27 = vld [vmem:[%s0 + $0x10] sm:$0xf]
  %v28 = vld [vmem:[%s0 + $0x14] sm:$0xf]
  %v29 = vld [vmem:[%s0 + $0x18] sm:$0xf]
  %v30 = vld [vmem:[%s0 + $0x1c] sm:$0xf]
  %v31 = vld [vmem:[%s0 + $0x20] sm:$0xf]
  %v32 = vld [vmem:[%s1] sm:$0xf]
  %v33 = vld [vmem:[%s1 + $0x4] sm:$0xf]
  %v34 = vld [vmem:[%s1 + $0x8] sm:$0xf]
  %v35 = vld [vmem:[%s1 + $0xc] sm:$0xf]
  %v36 = vld [vmem:[%s1 + $0x10] sm:$0xf]
  %v37 = vld [vmem:[%s1 + $0x14] sm:$0xf]
  %v38 = vld [vmem:[%s1 + $0x18] sm:$0xf]
  %v39 = vld [vmem:[%s1 + $0x1c] sm:$0xf]
  %v40 = vld [vmem:[%s1 + $0x20] sm:$0xf]
  %v41 = vld [vmem:[%s2] sm:$0x3]
  %v42 = vunpack.c.l.bf16 %v23
  %v43 = vunpack.c.l.bf16 %v24
  %v44 = vunpack.c.l.bf16 %v25
  %v45 = vunpack.c.l.bf16 %v26
  %v46 = vunpack.c.l.bf16 %v27
  %v47 = vunpack.c.l.bf16 %v28
  %v48 = vunpack.c.l.bf16 %v29
  %v49 = vunpack.c.l.bf16 %v30
  %v50 = vunpack.c.l.bf16 %v31
  %v51 = vunpack.c.l.bf16 %v32
  %v52 = vunpack.c.l.bf16 %v33
  %v53 = vunpack.c.l.bf16 %v34
  %v54 = vunpack.c.l.bf16 %v35
  %v55 = vunpack.c.l.bf16 %v36
  %v56 = vunpack.c.l.bf16 %v37
  %v57 = vunpack.c.l.bf16 %v38
  %v58 = vunpack.c.l.bf16 %v39
  %v59 = vunpack.c.l.bf16 %v40
  %v60 = vmul.f32 %v42, %v51
  %v61 = vmul.f32 %v43, %v52
  %v62 = vmul.f32 %v44, %v53
  %v63 = vmul.f32 %v45, %v54
  %v64 = vmul.f32 %v46, %v55
  %v65 = vmul.f32 %v47, %v56
  %v66 = vmul.f32 %v48, %v57
  %v67 = vmul.f32 %v49, %v58
  %v68 = vmul.f32 %v50, %v59
  %v69 = vpack.c.bf16 %v60, %v60
  %v70 = vpack.c.bf16 %v61, %v61
  %v71 = vpack.c.bf16 %v62, %v62
  %v72 = vpack.c.bf16 %v63, %v63
  %v73 = vpack.c.bf16 %v64, %v64
  %v74 = vpack.c.bf16 %v65, %v65
  %v75 = vpack.c.bf16 %v66, %v66
  %v76 = vpack.c.bf16 %v67, %v67
  %v77 = vpack.c.bf16 %v68, %v68
  %v87 = vunpack.c.l.b16 %v32
  %v88 = vunpack.c.l.b16 %v33
  %v89 = vunpack.c.l.b16 %v34
  %v90 = vunpack.c.l.b16 %v35
  %v91 = vunpack.c.l.b16 %v36
  %v92 = vunpack.c.l.b16 %v37
  %v93 = vunpack.c.l.b16 %v38
  %v94 = vunpack.c.l.b16 %v39
  %v95 = vunpack.c.l.b16 %v40
  %v96 = vpack.c.b16 %v88, %v87
  %v97 = vpack.c.b16 %v90, %v89
  %v98 = vpack.c.b16 %v92, %v91
  %v99 = vpack.c.b16 %v94, %v93
  %v100 = vpack.c.b16 %v95, %v95
  %v114 = vunpack.c.l.b16 %v69
  %v115 = vunpack.c.l.b16 %v70
  %v116 = vunpack.c.l.b16 %v71
  %v117 = vunpack.c.l.b16 %v72
  %v118 = vunpack.c.l.b16 %v73
  %v119 = vunpack.c.l.b16 %v74
  %v120 = vunpack.c.l.b16 %v75
  %v121 = vunpack.c.l.b16 %v76
  %v122 = vunpack.c.l.b16 %v77
  %v123 = vpack.c.b16 %v115, %v114
  %v124 = vpack.c.b16 %v117, %v116
  %v125 = vpack.c.b16 %v119, %v118
  %v126 = vpack.c.b16 %v121, %v120
  %v127 = vpack.c.b16 %v122, %v122
  %vm132 = vcmask 588800
  %v134 = vsel %vm132, %v41, 0
  %vm136 = vcmask 1043456
  %v138 = vsel %vm136, %v100, 0
  %v141 = vsel %vm136, %v127, 0
  %143 = vmatpush.bf16.msra.mxu0 0
  %144 = vmatpush.bf16.msra.mxu0 0
  %145 = vmatpush.bf16.msra.mxu0 0
  %146 = vmatpush.bf16.msra.mxu0 %v138
  %147 = vmatpush.bf16.msra.mxu0 %v99
  %148 = vmatpush.bf16.msra.mxu0 %v98
  %149 = vmatpush.bf16.msra.mxu0 %v97
  %150 = vmatpush.bf16.msra.mxu0 %v96
  %151 = vmatmul.bf16.gmra.mxu0 %v134
  %v152 = vpop.f32.mrf.mxu0
  %v153 = vadd.f32 0.0, %v152
  %v154 = vpop.f32.mrf.mxu0
  %155 = vdwg.mxu0
  %156 = vmatpush.bf16.msra.mxu0 0
  %157 = vmatpush.bf16.msra.mxu0 0
  %158 = vmatpush.bf16.msra.mxu0 0
  %159 = vmatpush.bf16.msra.mxu0 %v141
  %160 = vmatpush.bf16.msra.mxu0 %v126
  %161 = vmatpush.bf16.msra.mxu0 %v125
  %162 = vmatpush.bf16.msra.mxu0 %v124
  %163 = vmatpush.bf16.msra.mxu0 %v123
  %164 = vmatmul.bf16.gmra.mxu0 %v134
  %v165 = vpop.f32.mrf.mxu0
  %v166 = vadd.f32 0.0, %v165
  %v167 = vpop.f32.mrf.mxu0
  %168 = vdwg.mxu0
  %v169 = vadd.f32 %v153, 1e-20
  %v170 = vrcp.pop %v169
  %v171 = vmul.f32 %v166, %v170
  %v172 = vld [vmem:[%s3] sm:$0xf]
  %174 = vset.pattern.permute.xlu0 0
  %175 = vperm.xlu0 %174, %v172
  %v176 = vpop.permute.xlu0 %175
  %v178 = vadd.f32 %v171, %v176
  %179 = vst [vmem:[%s5] sm:$0xf] %v178
  %v180 = vld [vmem:[%s4] sm:$0xf]
  %182 = vset.pattern.permute.xlu0 0
  %183 = vperm.xlu0 %182, %v180
  %v184 = vpop.permute.xlu0 %183
  %v186 = vmul.f32 %v153, %v184
  %187 = vst [vmem:[%s6] sm:$0xf] %v186
  // Predicated region
  $region22: #{nconv_cnn_forward.19} parent=0 // pred_check
    _
  $region23: #{nconv_cnn_forward.19} parent=0 // pred_check_branch
    %189 = sbr.rel (0) target = $region25
  $region24: #{nconv_cnn_forward.19} parent=0 // pred_region
    _
  $region25: #{nconv_cnn_forward.19} parent=0 // pred_fallthru
    _
  // Predicated region
  $region26: #{nconv_cnn_forward.19} parent=0 // pred_check
    _
  $region27: #{nconv_cnn_forward.19} parent=0 // pred_check_branch
    %191 = sbr.rel (0) target = $region29
  $region28: #{nconv_cnn_forward.19} parent=0 // pred_region
    _
  $region29: #{nconv_cnn_forward.19} parent=0 // pred_fallthru
    _
  // Predicated region
  $region30: #{nconv_cnn_forward.19} parent=0 // pred_check
    _
  $region31: #{nconv_cnn_forward.19} parent=0 // pred_check_branch
    %193 = sbr.rel (0) target = $region33
  $region32: #{nconv_cnn_forward.19} parent=0 // pred_region
    _
  $region33: #{nconv_cnn_forward.19} parent=0 // pred_fallthru
    _
  // Predicated region
  $region34: #{nconv_cnn_forward.19} parent=0 // pred_check
    _
  $region35: #{nconv_cnn_forward.19} parent=0 // pred_check_branch
    %195 = sbr.rel (0) target = $region37
  $region36: #{nconv_cnn_forward.19} parent=0 // pred_region
    _
  $region37: #{nconv_cnn_forward.19} parent=0 // pred_fallthru
    _

// kernel: nconv_cnn_forward.20
$region0: #{nconv_cnn_forward.20}
  #allocation0 [shape = 'u32[]', space=smem, size = 0x4, offset = 0x4, fixed_abs, tag = 'smem constant byte address 0x4 - core index']
  #allocation1 [shape = 'u32[72,128]{1,0:T(1,128)}', space=vmem, size = 0x9000, scoped, tag = 'internal scratch']
  %s0 = inlined_call_operand.vmem [shape: bf16[72,512], index: 0, kind: input, shape index: {}]
  %s1 = inlined_call_operand.vmem [shape: bf16[72,512], index: 1, kind: input, shape index: {}]
  %s2 = inlined_call_operand.vmem [shape: bf16[4,72], index: 2, kind: input, shape index: {}]
  %s3 = inlined_call_operand.vmem [shape: f32[4,1], index: 3, kind: input, shape index: {}]
  %s4 = inlined_call_operand.vmem [shape: f32[4,1], index: 4, kind: input, shape index: {}]
  %s5 = inlined_call_operand.vmem [shape: f32[4,512], index: 5, kind: output, shape index: {0}]
  %s6 = inlined_call_operand.vmem [shape: f32[4,512], index: 6, kind: output, shape index: {1}]
  %7 = xla_tuple %s5, %s6
  %s8 = sld [smem:[#allocation0]]
  $region137: #{nconv_cnn_forward.20} parent=0
    _
  %s10 = ssub.s32 1, %s8
  %s11 = scalar_select 0, %s10, %s8
  $region1: #{nconv_cnn_forward.20} parent=0
    #allocation2 [shape = 'u8[73728]{0}', space=vmem, size = 0x12000, scoped, tag = 'input window, operand 0']
    #allocation3 [shape = 'u8[73728]{0}', space=vmem, size = 0x12000, scoped, tag = 'input window, operand 1']
    loop: start=0, step=1, limit=4
    $region2: #{nconv_cnn_forward.20} parent=1 // loop_pre_header
      _
    $region3: #{nconv_cnn_forward.20} parent=1 // loop_header
      %s13 = sphi 0, %s17
      %p14 = scmp.ge.s32.totalorder %s13, 4
      %s23 = sphi 0, %s25
      %s26 = sphi 0, %s23
      %s27 = sphi 0, %s26
      %s43 = sphi 0, %s27
      %s49 = sphi 0, %s51
      %s52 = sphi 0, %s49
      %s53 = sphi 0, %s52
      %s69 = sphi 0, %s53
      %s73 = sphi 0, %s73
      %s75 = sphi 0, %s73
      %s76 = sphi 0, %s75
      %s90 = sphi 0, %s76
      %s94 = sphi 0, %s94
      %s96 = sphi 0, %s94
      %s97 = sphi 0, %s96
      %s111 = sphi 0, %s97
      %s115 = sphi 0, %s115
      %s117 = sphi 0, %s115
      %s118 = sphi 0, %s117
      %s132 = sphi 0, %s118
      %s138 = sphi 0, %s140
      %s141 = sphi 0, %s138
      %s142 = sphi 0, %s141
      %s158 = sphi 0, %s142
      %s164 = sphi 0, %s166
      %s167 = sphi 0, %s164
      %s168 = sphi 0, %s167
      %s184 = sphi 0, %s168
    $region4: #{nconv_cnn_forward.20} parent=1 // loop_header_branch
      %16 = sbr.rel (%p14) target = $region8
    $region5: #{nconv_cnn_forward.20} parent=1 // loop_body
      %s18 = ssub.s32 %s13, 1
      %s19 = ssub.s32 %s13, 2
      %s20 = sadd.s32 %s13, 1
      %s21 = ssub.s32 %s13, %s20
      %p22 = scmp.eq.s32.totalorder %s21, 0
      %s24 = sadd.s32 %s23, 1
      %s25 = scalar_select %p22, %s23, %s24
      %p28 = pneg %p22
      %p29 = scmp.eq.s32.totalorder %s13, 1
      %p30 = por %p28, %p29
      %p31 = scmp.ne.s32.totalorder %s23, %s26
      %p32 = scmp.eq.s32.totalorder %s13, 0
      %p33 = por %p31, %p32
      %p34 = scmp.ne.s32.totalorder %s23, %s26
      %p35 = scmp.eq.s32.totalorder %s18, 1
      %p36 = por %p34, %p35
      %p37 = scmp.ne.s32.totalorder %s26, %s27
      %p38 = scmp.eq.s32.totalorder %s18, 0
      %p39 = por %p37, %p38
      %p40 = scmp.ne.s32.totalorder %s26, %s27
      %p41 = scmp.eq.s32.totalorder %s19, 1
      %p42 = por %p40, %p41
      %p44 = scmp.ne.s32.totalorder %s27, %s43
      %p45 = scmp.eq.s32.totalorder %s19, 0
      %p46 = por %p44, %p45
      %s47 = ssub.s32 %s13, %s20
      %p48 = scmp.eq.s32.totalorder %s47, 0
      %s50 = sadd.s32 %s49, 1
      %s51 = scalar_select %p48, %s49, %s50
      %p54 = pneg %p48
      %p55 = scmp.eq.s32.totalorder %s13, 1
      %p56 = por %p54, %p55
      %p57 = scmp.ne.s32.totalorder %s49, %s52
      %p58 = scmp.eq.s32.totalorder %s13, 0
      %p59 = por %p57, %p58
      %p60 = scmp.ne.s32.totalorder %s49, %s52
      %p61 = scmp.eq.s32.totalorder %s18, 1
      %p62 = por %p60, %p61
      %p63 = scmp.ne.s32.totalorder %s52, %s53
      %p64 = scmp.eq.s32.totalorder %s18, 0
      %p65 = por %p63, %p64
      %p66 = scmp.ne.s32.totalorder %s52, %s53
      %p67 = scmp.eq.s32.totalorder %s19, 1
      %p68 = por %p66, %p67
      %p70 = scmp.ne.s32.totalorder %s53, %s69
      %p71 = scmp.eq.s32.totalorder %s19, 0
      %p72 = por %p70, %p71
      %s74 = sadd.s32 %s73, 1
      %p77 = scmp.eq.s32.totalorder %s13, 1
      %p78 = scmp.ne.s32.totalorder %s73, %s75
      %p79 = scmp.eq.s32.totalorder %s13, 0
      %p80 = por %p78, %p79
      %p81 = scmp.ne.s32.totalorder %s73, %s75
      %p82 = scmp.eq.s32.totalorder %s18, 1
      %p83 = por %p81, %p82
      %p84 = scmp.ne.s32.totalorder %s75, %s76
      %p85 = scmp.eq.s32.totalorder %s18, 0
      %p86 = por %p84, %p85
      %p87 = scmp.ne.s32.totalorder %s75, %s76
      %p88 = scmp.eq.s32.totalorder %s19, 1
      %p89 = por %p87, %p88
      %p91 = scmp.ne.s32.totalorder %s76, %s90
      %p92 = scmp.eq.s32.totalorder %s19, 0
      %p93 = por %p91, %p92
      %s95 = sadd.s32 %s94, 1
      %p98 = scmp.eq.s32.totalorder %s13, 1
      %p99 = scmp.ne.s32.totalorder %s94, %s96
      %p100 = scmp.eq.s32.totalorder %s13, 0
      %p101 = por %p99, %p100
      %p102 = scmp.ne.s32.totalorder %s94, %s96
      %p103 = scmp.eq.s32.totalorder %s18, 1
      %p104 = por %p102, %p103
      %p105 = scmp.ne.s32.totalorder %s96, %s97
      %p106 = scmp.eq.s32.totalorder %s18, 0
      %p107 = por %p105, %p106
      %p108 = scmp.ne.s32.totalorder %s96, %s97
      %p109 = scmp.eq.s32.totalorder %s19, 1
      %p110 = por %p108, %p109
      %p112 = scmp.ne.s32.totalorder %s97, %s111
      %p113 = scmp.eq.s32.totalorder %s19, 0
      %p114 = por %p112, %p113
      %s116 = sadd.s32 %s115, 1
      %p119 = scmp.eq.s32.totalorder %s13, 1
      %p120 = scmp.ne.s32.totalorder %s115, %s117
      %p121 = scmp.eq.s32.totalorder %s13, 0
      %p122 = por %p120, %p121
      %p123 = scmp.ne.s32.totalorder %s115, %s117
      %p124 = scmp.eq.s32.totalorder %s18, 1
      %p125 = por %p123, %p124
      %p126 = scmp.ne.s32.totalorder %s117, %s118
      %p127 = scmp.eq.s32.totalorder %s18, 0
      %p128 = por %p126, %p127
      %p129 = scmp.ne.s32.totalorder %s117, %s118
      %p130 = scmp.eq.s32.totalorder %s19, 1
      %p131 = por %p129, %p130
      %p133 = scmp.ne.s32.totalorder %s118, %s132
      %p134 = scmp.eq.s32.totalorder %s19, 0
      %p135 = por %p133, %p134
      %s136 = ssub.s32 %s13, %s20
      %p137 = scmp.eq.s32.totalorder %s136, 0
      %s139 = sadd.s32 %s138, 1
      %s140 = scalar_select %p137, %s138, %s139
      %p143 = pneg %p137
      %p144 = scmp.eq.s32.totalorder %s13, 1
      %p145 = por %p143, %p144
      %p146 = scmp.ne.s32.totalorder %s138, %s141
      %p147 = scmp.eq.s32.totalorder %s13, 0
      %p148 = por %p146, %p147
      %p149 = scmp.ne.s32.totalorder %s138, %s141
      %p150 = scmp.eq.s32.totalorder %s18, 1
      %p151 = por %p149, %p150
      %p152 = scmp.ne.s32.totalorder %s141, %s142
      %p153 = scmp.eq.s32.totalorder %s18, 0
      %p154 = por %p152, %p153
      %p155 = scmp.ne.s32.totalorder %s141, %s142
      %p156 = scmp.eq.s32.totalorder %s19, 1
      %p157 = por %p155, %p156
      %p159 = scmp.ne.s32.totalorder %s142, %s158
      %p160 = scmp.eq.s32.totalorder %s19, 0
      %p161 = por %p159, %p160
      %s162 = ssub.s32 %s13, %s20
      %p163 = scmp.eq.s32.totalorder %s162, 0
      %s165 = sadd.s32 %s164, 1
      %s166 = scalar_select %p163, %s164, %s165
      %p169 = pneg %p163
      %p170 = scmp.eq.s32.totalorder %s13, 1
      %p171 = por %p169, %p170
      %p172 = scmp.ne.s32.totalorder %s164, %s167
      %p173 = scmp.eq.s32.totalorder %s13, 0
      %p174 = por %p172, %p173
      %p175 = scmp.ne.s32.totalorder %s164, %s167
      %p176 = scmp.eq.s32.totalorder %s18, 1
      %p177 = por %p175, %p176
      %p178 = scmp.ne.s32.totalorder %s167, %s168
      %p179 = scmp.eq.s32.totalorder %s18, 0
      %p180 = por %p178, %p179
      %p181 = scmp.ne.s32.totalorder %s167, %s168
      %p182 = scmp.eq.s32.totalorder %s19, 1
      %p183 = por %p181, %p182
      %p185 = scmp.ne.s32.totalorder %s168, %s184
      %p186 = scmp.eq.s32.totalorder %s19, 0
      %p187 = por %p185, %p186
      %p188 = scmp.le.s32.totalorder 1, %s13
      %p189 = scmp.lt.s32.totalorder %s13, 3
      %p190 = pnand %p188, %p189
      %p191 = pneg %p190
      // Predicated region
      $region9: #{nconv_cnn_forward.20} parent=5 // pred_check
        _
      $region10: #{nconv_cnn_forward.20} parent=5 // pred_check_branch
        %193 = sbr.rel (%p190) target = $region12
      $region11: #{nconv_cnn_forward.20} parent=5 // pred_region
        %s194 = ssub.s32 %s13, 1
        // Predicated region
        $region13: #{nconv_cnn_forward.20} parent=11 // pred_check
          %p195 = pneg %p86
        $region14: #{nconv_cnn_forward.20} parent=11 // pred_check_branch
          %197 = sbr.rel (%p195) target = $region16
        $region15: #{nconv_cnn_forward.20} parent=11 // pred_region
          _
        $region16: #{nconv_cnn_forward.20} parent=11 // pred_fallthru
          _
        // Predicated region
        $region17: #{nconv_cnn_forward.20} parent=11 // pred_check
          %p198 = pneg %p107
        $region18: #{nconv_cnn_forward.20} parent=11 // pred_check_branch
          %200 = sbr.rel (%p198) target = $region20
        $region19: #{nconv_cnn_forward.20} parent=11 // pred_region
          _
        $region20: #{nconv_cnn_forward.20} parent=11 // pred_fallthru
          _
        // Predicated region
        $region21: #{nconv_cnn_forward.20} parent=11 // pred_check
          %p201 = pneg %p128
        $region22: #{nconv_cnn_forward.20} parent=11 // pred_check_branch
          %203 = sbr.rel (%p201) target = $region24
        $region23: #{nconv_cnn_forward.20} parent=11 // pred_region
          _
        $region24: #{nconv_cnn_forward.20} parent=11 // pred_fallthru
          _
      $region12: #{nconv_cnn_forward.20} parent=5 // pred_fallthru
        _
      %p204 = scmp.lt.s32.totalorder %s13, 2
      // Predicated region
      $region25: #{nconv_cnn_forward.20} parent=5 // pred_check
        %p205 = pneg %p204
      $region26: #{nconv_cnn_forward.20} parent=5 // pred_check_branch
        %207 = sbr.rel (%p205) target = $region28
      $region27: #{nconv_cnn_forward.20} parent=5 // pred_region
        // Predicated region
        $region29: #{nconv_cnn_forward.20} parent=27 // pred_check
          %p208 = pneg %p33
        $region30: #{nconv_cnn_forward.20} parent=27 // pred_check_branch
          %210 = sbr.rel (%p208) target = $region32
        $region31: #{nconv_cnn_forward.20} parent=27 // pred_region
          %s211 = sand.u32 %s23, 1
          %s212 = sand.u32 %s23, 1
          %s213 = smul.addr %s212, 72
          %s214 = scalar_lea.vmem [#allocation2], %s213
          %s215 = smul.u32 2, %s13
          %s216 = smul.addr %s215, 4
          %s217 = scalar_lea.vmem %s0, %s216
          // Predicated region
          $region33: #{nconv_cnn_forward.20} parent=31 // pred_check
            _
          $region34: #{nconv_cnn_forward.20} parent=31 // pred_check_branch
            %219 = sbr.rel (0) target = $region36
          $region35: #{nconv_cnn_forward.20} parent=31 // pred_region
            // Predicated region
            $region37: #{nconv_cnn_forward.20} parent=35 // pred_check
              _
            $region38: #{nconv_cnn_forward.20} parent=35 // pred_check_branch
              %221 = sbr.rel (0) target = $region40
            $region39: #{nconv_cnn_forward.20} parent=35 // pred_region
              // Predicated region
              $region52: #{nconv_cnn_forward.20} parent=39 // pred_check
                _
              $region53: #{nconv_cnn_forward.20} parent=39 // pred_check_branch
                %253 = sbr.rel (0) target = $region55
              $region54: #{nconv_cnn_forward.20} parent=39 // pred_region
                loop: start=0, step=1, limit=1
                $region56: #{nconv_cnn_forward.20} parent=54 // loop_pre_header
                  _
                $region57: #{nconv_cnn_forward.20} parent=54 // loop_header
                  %s255 = sphi 0, %s259
                  %p256 = scmp.ge.s32.totalorder %s255, 1
                  %s260 = sphi %s217, %s217
                  %s261 = sphi %s214, %s214
                $region58: #{nconv_cnn_forward.20} parent=54 // loop_header_branch
                  %258 = sbr.rel (%p256) target = $region62
                $region59: #{nconv_cnn_forward.20} parent=54 // loop_body
                  %v262 = vld [vmem:[%s260] sm:$0xff]
                  %263 = vst [vmem:[%s261] sm:$0xff] %v262
                  %v264 = vld [vmem:[%s260 + $0x10] sm:$0xff]
                  %265 = vst [vmem:[%s261 + $0x8] sm:$0xff] %v264
                  %v266 = vld [vmem:[%s260 + $0x20] sm:$0xff]
                  %267 = vst [vmem:[%s261 + $0x10] sm:$0xff] %v266
                  %v268 = vld [vmem:[%s260 + $0x30] sm:$0xff]
                  %269 = vst [vmem:[%s261 + $0x18] sm:$0xff] %v268
                  %v270 = vld [vmem:[%s260 + $0x40] sm:$0xff]
                  %271 = vst [vmem:[%s261 + $0x20] sm:$0xff] %v270
                  %v272 = vld [vmem:[%s260 + $0x50] sm:$0xff]
                  %273 = vst [vmem:[%s261 + $0x28] sm:$0xff] %v272
                  %v274 = vld [vmem:[%s260 + $0x60] sm:$0xff]
                  %275 = vst [vmem:[%s261 + $0x30] sm:$0xff] %v274
                  %v276 = vld [vmem:[%s260 + $0x70] sm:$0xff]
                  %277 = vst [vmem:[%s261 + $0x38] sm:$0xff] %v276
                  %v278 = vld [vmem:[%s260 + $0x80] sm:$0xff]
                  %279 = vst [vmem:[%s261 + $0x40] sm:$0xff] %v278
                $region60: #{nconv_cnn_forward.20} parent=54 // loop_footer
                  %s259 = sadd.s32 1, %s255
                $region61: #{nconv_cnn_forward.20} parent=54 // loop_footer_branch
                  %254 = sbr.rel target = $region57
                $region62: #{nconv_cnn_forward.20} parent=54 // loop_exit
                  _
              $region55: #{nconv_cnn_forward.20} parent=39 // pred_fallthru
                _
              // Predicated region
              $region63: #{nconv_cnn_forward.20} parent=39 // pred_check
                _
              $region64: #{nconv_cnn_forward.20} parent=39 // pred_check_branch
                %281 = sbr.rel target = $region66
              $region65: #{nconv_cnn_forward.20} parent=39 // pred_region
                _
              $region66: #{nconv_cnn_forward.20} parent=39 // pred_fallthru
                _
            $region40: #{nconv_cnn_forward.20} parent=35 // pred_fallthru
              _
            // Predicated region
            $region41: #{nconv_cnn_forward.20} parent=35 // pred_check
              _
            $region42: #{nconv_cnn_forward.20} parent=35 // pred_check_branch
              %223 = sbr.rel target = $region44
            $region43: #{nconv_cnn_forward.20} parent=35 // pred_region
              %s225 = ssub.s32 256, 1
              loop: start=0, step=1, limit=1
              $region45: #{nconv_cnn_forward.20} parent=43 // loop_pre_header
                _
              $region46: #{nconv_cnn_forward.20} parent=43 // loop_header
                %s227 = sphi 0, %s231
                %p228 = scmp.ge.s32.totalorder %s227, 1
                %s232 = sphi %s217, %s217
                %s233 = sphi %s214, %s214
              $region47: #{nconv_cnn_forward.20} parent=43 // loop_header_branch
                %230 = sbr.rel (%p228) target = $region51
              $region48: #{nconv_cnn_forward.20} parent=43 // loop_body
                %v234 = vld [vmem:[%s232] sm:%s225]
                %235 = vst [vmem:[%s233] sm:%s225] %v234
                %v236 = vld [vmem:[%s232 + $0x10] sm:%s225]
                %237 = vst [vmem:[%s233 + $0x8] sm:%s225] %v236
                %v238 = vld [vmem:[%s232 + $0x20] sm:%s225]
                %239 = vst [vmem:[%s233 + $0x10] sm:%s225] %v238
                %v240 = vld [vmem:[%s232 + $0x30] sm:%s225]
                %241 = vst [vmem:[%s233 + $0x18] sm:%s225] %v240
                %v242 = vld [vmem:[%s232 + $0x40] sm:%s225]
                %243 = vst [vmem:[%s233 + $0x20] sm:%s225] %v242
                %v244 = vld [vmem:[%s232 + $0x50] sm:%s225]
                %245 = vst [vmem:[%s233 + $0x28] sm:%s225] %v244
                %v246 = vld [vmem:[%s232 + $0x60] sm:%s225]
                %247 = vst [vmem:[%s233 + $0x30] sm:%s225] %v246
                %v248 = vld [vmem:[%s232 + $0x70] sm:%s225]
                %249 = vst [vmem:[%s233 + $0x38] sm:%s225] %v248
                %v250 = vld [vmem:[%s232 + $0x80] sm:%s225]
                %251 = vst [vmem:[%s233 + $0x40] sm:%s225] %v250
              $region49: #{nconv_cnn_forward.20} parent=43 // loop_footer
                %s231 = sadd.s32 1, %s227
              $region50: #{nconv_cnn_forward.20} parent=43 // loop_footer_branch
                %226 = sbr.rel target = $region46
              $region51: #{nconv_cnn_forward.20} parent=43 // loop_exit
                _
            $region44: #{nconv_cnn_forward.20} parent=35 // pred_fallthru
              _
          $region36: #{nconv_cnn_forward.20} parent=31 // pred_fallthru
            _
          %282 = vnop
        $region32: #{nconv_cnn_forward.20} parent=27 // pred_fallthru
          _
        // Predicated region
        $region67: #{nconv_cnn_forward.20} parent=27 // pred_check
          %p283 = pneg %p59
        $region68: #{nconv_cnn_forward.20} parent=27 // pred_check_branch
          %285 = sbr.rel (%p283) target = $region70
        $region69: #{nconv_cnn_forward.20} parent=27 // pred_region
          %s286 = sand.u32 %s49, 1
          %s287 = sand.u32 %s49, 1
          %s288 = smul.addr %s287, 72
          %s289 = scalar_lea.vmem [#allocation3], %s288
          %s290 = smul.u32 2, %s13
          %s291 = smul.addr %s290, 4
          %s292 = scalar_lea.vmem %s1, %s291
          // Predicated region
          $region71: #{nconv_cnn_forward.20} parent=69 // pred_check
            _
          $region72: #{nconv_cnn_forward.20} parent=69 // pred_check_branch
            %294 = sbr.rel (0) target = $region74
          $region73: #{nconv_cnn_forward.20} parent=69 // pred_region
            // Predicated region
            $region75: #{nconv_cnn_forward.20} parent=73 // pred_check
              _
            $region76: #{nconv_cnn_forward.20} parent=73 // pred_check_branch
              %296 = sbr.rel (0) target = $region78
            $region77: #{nconv_cnn_forward.20} parent=73 // pred_region
              // Predicated region
              $region90: #{nconv_cnn_forward.20} parent=77 // pred_check
                _
              $region91: #{nconv_cnn_forward.20} parent=77 // pred_check_branch
                %328 = sbr.rel (0) target = $region93
              $region92: #{nconv_cnn_forward.20} parent=77 // pred_region
                loop: start=0, step=1, limit=1
                $region94: #{nconv_cnn_forward.20} parent=92 // loop_pre_header
                  _
                $region95: #{nconv_cnn_forward.20} parent=92 // loop_header
                  %s330 = sphi 0, %s334
                  %p331 = scmp.ge.s32.totalorder %s330, 1
                  %s335 = sphi %s292, %s292
                  %s336 = sphi %s289, %s289
                $region96: #{nconv_cnn_forward.20} parent=92 // loop_header_branch
                  %333 = sbr.rel (%p331) target = $region100
                $region97: #{nconv_cnn_forward.20} parent=92 // loop_body
                  %v337 = vld [vmem:[%s335] sm:$0xff]
                  %338 = vst [vmem:[%s336] sm:$0xff] %v337
                  %v339 = vld [vmem:[%s335 + $0x10] sm:$0xff]
                  %340 = vst [vmem:[%s336 + $0x8] sm:$0xff] %v339
                  %v341 = vld [vmem:[%s335 + $0x20] sm:$0xff]
                  %342 = vst [vmem:[%s336 + $0x10] sm:$0xff] %v341
                  %v343 = vld [vmem:[%s335 + $0x30] sm:$0xff]
                  %344 = vst [vmem:[%s336 + $0x18] sm:$0xff] %v343
                  %v345 = vld [vmem:[%s335 + $0x40] sm:$0xff]
                  %346 = vst [vmem:[%s336 + $0x20] sm:$0xff] %v345
                  %v347 = vld [vmem:[%s335 + $0x50] sm:$0xff]
                  %348 = vst [vmem:[%s336 + $0x28] sm:$0xff] %v347
                  %v349 = vld [vmem:[%s335 + $0x60] sm:$0xff]
                  %350 = vst [vmem:[%s336 + $0x30] sm:$0xff] %v349
                  %v351 = vld [vmem:[%s335 + $0x70] sm:$0xff]
                  %352 = vst [vmem:[%s336 + $0x38] sm:$0xff] %v351
                  %v353 = vld [vmem:[%s335 + $0x80] sm:$0xff]
                  %354 = vst [vmem:[%s336 + $0x40] sm:$0xff] %v353
                $region98: #{nconv_cnn_forward.20} parent=92 // loop_footer
                  %s334 = sadd.s32 1, %s330
                $region99: #{nconv_cnn_forward.20} parent=92 // loop_footer_branch
                  %329 = sbr.rel target = $region95
                $region100: #{nconv_cnn_forward.20} parent=92 // loop_exit
                  _
              $region93: #{nconv_cnn_forward.20} parent=77 // pred_fallthru
                _
              // Predicated region
              $region101: #{nconv_cnn_forward.20} parent=77 // pred_check
                _
              $region102: #{nconv_cnn_forward.20} parent=77 // pred_check_branch
                %356 = sbr.rel target = $region104
              $region103: #{nconv_cnn_forward.20} parent=77 // pred_region
                _
              $region104: #{nconv_cnn_forward.20} parent=77 // pred_fallthru
                _
            $region78: #{nconv_cnn_forward.20} parent=73 // pred_fallthru
              _
            // Predicated region
            $region79: #{nconv_cnn_forward.20} parent=73 // pred_check
              _
            $region80: #{nconv_cnn_forward.20} parent=73 // pred_check_branch
              %298 = sbr.rel target = $region82
            $region81: #{nconv_cnn_forward.20} parent=73 // pred_region
              %s300 = ssub.s32 256, 1
              loop: start=0, step=1, limit=1
              $region83: #{nconv_cnn_forward.20} parent=81 // loop_pre_header
                _
              $region84: #{nconv_cnn_forward.20} parent=81 // loop_header
                %s302 = sphi 0, %s306
                %p303 = scmp.ge.s32.totalorder %s302, 1
                %s307 = sphi %s292, %s292
                %s308 = sphi %s289, %s289
              $region85: #{nconv_cnn_forward.20} parent=81 // loop_header_branch
                %305 = sbr.rel (%p303) target = $region89
              $region86: #{nconv_cnn_forward.20} parent=81 // loop_body
                %v309 = vld [vmem:[%s307] sm:%s300]
                %310 = vst [vmem:[%s308] sm:%s300] %v309
                %v311 = vld [vmem:[%s307 + $0x10] sm:%s300]
                %312 = vst [vmem:[%s308 + $0x8] sm:%s300] %v311
                %v313 = vld [vmem:[%s307 + $0x20] sm:%s300]
                %314 = vst [vmem:[%s308 + $0x10] sm:%s300] %v313
                %v315 = vld [vmem:[%s307 + $0x30] sm:%s300]
                %316 = vst [vmem:[%s308 + $0x18] sm:%s300] %v315
                %v317 = vld [vmem:[%s307 + $0x40] sm:%s300]
                %318 = vst [vmem:[%s308 + $0x20] sm:%s300] %v317
                %v319 = vld [vmem:[%s307 + $0x50] sm:%s300]
                %320 = vst [vmem:[%s308 + $0x28] sm:%s300] %v319
                %v321 = vld [vmem:[%s307 + $0x60] sm:%s300]
                %322 = vst [vmem:[%s308 + $0x30] sm:%s300] %v321
                %v323 = vld [vmem:[%s307 + $0x70] sm:%s300]
                %324 = vst [vmem:[%s308 + $0x38] sm:%s300] %v323
                %v325 = vld [vmem:[%s307 + $0x80] sm:%s300]
                %326 = vst [vmem:[%s308 + $0x40] sm:%s300] %v325
              $region87: #{nconv_cnn_forward.20} parent=81 // loop_footer
                %s306 = sadd.s32 1, %s302
              $region88: #{nconv_cnn_forward.20} parent=81 // loop_footer_branch
                %301 = sbr.rel target = $region84
              $region89: #{nconv_cnn_forward.20} parent=81 // loop_exit
                _
            $region82: #{nconv_cnn_forward.20} parent=73 // pred_fallthru
              _
          $region74: #{nconv_cnn_forward.20} parent=69 // pred_fallthru
            _
          %357 = vnop
        $region70: #{nconv_cnn_forward.20} parent=27 // pred_fallthru
          _
      $region28: #{nconv_cnn_forward.20} parent=5 // pred_fallthru
        _
      %p358 = scmp.le.s32.totalorder 1, %s13
      %p359 = scmp.lt.s32.totalorder %s13, 3
      %p360 = pnand %p358, %p359
      %p361 = pneg %p360
      // Predicated region
      $region105: #{nconv_cnn_forward.20} parent=5 // pred_check
        _
      $region106: #{nconv_cnn_forward.20} parent=5 // pred_check_branch
        %363 = sbr.rel (%p360) target = $region108
      $region107: #{nconv_cnn_forward.20} parent=5 // pred_region
        %s364 = ssub.s32 %s13, 1
        %s365 = sand.u32 %s26, 1
        %s366 = sand.u32 %s26, 1
        %s367 = smul.addr %s366, 72
        %s368 = scalar_lea.vmem [#allocation2], %s367
        // Predicated region
        $region109: #{nconv_cnn_forward.20} parent=107 // pred_check
          %p369 = pneg %p39
        $region110: #{nconv_cnn_forward.20} parent=107 // pred_check_branch
          %371 = sbr.rel (%p369) target = $region112
        $region111: #{nconv_cnn_forward.20} parent=107 // pred_region
          _
        $region112: #{nconv_cnn_forward.20} parent=107 // pred_fallthru
          _
        %s372 = sand.u32 %s52, 1
        %s373 = sand.u32 %s52, 1
        %s374 = smul.addr %s373, 72
        %s375 = scalar_lea.vmem [#allocation3], %s374
        // Predicated region
        $region113: #{nconv_cnn_forward.20} parent=107 // pred_check
          %p376 = pneg %p65
        $region114: #{nconv_cnn_forward.20} parent=107 // pred_check_branch
          %378 = sbr.rel (%p376) target = $region116
        $region115: #{nconv_cnn_forward.20} parent=107 // pred_region
          _
        $region116: #{nconv_cnn_forward.20} parent=107 // pred_fallthru
          _
        %s379 = sand.u32 %s26, 1
        %s380 = sand.u32 %s26, 1
        %s381 = smul.addr %s380, 72
        %s382 = scalar_lea.vmem [#allocation2], %s381
        %p383 = pneg %p39
        %p384 = pneg %p36
        %s385 = sand.u32 %s52, 1
        %s386 = sand.u32 %s52, 1
        %s387 = smul.addr %s386, 72
        %s388 = scalar_lea.vmem [#allocation3], %s387
        %p389 = pneg %p65
        %p390 = pneg %p62
        %p391 = pneg %p86
        %p392 = pneg %p83
        %p393 = pneg %p107
        %p394 = pneg %p104
        %p395 = pneg %p128
        %p396 = pneg %p125
        %p397 = pneg %p154
        %p398 = pneg %p151
        %s399 = smul.u32 2, %s18
        %p400 = scmp.lt.s32.totalorder %s399, 3
        %s401 = scalar_select %p400, %s399, 3
        %s402 = smul.addr %s401, 4
        %s403 = scalar_lea.vmem %s5, %s402
        %p404 = pneg %p180
        %p405 = pneg %p177
        %s406 = smul.u32 2, %s18
        %p407 = scmp.lt.s32.totalorder %s406, 3
        %s408 = scalar_select %p407, %s406, 3
        %s409 = smul.addr %s408, 4
        %s410 = scalar_lea.vmem %s6, %s409
        %s411 = smul.u32 2, %s18
        %s412 = smul.u32 2, %s18
        %s413 = smul.u32 2, %s18
        %p414 = scmp.lt.s32.totalorder %s413, 3
        %s415 = scalar_select %p414, %s413, 3
        %s416 = smul.addr %s415, 4
        %s417 = scalar_lea.vmem %s5, %s416
        %s418 = smul.u32 2, %s18
        %s419 = smul.u32 2, %s18
        %p420 = scmp.lt.s32.totalorder %s419, 3
        %s421 = scalar_select %p420, %s419, 3
        %s422 = smul.addr %s421, 4
        %s423 = scalar_lea.vmem %s6, %s422
        %s424 = smul.u32 2, %s18
        %v426 = vld [vmem:[%s368] sm:$0xff]
        %v427 = vld [vmem:[%s368 + $0x8] sm:$0xff]
        %v428 = vld [vmem:[%s368 + $0x10] sm:$0xff]
        %v429 = vld [vmem:[%s368 + $0x18] sm:$0xff]
        %v430 = vld [vmem:[%s368 + $0x20] sm:$0xff]
        %v431 = vld [vmem:[%s368 + $0x28] sm:$0xff]
        %v432 = vld [vmem:[%s368 + $0x30] sm:$0xff]
        %v433 = vld [vmem:[%s368 + $0x38] sm:$0xff]
        %v434 = vld [vmem:[%s368 + $0x40] sm:$0xff]
        %v435 = vld [vmem:[%s375] sm:$0xff]
        %v436 = vld [vmem:[%s375 + $0x8] sm:$0xff]
        %v437 = vld [vmem:[%s375 + $0x10] sm:$0xff]
        %v438 = vld [vmem:[%s375 + $0x18] sm:$0xff]
        %v439 = vld [vmem:[%s375 + $0x20] sm:$0xff]
        %v440 = vld [vmem:[%s375 + $0x28] sm:$0xff]
        %v441 = vld [vmem:[%s375 + $0x30] sm:$0xff]
        %v442 = vld [vmem:[%s375 + $0x38] sm:$0xff]
        %v443 = vld [vmem:[%s375 + $0x40] sm:$0xff]
        %v444 = vld [vmem:[%s2] sm:$0x3]
        %v445 = vunpack.c.l.bf16 %v426
        %v446 = vunpack.c.h.bf16 %v426
        %v447 = vunpack.c.l.bf16 %v427
        %v448 = vunpack.c.h.bf16 %v427
        %v449 = vunpack.c.l.bf16 %v428
        %v450 = vunpack.c.h.bf16 %v428
        %v451 = vunpack.c.l.bf16 %v429
        %v452 = vunpack.c.h.bf16 %v429
        %v453 = vunpack.c.l.bf16 %v430
        %v454 = vunpack.c.h.bf16 %v430
        %v455 = vunpack.c.l.bf16 %v431
        %v456 = vunpack.c.h.bf16 %v431
        %v457 = vunpack.c.l.bf16 %v432
        %v458 = vunpack.c.h.bf16 %v432
        %v459 = vunpack.c.l.bf16 %v433
        %v460 = vunpack.c.h.bf16 %v433
        %v461 = vunpack.c.l.bf16 %v434
        %v462 = vunpack.c.h.bf16 %v434
        %v463 = vunpack.c.l.bf16 %v435
        %v464 = vunpack.c.h.bf16 %v435
        %v465 = vunpack.c.l.bf16 %v436
        %v466 = vunpack.c.h.bf16 %v436
        %v467 = vunpack.c.l.bf16 %v437
        %v468 = vunpack.c.h.bf16 %v437
        %v469 = vunpack.c.l.bf16 %v438
        %v470 = vunpack.c.h.bf16 %v438
        %v471 = vunpack.c.l.bf16 %v439
        %v472 = vunpack.c.h.bf16 %v439
        %v473 = vunpack.c.l.bf16 %v440
        %v474 = vunpack.c.h.bf16 %v440
        %v475 = vunpack.c.l.bf16 %v441
        %v476 = vunpack.c.h.bf16 %v441
        %v477 = vunpack.c.l.bf16 %v442
        %v478 = vunpack.c.h.bf16 %v442
        %v479 = vunpack.c.l.bf16 %v443
        %v480 = vunpack.c.h.bf16 %v443
        %v481 = vmul.f32 %v445, %v463
        %v482 = vmul.f32 %v446, %v464
        %v483 = vmul.f32 %v447, %v465
        %v484 = vmul.f32 %v448, %v466
        %v485 = vmul.f32 %v449, %v467
        %v486 = vmul.f32 %v450, %v468
        %v487 = vmul.f32 %v451, %v469
        %v488 = vmul.f32 %v452, %v470
        %v489 = vmul.f32 %v453, %v471
        %v490 = vmul.f32 %v454, %v472
        %v491 = vmul.f32 %v455, %v473
        %v492 = vmul.f32 %v456, %v474
        %v493 = vmul.f32 %v457, %v475
        %v494 = vmul.f32 %v458, %v476
        %v495 = vmul.f32 %v459, %v477
        %v496 = vmul.f32 %v460, %v478
        %v497 = vmul.f32 %v461, %v479
        %v498 = vmul.f32 %v462, %v480
        %v499 = vpack.c.bf16 %v482, %v481
        %v500 = vpack.c.bf16 %v484, %v483
        %v501 = vpack.c.bf16 %v486, %v485
        %v502 = vpack.c.bf16 %v488, %v487
        %v503 = vpack.c.bf16 %v490, %v489
        %v504 = vpack.c.bf16 %v492, %v491
        %v505 = vpack.c.bf16 %v494, %v493
        %v506 = vpack.c.bf16 %v496, %v495
        %v507 = vpack.c.bf16 %v498, %v497
        %v517 = vunpack.c.l.b16 %v435
        %v518 = vunpack.c.h.b16 %v435
        %v519 = vunpack.c.l.b16 %v436
        %v520 = vunpack.c.h.b16 %v436
        %v521 = vunpack.c.l.b16 %v437
        %v522 = vunpack.c.h.b16 %v437
        %v523 = vunpack.c.l.b16 %v438
        %v524 = vunpack.c.h.b16 %v438
        %v525 = vunpack.c.l.b16 %v439
        %v526 = vunpack.c.h.b16 %v439
        %v527 = vunpack.c.l.b16 %v440
        %v528 = vunpack.c.h.b16 %v440
        %v529 = vunpack.c.l.b16 %v441
        %v530 = vunpack.c.h.b16 %v441
        %v531 = vunpack.c.l.b16 %v442
        %v532 = vunpack.c.h.b16 %v442
        %v533 = vunpack.c.l.b16 %v443
        %v534 = vunpack.c.h.b16 %v443
        %v535 = vpack.c.b16 %v519, %v517
        %v536 = vpack.c.b16 %v520, %v518
        %v537 = vpack.c.b16 %v523, %v521
        %v538 = vpack.c.b16 %v524, %v522
        %v539 = vpack.c.b16 %v527, %v525
        %v540 = vpack.c.b16 %v528, %v526
        %v541 = vpack.c.b16 %v531, %v529
        %v542 = vpack.c.b16 %v532, %v530
        %v543 = vpack.c.b16 %v533, %v533
        %v544 = vpack.c.b16 %v534, %v534
        %v562 = vunpack.c.l.b16 %v499
        %v563 = vunpack.c.h.b16 %v499
        %v564 = vunpack.c.l.b16 %v500
        %v565 = vunpack.c.h.b16 %v500
        %v566 = vunpack.c.l.b16 %v501
        %v567 = vunpack.c.h.b16 %v501
        %v568 = vunpack.c.l.b16 %v502
        %v569 = vunpack.c.h.b16 %v502
        %v570 = vunpack.c.l.b16 %v503
        %v571 = vunpack.c.h.b16 %v503
        %v572 = vunpack.c.l.b16 %v504
        %v573 = vunpack.c.h.b16 %v504
        %v574 = vunpack.c.l.b16 %v505
        %v575 = vunpack.c.h.b16 %v505
        %v576 = vunpack.c.l.b16 %v506
        %v577 = vunpack.c.h.b16 %v506
        %v578 = vunpack.c.l.b16 %v507
        %v579 = vunpack.c.h.b16 %v507
        %v580 = vpack.c.b16 %v564, %v562
        %v581 = vpack.c.b16 %v565, %v563
        %v582 = vpack.c.b16 %v568, %v566
        %v583 = vpack.c.b16 %v569, %v567
        %v584 = vpack.c.b16 %v572, %v570
        %v585 = vpack.c.b16 %v573, %v571
        %v586 = vpack.c.b16 %v576, %v574
        %v587 = vpack.c.b16 %v577, %v575
        %v588 = vpack.c.b16 %v578, %v578
        %v589 = vpack.c.b16 %v579, %v579
        %vm598 = vcmask 588800
        %v600 = vsel %vm598, %v444, 0
        %vm602 = vcmask 1043456
        %v604 = vsel %vm602, %v543, 0
        %v607 = vsel %vm602, %v544, 0
        %v610 = vsel %vm602, %v588, 0
        %v613 = vsel %vm602, %v589, 0
        %615 = vmatpush.bf16.msra.mxu0 0
        %616 = vmatpush.bf16.msra.mxu0 0
        %617 = vmatpush.bf16.msra.mxu0 0
        %618 = vmatpush.bf16.msra.mxu0 %v604
        %619 = vmatpush.bf16.msra.mxu0 %v541
        %620 = vmatpush.bf16.msra.mxu0 %v539
        %621 = vmatpush.bf16.msra.mxu0 %v537
        %622 = vmatpush.bf16.msra.mxu0 %v535
        %623 = vmatmul.bf16.gmra.mxu0 %v600
        %v624 = vpop.f32.mrf.mxu0
        %v625 = vadd.f32 0.0, %v624
        %v626 = vpop.f32.mrf.mxu0
        %627 = vdwg.mxu0
        %628 = vmatpush.bf16.msra.mxu0 0
        %629 = vmatpush.bf16.msra.mxu0 0
        %630 = vmatpush.bf16.msra.mxu0 0
        %631 = vmatpush.bf16.msra.mxu0 %v607
        %632 = vmatpush.bf16.msra.mxu0 %v542
        %633 = vmatpush.bf16.msra.mxu0 %v540
        %634 = vmatpush.bf16.msra.mxu0 %v538
        %635 = vmatpush.bf16.msra.mxu0 %v536
        %636 = vmatmul.bf16.gmra.mxu0 %v600
        %v637 = vpop.f32.mrf.mxu0
        %v638 = vadd.f32 0.0, %v637
        %v639 = vpop.f32.mrf.mxu0
        %640 = vdwg.mxu0
        %641 = vmatpush.bf16.msra.mxu0 0
        %642 = vmatpush.bf16.msra.mxu0 0
        %643 = vmatpush.bf16.msra.mxu0 0
        %644 = vmatpush.bf16.msra.mxu0 %v610
        %645 = vmatpush.bf16.msra.mxu0 %v586
        %646 = vmatpush.bf16.msra.mxu0 %v584
        %647 = vmatpush.bf16.msra.mxu0 %v582
        %648 = vmatpush.bf16.msra.mxu0 %v580
        %649 = vmatmul.bf16.gmra.mxu0 %v600
        %v650 = vpop.f32.mrf.mxu0
        %v651 = vadd.f32 0.0, %v650
        %v652 = vpop.f32.mrf.mxu0
        %653 = vdwg.mxu0
        %654 = vmatpush.bf16.msra.mxu0 0
        %655 = vmatpush.bf16.msra.mxu0 0
        %656 = vmatpush.bf16.msra.mxu0 0
        %657 = vmatpush.bf16.msra.mxu0 %v613
        %658 = vmatpush.bf16.msra.mxu0 %v587
        %659 = vmatpush.bf16.msra.mxu0 %v585
        %660 = vmatpush.bf16.msra.mxu0 %v583
        %661 = vmatpush.bf16.msra.mxu0 %v581
        %662 = vmatmul.bf16.gmra.mxu0 %v600
        %v663 = vpop.f32.mrf.mxu0
        %v664 = vadd.f32 0.0, %v663
        %v665 = vpop.f32.mrf.mxu0
        %666 = vdwg.mxu0
        %v667 = vadd.f32 %v625, 1e-20
        %v668 = vadd.f32 %v638, 1e-20
        %v669 = vrcp.pop %v667
        %v670 = vrcp.pop %v668
        %v671 = vmul.f32 %v651, %v669
        %v672 = vmul.f32 %v664, %v670
        %v673 = vld [vmem:[%s3] sm:$0xf]
        %675 = vset.pattern.permute.xlu0 0
        %676 = vperm.xlu0 %675, %v673
        %v677 = vpop.permute.xlu0 %676
        %v679 = vadd.f32 %v671, %v677
        %v680 = vadd.f32 %v672, %v677
        %v683 = vrot.slane %v680, 4
        %v684 = vsel %vm602, %v679, %v683
        %686 = vst [vmem:[%s417] sm:$0xff] %v684
        %v687 = vld [vmem:[%s4] sm:$0xf]
        %689 = vset.pattern.permute.xlu0 0
        %690 = vperm.xlu0 %689, %v687
        %v691 = vpop.permute.xlu0 %690
        %v693 = vmul.f32 %v625, %v691
        %v694 = vmul.f32 %v638, %v691
        %v697 = vrot.slane %v694, 4
        %v698 = vsel %vm602, %v693, %v697
        %700 = vst [vmem:[%s423] sm:$0xff] %v698
        %s701 = smul.u32 2, %s18
        %p702 = scmp.lt.s32.totalorder %s701, 3
        %s703 = scalar_select %p702, %s701, 3
        %s704 = smul.addr %s703, 4
        %s705 = scalar_lea.vmem %s5, %s704
        %s706 = smul.u32 2, %s18
        %p707 = scmp.lt.s32.totalorder %s706, 3
        %s708 = scalar_select %p707, %s706, 3
        %s709 = smul.addr %s708, 4
        %s710 = scalar_lea.vmem %s6, %s709
        // Predicated region
        $region117: #{nconv_cnn_forward.20} parent=107 // pred_check
          %p711 = pneg %p151
        $region118: #{nconv_cnn_forward.20} parent=107 // pred_check_branch
          %713 = sbr.rel (%p711) target = $region120
        $region119: #{nconv_cnn_forward.20} parent=107 // pred_region
          %s714 = smul.u32 2, %s18
        $region120: #{nconv_cnn_forward.20} parent=107 // pred_fallthru
          _
        // Predicated region
        $region121: #{nconv_cnn_forward.20} parent=107 // pred_check
          %p715 = pneg %p177
        $region122: #{nconv_cnn_forward.20} parent=107 // pred_check_branch
          %717 = sbr.rel (%p715) target = $region124
        $region123: #{nconv_cnn_forward.20} parent=107 // pred_region
          %s718 = smul.u32 2, %s18
        $region124: #{nconv_cnn_forward.20} parent=107 // pred_fallthru
          _
      $region108: #{nconv_cnn_forward.20} parent=5 // pred_fallthru
        _
      %p719 = scmp.le.s32.totalorder 2, %s13
      // Predicated region
      $region125: #{nconv_cnn_forward.20} parent=5 // pred_check
        %p720 = pneg %p719
      $region126: #{nconv_cnn_forward.20} parent=5 // pred_check_branch
        %722 = sbr.rel (%p720) target = $region128
      $region127: #{nconv_cnn_forward.20} parent=5 // pred_region
        %s723 = ssub.s32 %s13, 2
        // Predicated region
        $region129: #{nconv_cnn_forward.20} parent=127 // pred_check
          %p724 = pneg %p157
        $region130: #{nconv_cnn_forward.20} parent=127 // pred_check_branch
          %726 = sbr.rel (%p724) target = $region132
        $region131: #{nconv_cnn_forward.20} parent=127 // pred_region
          %s727 = smul.u32 2, %s19
          %p728 = scmp.lt.s32.totalorder %s727, 3
          %s729 = scalar_select %p728, %s727, 3
          %s730 = smul.addr %s729, 4
          %s731 = scalar_lea.vmem %s5, %s730
        $region132: #{nconv_cnn_forward.20} parent=127 // pred_fallthru
          _
        // Predicated region
        $region133: #{nconv_cnn_forward.20} parent=127 // pred_check
          %p732 = pneg %p183
        $region134: #{nconv_cnn_forward.20} parent=127 // pred_check_branch
          %734 = sbr.rel (%p732) target = $region136
        $region135: #{nconv_cnn_forward.20} parent=127 // pred_region
          %s735 = smul.u32 2, %s19
          %p736 = scmp.lt.s32.totalorder %s735, 3
          %s737 = scalar_select %p736, %s735, 3
          %s738 = smul.addr %s737, 4
          %s739 = scalar_lea.vmem %s6, %s738
        $region136: #{nconv_cnn_forward.20} parent=127 // pred_fallthru
          _
      $region128: #{nconv_cnn_forward.20} parent=5 // pred_fallthru
        _
    $region6: #{nconv_cnn_forward.20} parent=1 // loop_footer
      %s17 = sadd.s32 1, %s13
    $region7: #{nconv_cnn_forward.20} parent=1 // loop_footer_branch
      %12 = sbr.rel target = $region3
    $region8: #{nconv_cnn_forward.20} parent=1 // loop_exit
      _

// kernel: nconv_cnn_forward.21
$region0: #{nconv_cnn_forward.21}
  #allocation0 [shape = 'u32[]', space=smem, size = 0x4, offset = 0x4, fixed_abs, tag = 'smem constant byte address 0x4 - core index']
  #allocation1 [shape = 'u32[72,128]{1,0:T(1,128)}', space=vmem, size = 0x9000, scoped, tag = 'internal scratch']
  #allocation2 [shape = 'f32[1,1]{1,0:T(1,128)S(1)}', space=vmem, size = 0x200, scoped, tag = 'scoped memory for nconv_cnn_forward.21']
  #allocation3 [shape = 'f32[1,1]{1,0:T(1,128)S(1)}', space=vmem, size = 0x200, scoped, tag = 'scoped memory for nconv_cnn_forward.21']
  %s0 = inlined_call_operand.vmem [shape: bf16[4,512], index: 0, kind: input, shape index: {}]
  %s1 = inlined_call_operand.vmem [shape: bf16[4,512], index: 1, kind: input, shape index: {}]
  %s2 = inlined_call_operand.vmem [shape: bf16[1,4], index: 2, kind: input, shape index: {}]
  %s3 = inlined_call_operand.<no memory space> [shape: f32[1,1], index: 3, kind: input, shape index: {}]
  %s4 = inlined_call_operand.<no memory space> [shape: f32[1,1], index: 4, kind: input, shape index: {}]
  %s5 = inlined_call_operand.vmem [shape: f32[1,512], index: 5, kind: output, shape index: {0}]
  %s6 = inlined_call_operand.vmem [shape: f32[1,512], index: 6, kind: output, shape index: {1}]
  %7 = xla_tuple %s5, %s6
  %s8 = sld [smem:[#allocation0]]
  $region61: #{nconv_cnn_forward.21} parent=0
    _
  %s10 = ssub.s32 1, %s8
  %s11 = scalar_select 0, %s10, %s8
  %v12 = vstv %s3
  %13 = vst [vmem:[#allocation2] sm:$0x1] %v12
  %v14 = vstv %s4
  %15 = vst [vmem:[#allocation3] sm:$0x1] %v14
  loop: start=0, step=1, limit=4
  $region2: #{nconv_cnn_forward.21} parent=0 // loop_pre_header
    _
  $region3: #{nconv_cnn_forward.21} parent=0 // loop_header
    %s17 = sphi 0, %s21
    %p18 = scmp.ge.s32.totalorder %s17, 4
    %s27 = sphi 0, %s29
    %s30 = sphi 0, %s27
    %s31 = sphi 0, %s30
    %s47 = sphi 0, %s31
    %s53 = sphi 0, %s55
    %s56 = sphi 0, %s53
    %s57 = sphi 0, %s56
    %s73 = sphi 0, %s57
    %s77 = sphi 0, %s77
    %s79 = sphi 0, %s77
    %s80 = sphi 0, %s79
    %s94 = sphi 0, %s80
    %s98 = sphi 0, %s98
    %s100 = sphi 0, %s98
    %s101 = sphi 0, %s100
    %s115 = sphi 0, %s101
    %s119 = sphi 0, %s119
    %s121 = sphi 0, %s119
    %s122 = sphi 0, %s121
    %s136 = sphi 0, %s122
    %s142 = sphi 0, %s144
    %s145 = sphi 0, %s142
    %s146 = sphi 0, %s145
    %s162 = sphi 0, %s146
    %s168 = sphi 0, %s170
    %s171 = sphi 0, %s168
    %s172 = sphi 0, %s171
    %s188 = sphi 0, %s172
  $region4: #{nconv_cnn_forward.21} parent=0 // loop_header_branch
    %20 = sbr.rel (%p18) target = $region8
  $region5: #{nconv_cnn_forward.21} parent=0 // loop_body
    %s22 = ssub.s32 %s17, 1
    %s23 = ssub.s32 %s17, 2
    %s24 = sadd.s32 %s17, 1
    %s25 = ssub.s32 %s17, %s24
    %p26 = scmp.eq.s32.totalorder %s25, 0
    %s28 = sadd.s32 %s27, 1
    %s29 = scalar_select %p26, %s27, %s28
    %p32 = pneg %p26
    %p33 = scmp.eq.s32.totalorder %s17, 1
    %p34 = por %p32, %p33
    %p35 = scmp.ne.s32.totalorder %s27, %s30
    %p36 = scmp.eq.s32.totalorder %s17, 0
    %p37 = por %p35, %p36
    %p38 = scmp.ne.s32.totalorder %s27, %s30
    %p39 = scmp.eq.s32.totalorder %s22, 1
    %p40 = por %p38, %p39
    %p41 = scmp.ne.s32.totalorder %s30, %s31
    %p42 = scmp.eq.s32.totalorder %s22, 0
    %p43 = por %p41, %p42
    %p44 = scmp.ne.s32.totalorder %s30, %s31
    %p45 = scmp.eq.s32.totalorder %s23, 1
    %p46 = por %p44, %p45
    %p48 = scmp.ne.s32.totalorder %s31, %s47
    %p49 = scmp.eq.s32.totalorder %s23, 0
    %p50 = por %p48, %p49
    %s51 = ssub.s32 %s17, %s24
    %p52 = scmp.eq.s32.totalorder %s51, 0
    %s54 = sadd.s32 %s53, 1
    %s55 = scalar_select %p52, %s53, %s54
    %p58 = pneg %p52
    %p59 = scmp.eq.s32.totalorder %s17, 1
    %p60 = por %p58, %p59
    %p61 = scmp.ne.s32.totalorder %s53, %s56
    %p62 = scmp.eq.s32.totalorder %s17, 0
    %p63 = por %p61, %p62
    %p64 = scmp.ne.s32.totalorder %s53, %s56
    %p65 = scmp.eq.s32.totalorder %s22, 1
    %p66 = por %p64, %p65
    %p67 = scmp.ne.s32.totalorder %s56, %s57
    %p68 = scmp.eq.s32.totalorder %s22, 0
    %p69 = por %p67, %p68
    %p70 = scmp.ne.s32.totalorder %s56, %s57
    %p71 = scmp.eq.s32.totalorder %s23, 1
    %p72 = por %p70, %p71
    %p74 = scmp.ne.s32.totalorder %s57, %s73
    %p75 = scmp.eq.s32.totalorder %s23, 0
    %p76 = por %p74, %p75
    %s78 = sadd.s32 %s77, 1
    %p81 = scmp.eq.s32.totalorder %s17, 1
    %p82 = scmp.ne.s32.totalorder %s77, %s79
    %p83 = scmp.eq.s32.totalorder %s17, 0
    %p84 = por %p82, %p83
    %p85 = scmp.ne.s32.totalorder %s77, %s79
    %p86 = scmp.eq.s32.totalorder %s22, 1
    %p87 = por %p85, %p86
    %p88 = scmp.ne.s32.totalorder %s79, %s80
    %p89 = scmp.eq.s32.totalorder %s22, 0
    %p90 = por %p88, %p89
    %p91 = scmp.ne.s32.totalorder %s79, %s80
    %p92 = scmp.eq.s32.totalorder %s23, 1
    %p93 = por %p91, %p92
    %p95 = scmp.ne.s32.totalorder %s80, %s94
    %p96 = scmp.eq.s32.totalorder %s23, 0
    %p97 = por %p95, %p96
    %s99 = sadd.s32 %s98, 1
    %p102 = scmp.eq.s32.totalorder %s17, 1
    %p103 = scmp.ne.s32.totalorder %s98, %s100
    %p104 = scmp.eq.s32.totalorder %s17, 0
    %p105 = por %p103, %p104
    %p106 = scmp.ne.s32.totalorder %s98, %s100
    %p107 = scmp.eq.s32.totalorder %s22, 1
    %p108 = por %p106, %p107
    %p109 = scmp.ne.s32.totalorder %s100, %s101
    %p110 = scmp.eq.s32.totalorder %s22, 0
    %p111 = por %p109, %p110
    %p112 = scmp.ne.s32.totalorder %s100, %s101
    %p113 = scmp.eq.s32.totalorder %s23, 1
    %p114 = por %p112, %p113
    %p116 = scmp.ne.s32.totalorder %s101, %s115
    %p117 = scmp.eq.s32.totalorder %s23, 0
    %p118 = por %p116, %p117
    %s120 = sadd.s32 %s119, 1
    %p123 = scmp.eq.s32.totalorder %s17, 1
    %p124 = scmp.ne.s32.totalorder %s119, %s121
    %p125 = scmp.eq.s32.totalorder %s17, 0
    %p126 = por %p124, %p125
    %p127 = scmp.ne.s32.totalorder %s119, %s121
    %p128 = scmp.eq.s32.totalorder %s22, 1
    %p129 = por %p127, %p128
    %p130 = scmp.ne.s32.totalorder %s121, %s122
    %p131 = scmp.eq.s32.totalorder %s22, 0
    %p132 = por %p130, %p131
    %p133 = scmp.ne.s32.totalorder %s121, %s122
    %p134 = scmp.eq.s32.totalorder %s23, 1
    %p135 = por %p133, %p134
    %p137 = scmp.ne.s32.totalorder %s122, %s136
    %p138 = scmp.eq.s32.totalorder %s23, 0
    %p139 = por %p137, %p138
    %s140 = ssub.s32 %s17, %s24
    %p141 = scmp.eq.s32.totalorder %s140, 0
    %s143 = sadd.s32 %s142, 1
    %s144 = scalar_select %p141, %s142, %s143
    %p147 = pneg %p141
    %p148 = scmp.eq.s32.totalorder %s17, 1
    %p149 = por %p147, %p148
    %p150 = scmp.ne.s32.totalorder %s142, %s145
    %p151 = scmp.eq.s32.totalorder %s17, 0
    %p152 = por %p150, %p151
    %p153 = scmp.ne.s32.totalorder %s142, %s145
    %p154 = scmp.eq.s32.totalorder %s22, 1
    %p155 = por %p153, %p154
    %p156 = scmp.ne.s32.totalorder %s145, %s146
    %p157 = scmp.eq.s32.totalorder %s22, 0
    %p158 = por %p156, %p157
    %p159 = scmp.ne.s32.totalorder %s145, %s146
    %p160 = scmp.eq.s32.totalorder %s23, 1
    %p161 = por %p159, %p160
    %p163 = scmp.ne.s32.totalorder %s146, %s162
    %p164 = scmp.eq.s32.totalorder %s23, 0
    %p165 = por %p163, %p164
    %s166 = ssub.s32 %s17, %s24
    %p167 = scmp.eq.s32.totalorder %s166, 0
    %s169 = sadd.s32 %s168, 1
    %s170 = scalar_select %p167, %s168, %s169
    %p173 = pneg %p167
    %p174 = scmp.eq.s32.totalorder %s17, 1
    %p175 = por %p173, %p174
    %p176 = scmp.ne.s32.totalorder %s168, %s171
    %p177 = scmp.eq.s32.totalorder %s17, 0
    %p178 = por %p176, %p177
    %p179 = scmp.ne.s32.totalorder %s168, %s171
    %p180 = scmp.eq.s32.totalorder %s22, 1
    %p181 = por %p179, %p180
    %p182 = scmp.ne.s32.totalorder %s171, %s172
    %p183 = scmp.eq.s32.totalorder %s22, 0
    %p184 = por %p182, %p183
    %p185 = scmp.ne.s32.totalorder %s171, %s172
    %p186 = scmp.eq.s32.totalorder %s23, 1
    %p187 = por %p185, %p186
    %p189 = scmp.ne.s32.totalorder %s172, %s188
    %p190 = scmp.eq.s32.totalorder %s23, 0
    %p191 = por %p189, %p190
    %p192 = scmp.le.s32.totalorder 1, %s17
    %p193 = scmp.lt.s32.totalorder %s17, 3
    %p194 = pnand %p192, %p193
    %p195 = pneg %p194
    // Predicated region
    $region9: #{nconv_cnn_forward.21} parent=5 // pred_check
      _
    $region10: #{nconv_cnn_forward.21} parent=5 // pred_check_branch
      %197 = sbr.rel (%p194) target = $region12
    $region11: #{nconv_cnn_forward.21} parent=5 // pred_region
      %s198 = ssub.s32 %s17, 1
      // Predicated region
      $region13: #{nconv_cnn_forward.21} parent=11 // pred_check
        %p199 = pneg %p90
      $region14: #{nconv_cnn_forward.21} parent=11 // pred_check_branch
        %201 = sbr.rel (%p199) target = $region16
      $region15: #{nconv_cnn_forward.21} parent=11 // pred_region
        _
      $region16: #{nconv_cnn_forward.21} parent=11 // pred_fallthru
        _
      // Predicated region
      $region17: #{nconv_cnn_forward.21} parent=11 // pred_check
        %p202 = pneg %p111
      $region18: #{nconv_cnn_forward.21} parent=11 // pred_check_branch
        %204 = sbr.rel (%p202) target = $region20
      $region19: #{nconv_cnn_forward.21} parent=11 // pred_region
        _
      $region20: #{nconv_cnn_forward.21} parent=11 // pred_fallthru
        _
      // Predicated region
      $region21: #{nconv_cnn_forward.21} parent=11 // pred_check
        %p205 = pneg %p132
      $region22: #{nconv_cnn_forward.21} parent=11 // pred_check_branch
        %207 = sbr.rel (%p205) target = $region24
      $region23: #{nconv_cnn_forward.21} parent=11 // pred_region
        _
      $region24: #{nconv_cnn_forward.21} parent=11 // pred_fallthru
        _
    $region12: #{nconv_cnn_forward.21} parent=5 // pred_fallthru
      _
    %p208 = scmp.lt.s32.totalorder %s17, 2
    // Predicated region
    $region25: #{nconv_cnn_forward.21} parent=5 // pred_check
      %p209 = pneg %p208
    $region26: #{nconv_cnn_forward.21} parent=5 // pred_check_branch
      %211 = sbr.rel (%p209) target = $region28
    $region27: #{nconv_cnn_forward.21} parent=5 // pred_region
      // Predicated region
      $region29: #{nconv_cnn_forward.21} parent=27 // pred_check
        %p212 = pneg %p37
      $region30: #{nconv_cnn_forward.21} parent=27 // pred_check_branch
        %214 = sbr.rel (%p212) target = $region32
      $region31: #{nconv_cnn_forward.21} parent=27 // pred_region
        %s215 = smul.u32 2, %s17
        %p216 = scmp.lt.s32.totalorder %s215, 3
        %s217 = scalar_select %p216, %s215, 3
        %s218 = smul.addr %s217, 2
        %s219 = scalar_lea.vmem %s0, %s218
        %s220 = smul.u32 2, %s17
      $region32: #{nconv_cnn_forward.21} parent=27 // pred_fallthru
        _
      // Predicated region
      $region33: #{nconv_cnn_forward.21} parent=27 // pred_check
        %p221 = pneg %p63
      $region34: #{nconv_cnn_forward.21} parent=27 // pred_check_branch
        %223 = sbr.rel (%p221) target = $region36
      $region35: #{nconv_cnn_forward.21} parent=27 // pred_region
        %s224 = smul.u32 2, %s17
        %p225 = scmp.lt.s32.totalorder %s224, 3
        %s226 = scalar_select %p225, %s224, 3
        %s227 = smul.addr %s226, 2
        %s228 = scalar_lea.vmem %s1, %s227
        %s229 = smul.u32 2, %s17
      $region36: #{nconv_cnn_forward.21} parent=27 // pred_fallthru
        _
    $region28: #{nconv_cnn_forward.21} parent=5 // pred_fallthru
      _
    %p230 = scmp.le.s32.totalorder 1, %s17
    %p231 = scmp.lt.s32.totalorder %s17, 3
    %p232 = pnand %p230, %p231
    %p233 = pneg %p232
    // Predicated region
    $region37: #{nconv_cnn_forward.21} parent=5 // pred_check
      _
    $region38: #{nconv_cnn_forward.21} parent=5 // pred_check_branch
      %235 = sbr.rel (%p232) target = $region40
    $region39: #{nconv_cnn_forward.21} parent=5 // pred_region
      %s236 = ssub.s32 %s17, 1
      %s237 = smul.u32 2, %s22
      %p238 = scmp.lt.s32.totalorder %s237, 3
      %s239 = scalar_select %p238, %s237, 3
      %s240 = smul.addr %s239, 2
      %s241 = scalar_lea.vmem %s0, %s240
      %p242 = pneg %p43
      %p243 = pneg %p40
      %s244 = smul.u32 2, %s22
      %p245 = scmp.lt.s32.totalorder %s244, 3
      %s246 = scalar_select %p245, %s244, 3
      %s247 = smul.addr %s246, 2
      %s248 = scalar_lea.vmem %s1, %s247
      %p249 = pneg %p69
      %p250 = pneg %p66
      %p251 = pneg %p90
      %p252 = pneg %p87
      %p253 = pneg %p111
      %p254 = pneg %p108
      %p255 = pneg %p132
      %p256 = pneg %p129
      %p257 = pneg %p158
      %p258 = pneg %p155
      %s259 = smul.u32 2, %s22
      %p260 = scmp.lt.s32.totalorder %s259, 3
      %s261 = scalar_select %p260, %s259, 3
      %s262 = scalar_lea.vmem %s5, %s261
      %p263 = pneg %p184
      %p264 = pneg %p181
      %s265 = smul.u32 2, %s22
      %p266 = scmp.lt.s32.totalorder %s265, 3
      %s267 = scalar_select %p266, %s265, 3
      %s268 = scalar_lea.vmem %s6, %s267
      %s269 = smul.u32 2, %s22
      %p270 = scmp.lt.s32.totalorder %s269, 3
      %s271 = scalar_select %p270, %s269, 3
      %s272 = smul.addr %s271, 2
      %s273 = scalar_lea.vmem %s0, %s272
      %s274 = smul.u32 2, %s22
      %s275 = smul.u32 2, %s22
      %p276 = scmp.lt.s32.totalorder %s275, 3
      %s277 = scalar_select %p276, %s275, 3
      %s278 = smul.addr %s277, 2
      %s279 = scalar_lea.vmem %s1, %s278
      %s280 = smul.u32 2, %s22
      %s281 = smul.u32 2, %s22
      %p282 = scmp.lt.s32.totalorder %s281, 3
      %s283 = scalar_select %p282, %s281, 3
      %s284 = scalar_lea.vmem %s5, %s283
      %s285 = smul.u32 2, %s22
      %s286 = smul.u32 2, %s22
      %p287 = scmp.lt.s32.totalorder %s286, 3
      %s288 = scalar_select %p287, %s286, 3
      %s289 = scalar_lea.vmem %s6, %s288
      %s290 = smul.u32 2, %s22
      %v292 = vld [vmem:[%s273] sm:$0xf]
      %v293 = vld [vmem:[%s279] sm:$0xf]
      %v294 = vld [vmem:[%s2] sm:$0x1]
      %v295 = vunpack.c.l.bf16 %v292
      %v296 = vunpack.c.l.bf16 %v293
      %v297 = vmul.f32 %v295, %v296
      %299 = vst [vmem:[#allocation1] ss:$2 sm:$0xff] %v297
      %v300 = vld.sshfl [vmem:[#allocation1] sm:$0xff pattern:$0x75316420]
      %v301 = vld.sshfl [vmem:[#allocation1 + $0x8] sm:$0xff pattern:$0x75316420]
      %v304 = vpack.c.bf16 %v301, %v300
      %306 = vst [vmem:[#allocation1] ss:$4 sm:$0xff] %v293
      %v307 = vld.sshfl [vmem:[#allocation1] sm:$0xff pattern:$0x73625140]
      %v308 = vld.sshfl [vmem:[#allocation1 + $0x8] sm:$0xff pattern:$0x73625140]
      %v310 = vunpack.c.l.b16 %v304
      %v311 = vunpack.c.h.b16 %v304
      %v312 = vpack.c.b16 %v310, %v310
      %v313 = vpack.c.b16 %v311, %v311
      %vm314 = vcmask 31744
      %v316 = vsel %vm314, %v294, 0
      %vm318 = vcmask 1041408
      %v319 = vsel %vm318, %v307, 0
      %v321 = vsel %vm318, %v308, 0
      %v324 = vsel %vm318, %v312, 0
      %v327 = vsel %vm318, %v313, 0
      %329 = vmatpush.bf16.msra.mxu0 0
      %330 = vmatpush.bf16.msra.mxu0 0
      %331 = vmatpush.bf16.msra.mxu0 0
      %332 = vmatpush.bf16.msra.mxu0 0
      %333 = vmatpush.bf16.msra.mxu0 0
      %334 = vmatpush.bf16.msra.mxu0 0
      %335 = vmatpush.bf16.msra.mxu0 0
      %336 = vmatpush.bf16.msra.mxu0 %v319
      %337 = vmatmul.bf16.gmra.mxu0 %v316
      %v338 = vpop.f32.mrf.mxu0
      %v339 = vadd.f32 0.0, %v338
      %v340 = vpop.f32.mrf.mxu0
      %341 = vdwg.mxu0
      %342 = vmatpush.bf16.msra.mxu0 0
      %343 = vmatpush.bf16.msra.mxu0 0
      %344 = vmatpush.bf16.msra.mxu0 0
      %345 = vmatpush.bf16.msra.mxu0 0
      %346 = vmatpush.bf16.msra.mxu0 0
      %347 = vmatpush.bf16.msra.mxu0 0
      %348 = vmatpush.bf16.msra.mxu0 0
      %349 = vmatpush.bf16.msra.mxu0 %v321
      %350 = vmatmul.bf16.gmra.mxu0 %v316
      %v351 = vpop.f32.mrf.mxu0
      %v352 = vadd.f32 0.0, %v351
      %v353 = vpop.f32.mrf.mxu0
      %354 = vdwg.mxu0
      %355 = vmatpush.bf16.msra.mxu0 0
      %356 = vmatpush.bf16.msra.mxu0 0
      %357 = vmatpush.bf16.msra.mxu0 0
      %358 = vmatpush.bf16.msra.mxu0 0
      %359 = vmatpush.bf16.msra.mxu0 0
      %360 = vmatpush.bf16.msra.mxu0 0
      %361 = vmatpush.bf16.msra.mxu0 0
      %362 = vmatpush.bf16.msra.mxu0 %v324
      %363 = vmatmul.bf16.gmra.mxu0 %v316
      %v364 = vpop.f32.mrf.mxu0
      %v365 = vadd.f32 0.0, %v364
      %v366 = vpop.f32.mrf.mxu0
      %367 = vdwg.mxu0
      %368 = vmatpush.bf16.msra.mxu0 0
      %369 = vmatpush.bf16.msra.mxu0 0
      %370 = vmatpush.bf16.msra.mxu0 0
      %371 = vmatpush.bf16.msra.mxu0 0
      %372 = vmatpush.bf16.msra.mxu0 0
      %373 = vmatpush.bf16.msra.mxu0 0
      %374 = vmatpush.bf16.msra.mxu0 0
      %375 = vmatpush.bf16.msra.mxu0 %v327
      %376 = vmatmul.bf16.gmra.mxu0 %v316
      %v377 = vpop.f32.mrf.mxu0
      %v378 = vadd.f32 0.0, %v377
      %v379 = vpop.f32.mrf.mxu0
      %380 = vdwg.mxu0
      %v381 = vadd.f32 %v339, 1e-20
      %v382 = vadd.f32 %v352, 1e-20
      %v383 = vrcp.pop %v381
      %v384 = vrcp.pop %v382
      %v385 = vmul.f32 %v365, %v383
      %v386 = vmul.f32 %v378, %v384
      %v387 = vld [vmem:[#allocation2] sm:$0x1]
      %389 = vset.pattern.permute.xlu0 0
      %390 = vperm.xlu0 %389, %v387
      %v391 = vpop.permute.xlu0 %390
      %v393 = vperm.slane %v391, 0
      %v394 = vadd.f32 %v385, %v393
      %v395 = vadd.f32 %v386, %v393
      %v398 = vrot.slane %v395, 7
      %vm399 = vcmask 1040384
      %v400 = vsel %vm399, %v394, %v398
      %v402 = vlaneseq
      %vm403 = vcmp.ge.s32.totalorder %v402, 0
      %vm404 = vcmp.lt.s32.totalorder %v402, 256
      %vm405 = vmand %vm403, %vm404
      %406 = vst.msk [vmem:[%s284] sm:$0x3] %vm405, %v400
      %v407 = vld [vmem:[#allocation3] sm:$0x1]
      %409 = vset.pattern.permute.xlu0 0
      %410 = vperm.xlu0 %409, %v407
      %v411 = vpop.permute.xlu0 %410
      %v413 = vperm.slane %v411, 0
      %v414 = vmul.f32 %v339, %v413
      %v415 = vmul.f32 %v352, %v413
      %v418 = vrot.slane %v415, 7
      %v419 = vsel %vm399, %v414, %v418
      %421 = vst.msk [vmem:[%s289] sm:$0x3] %vm405, %v419
      %s422 = smul.u32 2, %s22
      %p423 = scmp.lt.s32.totalorder %s422, 3
      %s424 = scalar_select %p423, %s422, 3
      %s425 = scalar_lea.vmem %s5, %s424
      %s426 = smul.u32 2, %s22
      %p427 = scmp.lt.s32.totalorder %s426, 3
      %s428 = scalar_select %p427, %s426, 3
      %s429 = scalar_lea.vmem %s6, %s428
      // Predicated region
      $region41: #{nconv_cnn_forward.21} parent=39 // pred_check
        %p430 = pneg %p155
      $region42: #{nconv_cnn_forward.21} parent=39 // pred_check_branch
        %432 = sbr.rel (%p430) target = $region44
      $region43: #{nconv_cnn_forward.21} parent=39 // pred_region
        %s433 = smul.u32 2, %s22
      $region44: #{nconv_cnn_forward.21} parent=39 // pred_fallthru
        _
      // Predicated region
      $region45: #{nconv_cnn_forward.21} parent=39 // pred_check
        %p434 = pneg %p181
      $region46: #{nconv_cnn_forward.21} parent=39 // pred_check_branch
        %436 = sbr.rel (%p434) target = $region48
      $region47: #{nconv_cnn_forward.21} parent=39 // pred_region
        %s437 = smul.u32 2, %s22
      $region48: #{nconv_cnn_forward.21} parent=39 // pred_fallthru
        _
    $region40: #{nconv_cnn_forward.21} parent=5 // pred_fallthru
      _
    %p438 = scmp.le.s32.totalorder 2, %s17
    // Predicated region
    $region49: #{nconv_cnn_forward.21} parent=5 // pred_check
      %p439 = pneg %p438
    $region50: #{nconv_cnn_forward.21} parent=5 // pred_check_branch
      %441 = sbr.rel (%p439) target = $region52
    $region51: #{nconv_cnn_forward.21} parent=5 // pred_region
      %s442 = ssub.s32 %s17, 2
      // Predicated region
      $region53: #{nconv_cnn_forward.21} parent=51 // pred_check
        %p443 = pneg %p161
      $region54: #{nconv_cnn_forward.21} parent=51 // pred_check_branch
        %445 = sbr.rel (%p443) target = $region56
      $region55: #{nconv_cnn_forward.21} parent=51 // pred_region
        %s446 = smul.u32 2, %s23
        %p447 = scmp.lt.s32.totalorder %s446, 3
        %s448 = scalar_select %p447, %s446, 3
        %s449 = scalar_lea.vmem %s5, %s448
      $region56: #{nconv_cnn_forward.21} parent=51 // pred_fallthru
        _
      // Predicated region
      $region57: #{nconv_cnn_forward.21} parent=51 // pred_check
        %p450 = pneg %p187
      $region58: #{nconv_cnn_forward.21} parent=51 // pred_check_branch
        %452 = sbr.rel (%p450) target = $region60
      $region59: #{nconv_cnn_forward.21} parent=51 // pred_region
        %s453 = smul.u32 2, %s23
        %p454 = scmp.lt.s32.totalorder %s453, 3
        %s455 = scalar_select %p454, %s453, 3
        %s456 = scalar_lea.vmem %s6, %s455
      $region60: #{nconv_cnn_forward.21} parent=51 // pred_fallthru
        _
    $region52: #{nconv_cnn_forward.21} parent=5 // pred_fallthru
      _
  $region6: #{nconv_cnn_forward.21} parent=0 // loop_footer
    %s21 = sadd.s32 1, %s17
  $region7: #{nconv_cnn_forward.21} parent=0 // loop_footer_branch
    %16 = sbr.rel target = $region3
  $region8: #{nconv_cnn_forward.21} parent=0 // loop_exit
    _

</llo_original>
